<compile_context>
chip_gen: v7x
topology: tpu7x:2x2x1
jax: 0.10.0
libtpu: 0.0.40
codegen_flags: <defaults>
</compile_context>

<pallas_src>
import functools

import jax
import jax.numpy as jnp
from jax.experimental import pallas as pl
from jax.experimental.pallas import tpu as pltpu


# --------------------------- Pallas kernels ---------------------------------

def _conv_lrelu_kernel(cols_ref, w_ref, o_ref):
    """o = LeakyReLU_{0.2}(cols @ w); bf16 operands, f32 accumulation."""
    acc = jnp.dot(cols_ref[...], w_ref[...], preferred_element_type=jnp.float32)
    y = jnp.where(acc >= 0, acc, 0.2 * acc)
    o_ref[...] = y.astype(o_ref.dtype)


def _conv_bn_lrelu_kernel(cols_ref, w_ref, g_ref, b_ref, o_ref, *, eps):
    """o = LeakyReLU(BN_train(cols @ w)); BN stats over all rows (one block)."""
    acc = jnp.dot(cols_ref[...], w_ref[...], preferred_element_type=jnp.float32)
    mean = jnp.mean(acc, axis=0, keepdims=True)
    var = jnp.mean((acc - mean) ** 2, axis=0, keepdims=True)
    y = (acc - mean) * jax.lax.rsqrt(var + eps) * g_ref[...] + b_ref[...]
    y = jnp.where(y >= 0, y, 0.2 * y)
    o_ref[...] = y.astype(o_ref.dtype)


def _tail_kernel(cols4_ref, w4_ref, g4_ref, b4_ref,
                 emb_ref, linw_ref, linb_ref, gp_ref, bp_ref,
                 wx_ref, wes_ref, ind_ref,
                 x4_ref, score_ref, *, eps):
    """Fused tail: conv4+BN+LReLU, Linear+BN1d+LReLU, broadcast+concat folded
    into a weighted reduction, final 4x4 valid conv + sigmoid."""
    # ---- conv4 + BatchNorm2d (batch stats) + LeakyReLU ----
    acc = jnp.dot(cols4_ref[...], w4_ref[...], preferred_element_type=jnp.float32)
    mean = jnp.mean(acc, axis=0, keepdims=True)
    var = jnp.mean((acc - mean) ** 2, axis=0, keepdims=True)
    x4 = (acc - mean) * jax.lax.rsqrt(var + eps) * g4_ref[...] + b4_ref[...]
    x4 = jnp.where(x4 >= 0, x4, 0.2 * x4)                       # [N*16, C4]
    x4_ref[...] = x4.astype(x4_ref.dtype)

    # ---- projection: Linear + bias + BatchNorm1d + LeakyReLU ----
    p = jnp.dot(emb_ref[...], linw_ref[...],
                preferred_element_type=jnp.float32) + linb_ref[...]
    pm = jnp.mean(p, axis=0, keepdims=True)
    pv = jnp.mean((p - pm) ** 2, axis=0, keepdims=True)
    proj = (p - pm) * jax.lax.rsqrt(pv + eps) * gp_ref[...] + bp_ref[...]
    proj = jnp.where(proj >= 0, proj, 0.2 * proj)                # [N, Eo]

    # ---- final 4x4 valid conv over concat([x_out, emb_map]) + sigmoid ----
    # x-feature part: per-row weighted sum then per-sample segment sum.
    xw = x4 * wx_ref[...]                                        # [N*16, C4]
    sx = jnp.dot(ind_ref[...], xw, preferred_element_type=jnp.float32)  # [N, C4]
    sx = jnp.sum(sx, axis=1, keepdims=True)                      # [N, 1]
    # embedding part: spatially-constant -> presummed kernel weights.
    se = jnp.sum(proj * wes_ref[...], axis=1, keepdims=True)     # [N, 1]
    logit = sx + se
    score_ref[...] = (1.0 / (1.0 + jnp.exp(-logit))).astype(score_ref.dtype)


# ------------------------------ wrappers -------------------------------------

def conv1_lrelu(cols, wmat, tm=1024):
    """conv1 (im2col matmul) + LeakyReLU; rows tiled in big parallel blocks."""
    M, K = cols.shape
    Cout = wmat.shape[1]
    if M % tm != 0:
        tm = M
    return pl.pallas_call(
        _conv_lrelu_kernel,
        out_shape=jax.ShapeDtypeStruct((M, Cout), jnp.bfloat16),
        grid=(M // tm,),
        in_specs=[
            pl.BlockSpec((tm, K), lambda i: (i, 0)),
            pl.BlockSpec((K, Cout), lambda i: (0, 0)),
        ],
        out_specs=pl.BlockSpec((tm, Cout), lambda i: (i, 0)),
        compiler_params=pltpu.CompilerParams(dimension_semantics=("parallel",)),
    )(cols, wmat)


def conv_bn_lrelu(cols, wmat, gamma, beta, out_dtype=jnp.bfloat16, eps=1e-5):
    """conv (matmul) + training-mode BN + LeakyReLU fused, whole layer in VMEM."""
    M, _ = cols.shape
    Cout = wmat.shape[1]
    return pl.pallas_call(
        functools.partial(_conv_bn_lrelu_kernel, eps=eps),
        out_shape=jax.ShapeDtypeStruct((M, Cout), out_dtype),
    )(cols, wmat,
      gamma.reshape(1, Cout).astype(jnp.float32),
      beta.reshape(1, Cout).astype(jnp.float32))


def tail_fused(cols4, w4mat, g4, b4, emb, linw, linb, gp, bp,
               wx_full, we_sum, ind, eps=1e-5):
    M, _ = cols4.shape
    C4 = w4mat.shape[1]
    N, _ = emb.shape
    Eo = linw.shape[1]
    return pl.pallas_call(
        functools.partial(_tail_kernel, eps=eps),
        out_shape=(jax.ShapeDtypeStruct((M, C4), jnp.float32),
                   jax.ShapeDtypeStruct((N, 1), jnp.float32)),
    )(cols4, w4mat,
      g4.reshape(1, C4).astype(jnp.float32),
      b4.reshape(1, C4).astype(jnp.float32),
      emb, linw,
      linb.reshape(1, Eo).astype(jnp.float32),
      gp.reshape(1, Eo).astype(jnp.float32),
      bp.reshape(1, Eo).astype(jnp.float32),
      wx_full.astype(jnp.float32),
      we_sum.astype(jnp.float32),
      ind.astype(jnp.float32))


# ------------------------------ glue (JAX) -----------------------------------

def im2col_nhwc(x, kh, kw, stride, pad):
    """x: [N,H,W,C] -> cols [N*Ho*Wo, kh*kw*C] with column order (kh, kw, C).

    No transpose of the big patch tensor; the (tiny) weight is permuted to
    match this column order instead.
    """
    N, H, W, C = x.shape
    xp = jnp.pad(x, ((0, 0), (pad, pad), (pad, pad), (0, 0)))
    Ho = (H + 2 * pad - kh) // stride + 1
    Wo = (W + 2 * pad - kw) // stride + 1
    pieces = [xp[:, i:i + stride * Ho:stride, j:j + stride * Wo:stride, :]
              for i in range(kh) for j in range(kw)]
    patches = jnp.stack(pieces, axis=3)                    # [N,Ho,Wo,kh*kw,C]
    return patches.reshape(N * Ho * Wo, kh * kw * C), Ho, Wo


def weight_to_mat(w):
    """PyTorch conv weight [Cout, Cin, kh, kw] -> matmul matrix [kh*kw*Cin, Cout]."""
    _, Cin, kh, kw = w.shape
    return jnp.transpose(w, (2, 3, 1, 0)).reshape(kh * kw * Cin, -1)


def init_params(key, nc=3, ndf=8, embedding_in=32, embedding_out=16):
    ks = jax.random.split(key, 15)
    n = jax.random.normal
    p = {
        "w1": 0.05 * n(ks[0], (ndf, nc, 4, 4), jnp.float32),
        "w2": 0.05 * n(ks[1], (ndf * 2, ndf, 4, 4), jnp.float32),
        "g2": 1.0 + 0.1 * n(ks[2], (ndf * 2,), jnp.float32),
        "b2": 0.1 * n(ks[3], (ndf * 2,), jnp.float32),
        "w3": 0.05 * n(ks[4], (ndf * 4, ndf * 2, 4, 4), jnp.float32),
        "g3": 1.0 + 0.1 * n(ks[5], (ndf * 4,), jnp.float32),
        "b3": 0.1 * n(ks[6], (ndf * 4,), jnp.float32),
        "w4": 0.05 * n(ks[7], (ndf * 8, ndf * 4, 4, 4), jnp.float32),
        "g4": 1.0 + 0.1 * n(ks[8], (ndf * 8,), jnp.float32),
        "b4": 0.1 * n(ks[9], (ndf * 8,), jnp.float32),
        "lin_w": 0.05 * n(ks[10], (embedding_out, embedding_in), jnp.float32),
        "lin_b": 0.05 * n(ks[11], (embedding_out,), jnp.float32),
        "gp": 1.0 + 0.1 * n(ks[12], (embedding_out,), jnp.float32),
        "bp": 0.1 * n(ks[13], (embedding_out,), jnp.float32),
        "wout": 0.05 * n(ks[14], (1, ndf * 8 + embedding_out, 4, 4), jnp.float32),
    }
    return p


@jax.jit
def discriminator_forward(params, x_nchw, embedding):
    N = x_nchw.shape[0]
    ndf8 = params["w4"].shape[0]
    eo = params["lin_w"].shape[0]

    # NCHW -> NHWC, bf16 activations (f32 accumulation inside the kernels).
    x = jnp.transpose(x_nchw, (0, 2, 3, 1)).astype(jnp.bfloat16)

    # conv1 + LeakyReLU (no BN on the first layer).
    cols, Ho, Wo = im2col_nhwc(x, 4, 4, 2, 1)
    r = conv1_lrelu(cols, weight_to_mat(params["w1"]).astype(jnp.bfloat16))
    x = r.reshape(N, Ho, Wo, -1)

    # conv2, conv3: matmul + BN(batch stats) + LeakyReLU fused per layer.
    for wk, gk, bk in (("w2", "g2", "b2"), ("w3", "g3", "b3")):
        cols, Ho, Wo = im2col_nhwc(x, 4, 4, 2, 1)
        r = conv_bn_lrelu(cols, weight_to_mat(params[wk]).astype(jnp.bfloat16),
                          params[gk], params[bk])
        x = r.reshape(N, Ho, Wo, -1)

    # Fused tail: conv4+BN+LReLU, projection, broadcast/concat/final conv/sigmoid.
    cols4, Ho4, Wo4 = im2col_nhwc(x, 4, 4, 2, 1)          # [N*4*4, Cin*16]
    wout = params["wout"]                                  # [1, ndf8+eo, 4, 4]
    # Per-spatial-position weights for the x_out channels, tiled over batch rows
    # (row order of cols4 / x4 is (n, ho, wo)).
    wx = jnp.transpose(wout[0, :ndf8], (1, 2, 0)).reshape(Ho4 * Wo4, ndf8)
    wx_full = jnp.tile(wx, (N, 1))                         # [N*16, ndf8]
    # Embedding map is spatially constant -> presum its 4x4 kernel weights.
    we_sum = jnp.sum(wout[0, ndf8:], axis=(1, 2)).reshape(1, eo)
    # Segment-sum indicator: groups of Ho4*Wo4 rows per sample.
    ind = (jnp.arange(N * Ho4 * Wo4)[None, :] // (Ho4 * Wo4)
           == jnp.arange(N)[:, None]).astype(jnp.float32)

    x4_rows, score = tail_fused(
        cols4, weight_to_mat(params["w4"]).astype(jnp.bfloat16),
        params["g4"], params["b4"],
        embedding.astype(jnp.bfloat16),
        params["lin_w"].T.astype(jnp.bfloat16),
        params["lin_b"], params["gp"], params["bp"],
        wx_full, we_sum, ind)

    x_out = jnp.transpose(x4_rows.reshape(N, Ho4, Wo4, ndf8), (0, 3, 1, 2))
    return score[:, 0], x_out


# --------------------------- pure-JAX reference ------------------------------

def reference_forward(params, x_nchw, embedding):
    def conv(x, w, s, p):
        return jax.lax.conv_general_dilated(
            x, w, (s, s), [(p, p), (p, p)],
            dimension_numbers=("NCHW", "OIHW", "NCHW"))

    def lrelu(v):
        return jnp.where(v >= 0, v, 0.2 * v)

    def bn(v, g, b, axes):
        mean = jnp.mean(v, axis=axes, keepdims=True)
        var = jnp.mean((v - mean) ** 2, axis=axes, keepdims=True)
        shp = [1] * v.ndim
        shp[1] = -1
        return (v - mean) * jax.lax.rsqrt(var + 1e-5) * g.reshape(shp) + b.reshape(shp)

    h = lrelu(conv(x_nchw, params["w1"], 2, 1))
    h = lrelu(bn(conv(h, params["w2"], 2, 1), params["g2"], params["b2"], (0, 2, 3)))
    h = lrelu(bn(conv(h, params["w3"], 2, 1), params["g3"], params["b3"], (0, 2, 3)))
    x_out = lrelu(bn(conv(h, params["w4"], 2, 1), params["g4"], params["b4"], (0, 2, 3)))
    emb = embedding @ params["lin_w"].T + params["lin_b"]
    emb = lrelu(bn(emb, params["gp"], params["bp"], (0,)))
    emb_map = jnp.broadcast_to(emb[:, :, None, None],
                               (emb.shape[0], emb.shape[1], 4, 4))
    cat = jnp.concatenate([x_out, emb_map], axis=1)
    out = jax.nn.sigmoid(conv(cat, params["wout"], 1, 0))
    return jnp.squeeze(out), x_out


# ---------------------------------- main --------------------------------------

if __name__ == "__main__":
    key = jax.random.PRNGKey(0)
    k_x, k_e, k_p = jax.random.split(key, 3)

    # Small constructor config: nc=3, ndf=8, embedding_in=32, embedding_out=16.
    # Spatial size 64: four stride-2 convs -> 4x4, then 4x4 valid conv -> 1x1.
    batch = 2
    x = jax.random.normal(k_x, (batch, 3, 64, 64), jnp.float32)
    embedding = jax.random.normal(k_e, (batch, 32), jnp.float32)
    params = init_params(k_p, nc=3, ndf=8, embedding_in=32, embedding_out=16)

    score, x_out = discriminator_forward(params, x, embedding)
    jax.block_until_ready((score, x_out))

    ref_score, ref_x_out = reference_forward(params, x, embedding)
    assert score.shape == (batch,) and x_out.shape == (batch, 64, 4, 4)
    assert jnp.allclose(score, ref_score, rtol=5e-2, atol=5e-2)
    assert jnp.allclose(x_out, ref_x_out, rtol=5e-2, atol=5e-2)

    print("KERNEL_OK")
</pallas_src>

<mosaic_0001>
module attributes {stable_mosaic.version = 11 : i64} {
  func.func @_conv_lrelu_kernel(%arg0: i32, %arg1: memref<1024x48xbf16, #tpu.memory_space<vmem>>, %arg2: memref<48x8xbf16, #tpu.memory_space<vmem>>, %arg3: memref<1024x8xbf16, #tpu.memory_space<vmem>>) attributes {dimension_semantics = [#tpu.dimension_semantics<parallel>], iteration_bounds = array<i64: 2>, scalar_prefetch = 0 : i64, scratch_operands = 0 : i64, tpu.core_type = #tpu.core_type<tc>, window_params = [{transform_indices = @transform_0, window_bounds = array<i64: 1024, 48>}, {pipeline_mode = #tpu.pipeline_mode<synchronous>, transform_indices = @transform_1, window_bounds = array<i64: 48, 8>}, {transform_indices = @transform_2, window_bounds = array<i64: 1024, 8>}]} {
    %c0 = arith.constant 0 : index
    %c0_0 = arith.constant 0 : index
    %0 = vector.load %arg1[%c0, %c0_0] : memref<1024x48xbf16, #tpu.memory_space<vmem>>, vector<1024x48xbf16>
    %c0_1 = arith.constant 0 : index
    %c0_2 = arith.constant 0 : index
    %1 = vector.load %arg2[%c0_1, %c0_2] : memref<48x8xbf16, #tpu.memory_space<vmem>>, vector<48x8xbf16>
    %cst = arith.constant dense<0.000000e+00> : vector<1024x8xf32>
    %2 = tpu.matmul %0, %1, %cst {dimension_numbers = #tpu.dot_dimension_numbers<[1], [0], [0], [1], [0, 0, 1, 1], [], []>} : vector<1024x48xbf16>, vector<48x8xbf16>, vector<1024x8xf32> -> vector<1024x8xf32>
    %cst_3 = arith.constant 0.000000e+00 : f32
    %3 = vector.broadcast %cst_3 : f32 to vector<1024x8xf32>
    %4 = arith.cmpf oge, %2, %3 : vector<1024x8xf32>
    %cst_4 = arith.constant 2.000000e-01 : f32
    %5 = vector.broadcast %cst_4 : f32 to vector<1024x8xf32>
    %6 = arith.mulf %5, %2 : vector<1024x8xf32>
    %7 = arith.select %4, %2, %6 : vector<1024x8xi1>, vector<1024x8xf32>
    %8 = arith.truncf %7 : vector<1024x8xf32> to vector<1024x8xbf16>
    %c0_5 = arith.constant 0 : index
    %c0_6 = arith.constant 0 : index
    %9 = vector.load %arg3[%c0_5, %c0_6] : memref<1024x8xbf16, #tpu.memory_space<vmem>>, vector<1024x8xbf16>
    tpu.vector_store %arg3[%c0_5, %c0_6], %8 {strides = array<i32>} : memref<1024x8xbf16, #tpu.memory_space<vmem>>, vector<1024x8xbf16>,
    return
  }
  func.func @transform_0(%arg0: i32) -> (i32, i32) {
    %c0_i32 = arith.constant 0 : i32
    %c0_i32_0 = arith.constant 0 : i32
    return %arg0, %c0_i32 : i32, i32
  }
  func.func @transform_1(%arg0: i32) -> (i32, i32) {
    %c0_i32 = arith.constant 0 : i32
    %c0_i32_0 = arith.constant 0 : i32
    %c0_i32_1 = arith.constant 0 : i32
    return %c0_i32, %c0_i32_0 : i32, i32
  }
  func.func @transform_2(%arg0: i32) -> (i32, i32) {
    %c0_i32 = arith.constant 0 : i32
    %c0_i32_0 = arith.constant 0 : i32
    return %arg0, %c0_i32 : i32, i32
  }
}

module attributes {stable_mosaic.version = 11 : i64} {
  func.func @_conv_bn_lrelu_kernel(%arg0: memref<512x128xbf16, #tpu.memory_space<vmem>>, %arg1: memref<128x16xbf16, #tpu.memory_space<vmem>>, %arg2: memref<1x16xf32, #tpu.memory_space<vmem>>, %arg3: memref<1x16xf32, #tpu.memory_space<vmem>>, %arg4: memref<512x16xbf16, #tpu.memory_space<vmem>>) attributes {dimension_semantics = [], scalar_prefetch = 0 : i64, scratch_operands = 0 : i64, tpu.core_type = #tpu.core_type<tc>} {
    %c0 = arith.constant 0 : index
    %c0_0 = arith.constant 0 : index
    %0 = vector.load %arg0[%c0, %c0_0] : memref<512x128xbf16, #tpu.memory_space<vmem>>, vector<512x128xbf16>
    %c0_1 = arith.constant 0 : index
    %c0_2 = arith.constant 0 : index
    %1 = vector.load %arg1[%c0_1, %c0_2] : memref<128x16xbf16, #tpu.memory_space<vmem>>, vector<128x16xbf16>
    %cst = arith.constant dense<0.000000e+00> : vector<512x16xf32>
    %2 = tpu.matmul %0, %1, %cst {dimension_numbers = #tpu.dot_dimension_numbers<[1], [0], [0], [1], [0, 0, 1, 1], [], []>} : vector<512x128xbf16>, vector<128x16xbf16>, vector<512x16xf32> -> vector<512x16xf32>
    %cst_3 = arith.constant dense<0.000000e+00> : vector<16xf32>
    %3 = vector.multi_reduction <add>, %2, %cst_3 [0] : vector<512x16xf32> to vector<16xf32>
    %4 = vector.shape_cast %3 : vector<16xf32> to vector<1x16xf32>
    %cst_4 = arith.constant 5.120000e+02 : f32
    %5 = vector.broadcast %cst_4 : f32 to vector<1x16xf32>
    %6 = arith.divf %4, %5 : vector<1x16xf32>
    %7 = vector.broadcast %6 : vector<1x16xf32> to vector<512x16xf32>
    %8 = arith.subf %2, %7 : vector<512x16xf32>
    %9 = arith.mulf %8, %8 : vector<512x16xf32>
    %cst_5 = arith.constant dense<0.000000e+00> : vector<16xf32>
    %10 = vector.multi_reduction <add>, %9, %cst_5 [0] : vector<512x16xf32> to vector<16xf32>
    %11 = vector.shape_cast %10 : vector<16xf32> to vector<1x16xf32>
    %cst_6 = arith.constant 5.120000e+02 : f32
    %12 = vector.broadcast %cst_6 : f32 to vector<1x16xf32>
    %13 = arith.divf %11, %12 : vector<1x16xf32>
    %14 = vector.broadcast %6 : vector<1x16xf32> to vector<512x16xf32>
    %15 = arith.subf %2, %14 : vector<512x16xf32>
    %cst_7 = arith.constant 9.99999974E-6 : f32
    %16 = vector.broadcast %cst_7 : f32 to vector<1x16xf32>
    %17 = arith.addf %13, %16 : vector<1x16xf32>
    %18 = math.rsqrt %17 : vector<1x16xf32>
    %19 = vector.broadcast %18 : vector<1x16xf32> to vector<512x16xf32>
    %20 = arith.mulf %15, %19 : vector<512x16xf32>
    %c0_8 = arith.constant 0 : index
    %c0_9 = arith.constant 0 : index
    %21 = vector.load %arg2[%c0_8, %c0_9] : memref<1x16xf32, #tpu.memory_space<vmem>>, vector<1x16xf32>
    %22 = vector.broadcast %21 : vector<1x16xf32> to vector<512x16xf32>
    %23 = arith.mulf %20, %22 : vector<512x16xf32>
    %c0_10 = arith.constant 0 : index
    %c0_11 = arith.constant 0 : index
    %24 = vector.load %arg3[%c0_10, %c0_11] : memref<1x16xf32, #tpu.memory_space<vmem>>, vector<1x16xf32>
    %25 = vector.broadcast %24 : vector<1x16xf32> to vector<512x16xf32>
    %26 = arith.addf %23, %25 : vector<512x16xf32>
    %cst_12 = arith.constant 0.000000e+00 : f32
    %27 = vector.broadcast %cst_12 : f32 to vector<512x16xf32>
    %28 = arith.cmpf oge, %26, %27 : vector<512x16xf32>
    %cst_13 = arith.constant 2.000000e-01 : f32
    %29 = vector.broadcast %cst_13 : f32 to vector<512x16xf32>
    %30 = arith.mulf %29, %26 : vector<512x16xf32>
    %31 = arith.select %28, %26, %30 : vector<512x16xi1>, vector<512x16xf32>
    %32 = arith.truncf %31 : vector<512x16xf32> to vector<512x16xbf16>
    %c0_14 = arith.constant 0 : index
    %c0_15 = arith.constant 0 : index
    %33 = vector.load %arg4[%c0_14, %c0_15] : memref<512x16xbf16, #tpu.memory_space<vmem>>, vector<512x16xbf16>
    tpu.vector_store %arg4[%c0_14, %c0_15], %32 {strides = array<i32>} : memref<512x16xbf16, #tpu.memory_space<vmem>>, vector<512x16xbf16>,
    return
  }
}

module attributes {stable_mosaic.version = 11 : i64} {
  func.func @_conv_bn_lrelu_kernel(%arg0: memref<128x256xbf16, #tpu.memory_space<vmem>>, %arg1: memref<256x32xbf16, #tpu.memory_space<vmem>>, %arg2: memref<1x32xf32, #tpu.memory_space<vmem>>, %arg3: memref<1x32xf32, #tpu.memory_space<vmem>>, %arg4: memref<128x32xbf16, #tpu.memory_space<vmem>>) attributes {dimension_semantics = [], scalar_prefetch = 0 : i64, scratch_operands = 0 : i64, tpu.core_type = #tpu.core_type<tc>} {
    %c0 = arith.constant 0 : index
    %c0_0 = arith.constant 0 : index
    %0 = vector.load %arg0[%c0, %c0_0] : memref<128x256xbf16, #tpu.memory_space<vmem>>, vector<128x256xbf16>
    %c0_1 = arith.constant 0 : index
    %c0_2 = arith.constant 0 : index
    %1 = vector.load %arg1[%c0_1, %c0_2] : memref<256x32xbf16, #tpu.memory_space<vmem>>, vector<256x32xbf16>
    %cst = arith.constant dense<0.000000e+00> : vector<128x32xf32>
    %2 = tpu.matmul %0, %1, %cst {dimension_numbers = #tpu.dot_dimension_numbers<[1], [0], [0], [1], [0, 0, 1, 1], [], []>} : vector<128x256xbf16>, vector<256x32xbf16>, vector<128x32xf32> -> vector<128x32xf32>
    %cst_3 = arith.constant dense<0.000000e+00> : vector<32xf32>
    %3 = vector.multi_reduction <add>, %2, %cst_3 [0] : vector<128x32xf32> to vector<32xf32>
    %4 = vector.shape_cast %3 : vector<32xf32> to vector<1x32xf32>
    %cst_4 = arith.constant 1.280000e+02 : f32
    %5 = vector.broadcast %cst_4 : f32 to vector<1x32xf32>
    %6 = arith.divf %4, %5 : vector<1x32xf32>
    %7 = vector.broadcast %6 : vector<1x32xf32> to vector<128x32xf32>
    %8 = arith.subf %2, %7 : vector<128x32xf32>
    %9 = arith.mulf %8, %8 : vector<128x32xf32>
    %cst_5 = arith.constant dense<0.000000e+00> : vector<32xf32>
    %10 = vector.multi_reduction <add>, %9, %cst_5 [0] : vector<128x32xf32> to vector<32xf32>
    %11 = vector.shape_cast %10 : vector<32xf32> to vector<1x32xf32>
    %cst_6 = arith.constant 1.280000e+02 : f32
    %12 = vector.broadcast %cst_6 : f32 to vector<1x32xf32>
    %13 = arith.divf %11, %12 : vector<1x32xf32>
    %14 = vector.broadcast %6 : vector<1x32xf32> to vector<128x32xf32>
    %15 = arith.subf %2, %14 : vector<128x32xf32>
    %cst_7 = arith.constant 9.99999974E-6 : f32
    %16 = vector.broadcast %cst_7 : f32 to vector<1x32xf32>
    %17 = arith.addf %13, %16 : vector<1x32xf32>
    %18 = math.rsqrt %17 : vector<1x32xf32>
    %19 = vector.broadcast %18 : vector<1x32xf32> to vector<128x32xf32>
    %20 = arith.mulf %15, %19 : vector<128x32xf32>
    %c0_8 = arith.constant 0 : index
    %c0_9 = arith.constant 0 : index
    %21 = vector.load %arg2[%c0_8, %c0_9] : memref<1x32xf32, #tpu.memory_space<vmem>>, vector<1x32xf32>
    %22 = vector.broadcast %21 : vector<1x32xf32> to vector<128x32xf32>
    %23 = arith.mulf %20, %22 : vector<128x32xf32>
    %c0_10 = arith.constant 0 : index
    %c0_11 = arith.constant 0 : index
    %24 = vector.load %arg3[%c0_10, %c0_11] : memref<1x32xf32, #tpu.memory_space<vmem>>, vector<1x32xf32>
    %25 = vector.broadcast %24 : vector<1x32xf32> to vector<128x32xf32>
    %26 = arith.addf %23, %25 : vector<128x32xf32>
    %cst_12 = arith.constant 0.000000e+00 : f32
    %27 = vector.broadcast %cst_12 : f32 to vector<128x32xf32>
    %28 = arith.cmpf oge, %26, %27 : vector<128x32xf32>
    %cst_13 = arith.constant 2.000000e-01 : f32
    %29 = vector.broadcast %cst_13 : f32 to vector<128x32xf32>
    %30 = arith.mulf %29, %26 : vector<128x32xf32>
    %31 = arith.select %28, %26, %30 : vector<128x32xi1>, vector<128x32xf32>
    %32 = arith.truncf %31 : vector<128x32xf32> to vector<128x32xbf16>
    %c0_14 = arith.constant 0 : index
    %c0_15 = arith.constant 0 : index
    %33 = vector.load %arg4[%c0_14, %c0_15] : memref<128x32xbf16, #tpu.memory_space<vmem>>, vector<128x32xbf16>
    tpu.vector_store %arg4[%c0_14, %c0_15], %32 {strides = array<i32>} : memref<128x32xbf16, #tpu.memory_space<vmem>>, vector<128x32xbf16>,
    return
  }
}

module attributes {stable_mosaic.version = 11 : i64} {
  func.func @_tail_kernel(%arg0: memref<32x512xbf16, #tpu.memory_space<vmem>>, %arg1: memref<512x64xbf16, #tpu.memory_space<vmem>>, %arg2: memref<1x64xf32, #tpu.memory_space<vmem>>, %arg3: memref<1x64xf32, #tpu.memory_space<vmem>>, %arg4: memref<2x32xbf16, #tpu.memory_space<vmem>>, %arg5: memref<32x16xbf16, #tpu.memory_space<vmem>>, %arg6: memref<1x16xf32, #tpu.memory_space<vmem>>, %arg7: memref<1x16xf32, #tpu.memory_space<vmem>>, %arg8: memref<1x16xf32, #tpu.memory_space<vmem>>, %arg9: memref<32x64xf32, #tpu.memory_space<vmem>>, %arg10: memref<1x16xf32, #tpu.memory_space<vmem>>, %arg11: memref<2x32xf32, #tpu.memory_space<vmem>>, %arg12: memref<32x64xf32, #tpu.memory_space<vmem>>, %arg13: memref<2x1xf32, #tpu.memory_space<vmem>>) attributes {dimension_semantics = [], scalar_prefetch = 0 : i64, scratch_operands = 0 : i64, tpu.core_type = #tpu.core_type<tc>} {
    %c0 = arith.constant 0 : index
    %c0_0 = arith.constant 0 : index
    %0 = vector.load %arg0[%c0, %c0_0] : memref<32x512xbf16, #tpu.memory_space<vmem>>, vector<32x512xbf16>
    %c0_1 = arith.constant 0 : index
    %c0_2 = arith.constant 0 : index
    %1 = vector.load %arg1[%c0_1, %c0_2] : memref<512x64xbf16, #tpu.memory_space<vmem>>, vector<512x64xbf16>
    %cst = arith.constant dense<0.000000e+00> : vector<32x64xf32>
    %2 = tpu.matmul %0, %1, %cst {dimension_numbers = #tpu.dot_dimension_numbers<[1], [0], [0], [1], [0, 0, 1, 1], [], []>} : vector<32x512xbf16>, vector<512x64xbf16>, vector<32x64xf32> -> vector<32x64xf32>
    %cst_3 = arith.constant dense<0.000000e+00> : vector<64xf32>
    %3 = vector.multi_reduction <add>, %2, %cst_3 [0] : vector<32x64xf32> to vector<64xf32>
    %4 = vector.shape_cast %3 : vector<64xf32> to vector<1x64xf32>
    %cst_4 = arith.constant 3.200000e+01 : f32
    %5 = vector.broadcast %cst_4 : f32 to vector<1x64xf32>
    %6 = arith.divf %4, %5 : vector<1x64xf32>
    %7 = vector.broadcast %6 : vector<1x64xf32> to vector<32x64xf32>
    %8 = arith.subf %2, %7 : vector<32x64xf32>
    %9 = arith.mulf %8, %8 : vector<32x64xf32>
    %cst_5 = arith.constant dense<0.000000e+00> : vector<64xf32>
    %10 = vector.multi_reduction <add>, %9, %cst_5 [0] : vector<32x64xf32> to vector<64xf32>
    %11 = vector.shape_cast %10 : vector<64xf32> to vector<1x64xf32>
    %cst_6 = arith.constant 3.200000e+01 : f32
    %12 = vector.broadcast %cst_6 : f32 to vector<1x64xf32>
    %13 = arith.divf %11, %12 : vector<1x64xf32>
    %14 = vector.broadcast %6 : vector<1x64xf32> to vector<32x64xf32>
    %15 = arith.subf %2, %14 : vector<32x64xf32>
    %cst_7 = arith.constant 9.99999974E-6 : f32
    %16 = vector.broadcast %cst_7 : f32 to vector<1x64xf32>
    %17 = arith.addf %13, %16 : vector<1x64xf32>
    %18 = math.rsqrt %17 : vector<1x64xf32>
    %19 = vector.broadcast %18 : vector<1x64xf32> to vector<32x64xf32>
    %20 = arith.mulf %15, %19 : vector<32x64xf32>
    %c0_8 = arith.constant 0 : index
    %c0_9 = arith.constant 0 : index
    %21 = vector.load %arg2[%c0_8, %c0_9] : memref<1x64xf32, #tpu.memory_space<vmem>>, vector<1x64xf32>
    %22 = vector.broadcast %21 : vector<1x64xf32> to vector<32x64xf32>
    %23 = arith.mulf %20, %22 : vector<32x64xf32>
    %c0_10 = arith.constant 0 : index
    %c0_11 = arith.constant 0 : index
    %24 = vector.load %arg3[%c0_10, %c0_11] : memref<1x64xf32, #tpu.memory_space<vmem>>, vector<1x64xf32>
    %25 = vector.broadcast %24 : vector<1x64xf32> to vector<32x64xf32>
    %26 = arith.addf %23, %25 : vector<32x64xf32>
    %cst_12 = arith.constant 0.000000e+00 : f32
    %27 = vector.broadcast %cst_12 : f32 to vector<32x64xf32>
    %28 = arith.cmpf oge, %26, %27 : vector<32x64xf32>
    %cst_13 = arith.constant 2.000000e-01 : f32
    %29 = vector.broadcast %cst_13 : f32 to vector<32x64xf32>
    %30 = arith.mulf %29, %26 : vector<32x64xf32>
    %31 = arith.select %28, %26, %30 : vector<32x64xi1>, vector<32x64xf32>
    %c0_14 = arith.constant 0 : index
    %c0_15 = arith.constant 0 : index
    %32 = vector.load %arg12[%c0_14, %c0_15] : memref<32x64xf32, #tpu.memory_space<vmem>>, vector<32x64xf32>
    tpu.vector_store %arg12[%c0_14, %c0_15], %31 {strides = array<i32>} : memref<32x64xf32, #tpu.memory_space<vmem>>, vector<32x64xf32>,
    %c0_16 = arith.constant 0 : index
    %c0_17 = arith.constant 0 : index
    %33 = vector.load %arg4[%c0_16, %c0_17] : memref<2x32xbf16, #tpu.memory_space<vmem>>, vector<2x32xbf16>
    %c0_18 = arith.constant 0 : index
    %c0_19 = arith.constant 0 : index
    %34 = vector.load %arg5[%c0_18, %c0_19] : memref<32x16xbf16, #tpu.memory_space<vmem>>, vector<32x16xbf16>
    %cst_20 = arith.constant dense<0.000000e+00> : vector<2x16xf32>
    %35 = tpu.matmul %33, %34, %cst_20 {dimension_numbers = #tpu.dot_dimension_numbers<[1], [0], [0], [1], [0, 0, 1, 1], [], []>} : vector<2x32xbf16>, vector<32x16xbf16>, vector<2x16xf32> -> vector<2x16xf32>
    %c0_21 = arith.constant 0 : index
    %c0_22 = arith.constant 0 : index
    %36 = vector.load %arg6[%c0_21, %c0_22] : memref<1x16xf32, #tpu.memory_space<vmem>>, vector<1x16xf32>
    %37 = vector.broadcast %36 : vector<1x16xf32> to vector<2x16xf32>
    %38 = arith.addf %35, %37 : vector<2x16xf32>
    %cst_23 = arith.constant dense<0.000000e+00> : vector<16xf32>
    %39 = vector.multi_reduction <add>, %38, %cst_23 [0] : vector<2x16xf32> to vector<16xf32>
    %40 = vector.shape_cast %39 : vector<16xf32> to vector<1x16xf32>
    %cst_24 = arith.constant 2.000000e+00 : f32
    %41 = vector.broadcast %cst_24 : f32 to vector<1x16xf32>
    %42 = arith.divf %40, %41 : vector<1x16xf32>
    %43 = vector.broadcast %42 : vector<1x16xf32> to vector<2x16xf32>
    %44 = arith.subf %38, %43 : vector<2x16xf32>
    %45 = arith.mulf %44, %44 : vector<2x16xf32>
    %cst_25 = arith.constant dense<0.000000e+00> : vector<16xf32>
    %46 = vector.multi_reduction <add>, %45, %cst_25 [0] : vector<2x16xf32> to vector<16xf32>
    %47 = vector.shape_cast %46 : vector<16xf32> to vector<1x16xf32>
    %cst_26 = arith.constant 2.000000e+00 : f32
    %48 = vector.broadcast %cst_26 : f32 to vector<1x16xf32>
    %49 = arith.divf %47, %48 : vector<1x16xf32>
    %50 = vector.broadcast %42 : vector<1x16xf32> to vector<2x16xf32>
    %51 = arith.subf %38, %50 : vector<2x16xf32>
    %cst_27 = arith.constant 9.99999974E-6 : f32
    %52 = vector.broadcast %cst_27 : f32 to vector<1x16xf32>
    %53 = arith.addf %49, %52 : vector<1x16xf32>
    %54 = math.rsqrt %53 : vector<1x16xf32>
    %55 = vector.broadcast %54 : vector<1x16xf32> to vector<2x16xf32>
    %56 = arith.mulf %51, %55 : vector<2x16xf32>
    %c0_28 = arith.constant 0 : index
    %c0_29 = arith.constant 0 : index
    %57 = vector.load %arg7[%c0_28, %c0_29] : memref<1x16xf32, #tpu.memory_space<vmem>>, vector<1x16xf32>
    %58 = vector.broadcast %57 : vector<1x16xf32> to vector<2x16xf32>
    %59 = arith.mulf %56, %58 : vector<2x16xf32>
    %c0_30 = arith.constant 0 : index
    %c0_31 = arith.constant 0 : index
    %60 = vector.load %arg8[%c0_30, %c0_31] : memref<1x16xf32, #tpu.memory_space<vmem>>, vector<1x16xf32>
    %61 = vector.broadcast %60 : vector<1x16xf32> to vector<2x16xf32>
    %62 = arith.addf %59, %61 : vector<2x16xf32>
    %cst_32 = arith.constant 0.000000e+00 : f32
    %63 = vector.broadcast %cst_32 : f32 to vector<2x16xf32>
    %64 = arith.cmpf oge, %62, %63 : vector<2x16xf32>
    %cst_33 = arith.constant 2.000000e-01 : f32
    %65 = vector.broadcast %cst_33 : f32 to vector<2x16xf32>
    %66 = arith.mulf %65, %62 : vector<2x16xf32>
    %67 = arith.select %64, %62, %66 : vector<2x16xi1>, vector<2x16xf32>
    %c0_34 = arith.constant 0 : index
    %c0_35 = arith.constant 0 : index
    %68 = vector.load %arg9[%c0_34, %c0_35] : memref<32x64xf32, #tpu.memory_space<vmem>>, vector<32x64xf32>
    %69 = arith.mulf %31, %68 : vector<32x64xf32>
    %c0_36 = arith.constant 0 : index
    %c0_37 = arith.constant 0 : index
    %70 = vector.load %arg11[%c0_36, %c0_37] : memref<2x32xf32, #tpu.memory_space<vmem>>, vector<2x32xf32>
    %cst_38 = arith.constant dense<0.000000e+00> : vector<2x64xf32>
    %71 = tpu.matmul %70, %69, %cst_38 {dimension_numbers = #tpu.dot_dimension_numbers<[1], [0], [0], [1], [0, 0, 1, 1], [], []>} : vector<2x32xf32>, vector<32x64xf32>, vector<2x64xf32> -> vector<2x64xf32>
    %cst_39 = arith.constant dense<0.000000e+00> : vector<2xf32>
    %72 = vector.multi_reduction <add>, %71, %cst_39 [1] : vector<2x64xf32> to vector<2xf32>
    %73 = vector.shape_cast %72 : vector<2xf32> to vector<2x1xf32>
    %c0_40 = arith.constant 0 : index
    %c0_41 = arith.constant 0 : index
    %74 = vector.load %arg10[%c0_40, %c0_41] : memref<1x16xf32, #tpu.memory_space<vmem>>, vector<1x16xf32>
    %75 = vector.broadcast %74 : vector<1x16xf32> to vector<2x16xf32>
    %76 = arith.mulf %67, %75 : vector<2x16xf32>
    %cst_42 = arith.constant dense<0.000000e+00> : vector<2xf32>
    %77 = vector.multi_reduction <add>, %76, %cst_42 [1] : vector<2x16xf32> to vector<2xf32>
    %78 = vector.shape_cast %77 : vector<2xf32> to vector<2x1xf32>
    %79 = arith.addf %73, %78 : vector<2x1xf32>
    %cst_43 = arith.constant 0.000000e+00 : f32
    %80 = vector.broadcast %cst_43 : f32 to vector<2x1xf32>
    %81 = arith.subf %80, %79 : vector<2x1xf32>
    %82 = math.exp %81 : vector<2x1xf32>
    %cst_44 = arith.constant 1.000000e+00 : f32
    %83 = vector.broadcast %cst_44 : f32 to vector<2x1xf32>
    %84 = arith.addf %83, %82 : vector<2x1xf32>
    %cst_45 = arith.constant 1.000000e+00 : f32
    %85 = vector.broadcast %cst_45 : f32 to vector<2x1xf32>
    %86 = arith.divf %85, %84 : vector<2x1xf32>
    %c0_46 = arith.constant 0 : index
    %c0_47 = arith.constant 0 : index
    %87 = vector.load %arg13[%c0_46, %c0_47] : memref<2x1xf32, #tpu.memory_space<vmem>>, vector<2x1xf32>
    tpu.vector_store %arg13[%c0_46, %c0_47], %86 {strides = array<i32>} : memref<2x1xf32, #tpu.memory_space<vmem>>, vector<2x1xf32>,
    return
  }
}

</mosaic_0001>

<llo_original>
// kernel: discriminator_forward.4
$region0: #{discriminator_forward.4}
  #allocation0 [shape = 'u32[]', space=smem, size = 0x4, offset = 0x4, fixed_abs, tag = 'smem constant byte address 0x4 - core index']
  #allocation1 [shape = 'u32[144,128]{1,0:T(1,128)}', space=vmem, size = 0x12000, scoped, tag = 'internal scratch']
  %s0 = inlined_call_operand.vmem [shape: bf16[2048,48], index: 0, kind: input, shape index: {}]
  %s1 = inlined_call_operand.vmem [shape: bf16[48,8], index: 1, kind: input, shape index: {}]
  %s2 = inlined_call_operand.vmem [shape: bf16[2048,8], index: 2, kind: output, shape index: {}]
  %s3 = sld [smem:[#allocation0]]
  $region41: #{discriminator_forward.4} parent=0
    _
  %s5 = ssub.s32 1, %s3
  %s6 = scalar_select 0, %s5, %s3
  loop: start=0, step=1, limit=4
  $region2: #{discriminator_forward.4} parent=0 // loop_pre_header
    _
  $region3: #{discriminator_forward.4} parent=0 // loop_header
    %s8 = sphi 0, %s12
    %p9 = scmp.ge.s32.totalorder %s8, 4
    %s18 = sphi 0, %s20
    %s21 = sphi 0, %s18
    %s22 = sphi 0, %s21
    %s38 = sphi 0, %s22
    %s42 = sphi 0, %s42
    %s44 = sphi 0, %s42
    %s45 = sphi 0, %s44
    %s59 = sphi 0, %s45
    %s65 = sphi 0, %s67
    %s68 = sphi 0, %s65
    %s69 = sphi 0, %s68
    %s85 = sphi 0, %s69
  $region4: #{discriminator_forward.4} parent=0 // loop_header_branch
    %11 = sbr.rel (%p9) target = $region8
  $region5: #{discriminator_forward.4} parent=0 // loop_body
    %s13 = ssub.s32 %s8, 1
    %s14 = ssub.s32 %s8, 2
    %s15 = sadd.s32 %s8, 1
    %s16 = ssub.s32 %s8, %s15
    %p17 = scmp.eq.s32.totalorder %s16, 0
    %s19 = sadd.s32 %s18, 1
    %s20 = scalar_select %p17, %s18, %s19
    %p23 = pneg %p17
    %p24 = scmp.eq.s32.totalorder %s8, 1
    %p25 = por %p23, %p24
    %p26 = scmp.ne.s32.totalorder %s18, %s21
    %p27 = scmp.eq.s32.totalorder %s8, 0
    %p28 = por %p26, %p27
    %p29 = scmp.ne.s32.totalorder %s18, %s21
    %p30 = scmp.eq.s32.totalorder %s13, 1
    %p31 = por %p29, %p30
    %p32 = scmp.ne.s32.totalorder %s21, %s22
    %p33 = scmp.eq.s32.totalorder %s13, 0
    %p34 = por %p32, %p33
    %p35 = scmp.ne.s32.totalorder %s21, %s22
    %p36 = scmp.eq.s32.totalorder %s14, 1
    %p37 = por %p35, %p36
    %p39 = scmp.ne.s32.totalorder %s22, %s38
    %p40 = scmp.eq.s32.totalorder %s14, 0
    %p41 = por %p39, %p40
    %s43 = sadd.s32 %s42, 1
    %p46 = scmp.eq.s32.totalorder %s8, 1
    %p47 = scmp.ne.s32.totalorder %s42, %s44
    %p48 = scmp.eq.s32.totalorder %s8, 0
    %p49 = por %p47, %p48
    %p50 = scmp.ne.s32.totalorder %s42, %s44
    %p51 = scmp.eq.s32.totalorder %s13, 1
    %p52 = por %p50, %p51
    %p53 = scmp.ne.s32.totalorder %s44, %s45
    %p54 = scmp.eq.s32.totalorder %s13, 0
    %p55 = por %p53, %p54
    %p56 = scmp.ne.s32.totalorder %s44, %s45
    %p57 = scmp.eq.s32.totalorder %s14, 1
    %p58 = por %p56, %p57
    %p60 = scmp.ne.s32.totalorder %s45, %s59
    %p61 = scmp.eq.s32.totalorder %s14, 0
    %p62 = por %p60, %p61
    %s63 = ssub.s32 %s8, %s15
    %p64 = scmp.eq.s32.totalorder %s63, 0
    %s66 = sadd.s32 %s65, 1
    %s67 = scalar_select %p64, %s65, %s66
    %p70 = pneg %p64
    %p71 = scmp.eq.s32.totalorder %s8, 1
    %p72 = por %p70, %p71
    %p73 = scmp.ne.s32.totalorder %s65, %s68
    %p74 = scmp.eq.s32.totalorder %s8, 0
    %p75 = por %p73, %p74
    %p76 = scmp.ne.s32.totalorder %s65, %s68
    %p77 = scmp.eq.s32.totalorder %s13, 1
    %p78 = por %p76, %p77
    %p79 = scmp.ne.s32.totalorder %s68, %s69
    %p80 = scmp.eq.s32.totalorder %s13, 0
    %p81 = por %p79, %p80
    %p82 = scmp.ne.s32.totalorder %s68, %s69
    %p83 = scmp.eq.s32.totalorder %s14, 1
    %p84 = por %p82, %p83
    %p86 = scmp.ne.s32.totalorder %s69, %s85
    %p87 = scmp.eq.s32.totalorder %s14, 0
    %p88 = por %p86, %p87
    %p89 = scmp.le.s32.totalorder 1, %s8
    %p90 = scmp.lt.s32.totalorder %s8, 3
    %p91 = pnand %p89, %p90
    %p92 = pneg %p91
    // Predicated region
    $region9: #{discriminator_forward.4} parent=5 // pred_check
      _
    $region10: #{discriminator_forward.4} parent=5 // pred_check_branch
      %94 = sbr.rel (%p91) target = $region12
    $region11: #{discriminator_forward.4} parent=5 // pred_region
      %s95 = ssub.s32 %s8, 1
      // Predicated region
      $region13: #{discriminator_forward.4} parent=11 // pred_check
        %p96 = pneg %p55
      $region14: #{discriminator_forward.4} parent=11 // pred_check_branch
        %98 = sbr.rel (%p96) target = $region16
      $region15: #{discriminator_forward.4} parent=11 // pred_region
        _
      $region16: #{discriminator_forward.4} parent=11 // pred_fallthru
        _
    $region12: #{discriminator_forward.4} parent=5 // pred_fallthru
      _
    %p99 = scmp.lt.s32.totalorder %s8, 2
    // Predicated region
    $region17: #{discriminator_forward.4} parent=5 // pred_check
      %p100 = pneg %p99
    $region18: #{discriminator_forward.4} parent=5 // pred_check_branch
      %102 = sbr.rel (%p100) target = $region20
    $region19: #{discriminator_forward.4} parent=5 // pred_region
      // Predicated region
      $region21: #{discriminator_forward.4} parent=19 // pred_check
        %p103 = pneg %p28
      $region22: #{discriminator_forward.4} parent=19 // pred_check_branch
        %105 = sbr.rel (%p103) target = $region24
      $region23: #{discriminator_forward.4} parent=19 // pred_region
        %s106 = smul.u32 128, %s8
        %p107 = scmp.lt.s32.totalorder %s106, 255
        %s108 = scalar_select %p107, %s106, 255
        %s109 = smul.addr %s108, 4
        %s110 = scalar_lea.vmem %s0, %s109
        %s111 = smul.u32 128, %s8
      $region24: #{discriminator_forward.4} parent=19 // pred_fallthru
        _
    $region20: #{discriminator_forward.4} parent=5 // pred_fallthru
      _
    %p112 = scmp.le.s32.totalorder 1, %s8
    %p113 = scmp.lt.s32.totalorder %s8, 3
    %p114 = pnand %p112, %p113
    %p115 = pneg %p114
    // Predicated region
    $region25: #{discriminator_forward.4} parent=5 // pred_check
      _
    $region26: #{discriminator_forward.4} parent=5 // pred_check_branch
      %117 = sbr.rel (%p114) target = $region28
    $region27: #{discriminator_forward.4} parent=5 // pred_region
      %s118 = ssub.s32 %s8, 1
      %s119 = smul.u32 128, %s13
      %p120 = scmp.lt.s32.totalorder %s119, 255
      %s121 = scalar_select %p120, %s119, 255
      %s122 = smul.addr %s121, 4
      %s123 = scalar_lea.vmem %s0, %s122
      %p124 = pneg %p34
      %p125 = pneg %p31
      %p126 = pneg %p55
      %p127 = pneg %p52
      %p128 = pneg %p81
      %p129 = pneg %p78
      %s130 = smul.u32 128, %s13
      %p131 = scmp.lt.s32.totalorder %s130, 255
      %s132 = scalar_select %p131, %s130, 255
      %s133 = smul.addr %s132, 4
      %s134 = scalar_lea.vmem %s2, %s133
      %s135 = smul.u32 128, %s13
      %p136 = scmp.lt.s32.totalorder %s135, 255
      %s137 = scalar_select %p136, %s135, 255
      %s138 = smul.addr %s137, 4
      %s139 = scalar_lea.vmem %s0, %s138
      %s140 = smul.u32 128, %s13
      %s141 = smul.u32 128, %s13
      %p142 = scmp.lt.s32.totalorder %s141, 255
      %s143 = scalar_select %p142, %s141, 255
      %s144 = smul.addr %s143, 4
      %s145 = scalar_lea.vmem %s2, %s144
      %s146 = smul.u32 128, %s13
      %v148 = vld [vmem:[%s139] sm:$0xf]
      %v149 = vld [vmem:[%s139 + $0x4] sm:$0xf]
      %v150 = vld [vmem:[%s139 + $0x8] sm:$0xf]
      %v151 = vld [vmem:[%s139 + $0xc] sm:$0xf]
      %v152 = vld [vmem:[%s139 + $0x10] sm:$0xf]
      %v153 = vld [vmem:[%s139 + $0x14] sm:$0xf]
      %v154 = vld [vmem:[%s139 + $0x18] sm:$0xf]
      %v155 = vld [vmem:[%s139 + $0x1c] sm:$0xf]
      %v156 = vld [vmem:[%s139 + $0x20] sm:$0xf]
      %v157 = vld [vmem:[%s139 + $0x24] sm:$0xf]
      %v158 = vld [vmem:[%s139 + $0x28] sm:$0xf]
      %v159 = vld [vmem:[%s139 + $0x2c] sm:$0xf]
      %v160 = vld [vmem:[%s139 + $0x30] sm:$0xf]
      %v161 = vld [vmem:[%s139 + $0x34] sm:$0xf]
      %v162 = vld [vmem:[%s139 + $0x38] sm:$0xf]
      %v163 = vld [vmem:[%s139 + $0x3c] sm:$0xf]
      %v164 = vld [vmem:[%s139 + $0x40] sm:$0xf]
      %v165 = vld [vmem:[%s139 + $0x44] sm:$0xf]
      %v166 = vld [vmem:[%s139 + $0x48] sm:$0xf]
      %v167 = vld [vmem:[%s139 + $0x4c] sm:$0xf]
      %v168 = vld [vmem:[%s139 + $0x50] sm:$0xf]
      %v169 = vld [vmem:[%s139 + $0x54] sm:$0xf]
      %v170 = vld [vmem:[%s139 + $0x58] sm:$0xf]
      %v171 = vld [vmem:[%s139 + $0x5c] sm:$0xf]
      %v172 = vld [vmem:[%s139 + $0x60] sm:$0xf]
      %v173 = vld [vmem:[%s139 + $0x64] sm:$0xf]
      %v174 = vld [vmem:[%s139 + $0x68] sm:$0xf]
      %v175 = vld [vmem:[%s139 + $0x6c] sm:$0xf]
      %v176 = vld [vmem:[%s139 + $0x70] sm:$0xf]
      %v177 = vld [vmem:[%s139 + $0x74] sm:$0xf]
      %v178 = vld [vmem:[%s139 + $0x78] sm:$0xf]
      %v179 = vld [vmem:[%s139 + $0x7c] sm:$0xf]
      %v180 = vld [vmem:[%s139 + $0x80] sm:$0xf]
      %v181 = vld [vmem:[%s139 + $0x84] sm:$0xf]
      %v182 = vld [vmem:[%s139 + $0x88] sm:$0xf]
      %v183 = vld [vmem:[%s139 + $0x8c] sm:$0xf]
      %v184 = vld [vmem:[%s139 + $0x90] sm:$0xf]
      %v185 = vld [vmem:[%s139 + $0x94] sm:$0xf]
      %v186 = vld [vmem:[%s139 + $0x98] sm:$0xf]
      %v187 = vld [vmem:[%s139 + $0x9c] sm:$0xf]
      %v188 = vld [vmem:[%s139 + $0xa0] sm:$0xf]
      %v189 = vld [vmem:[%s139 + $0xa4] sm:$0xf]
      %v190 = vld [vmem:[%s139 + $0xa8] sm:$0xf]
      %v191 = vld [vmem:[%s139 + $0xac] sm:$0xf]
      %v192 = vld [vmem:[%s139 + $0xb0] sm:$0xf]
      %v193 = vld [vmem:[%s139 + $0xb4] sm:$0xf]
      %v194 = vld [vmem:[%s139 + $0xb8] sm:$0xf]
      %v195 = vld [vmem:[%s139 + $0xbc] sm:$0xf]
      %v196 = vld [vmem:[%s139 + $0xc0] sm:$0xf]
      %v197 = vld [vmem:[%s139 + $0xc4] sm:$0xf]
      %v198 = vld [vmem:[%s139 + $0xc8] sm:$0xf]
      %v199 = vld [vmem:[%s139 + $0xcc] sm:$0xf]
      %v200 = vld [vmem:[%s139 + $0xd0] sm:$0xf]
      %v201 = vld [vmem:[%s139 + $0xd4] sm:$0xf]
      %v202 = vld [vmem:[%s139 + $0xd8] sm:$0xf]
      %v203 = vld [vmem:[%s139 + $0xdc] sm:$0xf]
      %v204 = vld [vmem:[%s139 + $0xe0] sm:$0xf]
      %v205 = vld [vmem:[%s139 + $0xe4] sm:$0xf]
      %v206 = vld [vmem:[%s139 + $0xe8] sm:$0xf]
      %v207 = vld [vmem:[%s139 + $0xec] sm:$0xf]
      %v208 = vld [vmem:[%s139 + $0xf0] sm:$0xf]
      %v209 = vld [vmem:[%s139 + $0xf4] sm:$0xf]
      %v210 = vld [vmem:[%s139 + $0xf8] sm:$0xf]
      %v211 = vld [vmem:[%s139 + $0xfc] sm:$0xf]
      %v212 = vld [vmem:[%s139 + $0x100] sm:$0xf]
      %v213 = vld [vmem:[%s139 + $0x104] sm:$0xf]
      %v214 = vld [vmem:[%s139 + $0x108] sm:$0xf]
      %v215 = vld [vmem:[%s139 + $0x10c] sm:$0xf]
      %v216 = vld [vmem:[%s139 + $0x110] sm:$0xf]
      %v217 = vld [vmem:[%s139 + $0x114] sm:$0xf]
      %v218 = vld [vmem:[%s139 + $0x118] sm:$0xf]
      %v219 = vld [vmem:[%s139 + $0x11c] sm:$0xf]
      %v220 = vld [vmem:[%s139 + $0x120] sm:$0xf]
      %v221 = vld [vmem:[%s139 + $0x124] sm:$0xf]
      %v222 = vld [vmem:[%s139 + $0x128] sm:$0xf]
      %v223 = vld [vmem:[%s139 + $0x12c] sm:$0xf]
      %v224 = vld [vmem:[%s139 + $0x130] sm:$0xf]
      %v225 = vld [vmem:[%s139 + $0x134] sm:$0xf]
      %v226 = vld [vmem:[%s139 + $0x138] sm:$0xf]
      %v227 = vld [vmem:[%s139 + $0x13c] sm:$0xf]
      %v228 = vld [vmem:[%s139 + $0x140] sm:$0xf]
      %v229 = vld [vmem:[%s139 + $0x144] sm:$0xf]
      %v230 = vld [vmem:[%s139 + $0x148] sm:$0xf]
      %v231 = vld [vmem:[%s139 + $0x14c] sm:$0xf]
      %v232 = vld [vmem:[%s139 + $0x150] sm:$0xf]
      %v233 = vld [vmem:[%s139 + $0x154] sm:$0xf]
      %v234 = vld [vmem:[%s139 + $0x158] sm:$0xf]
      %v235 = vld [vmem:[%s139 + $0x15c] sm:$0xf]
      %v236 = vld [vmem:[%s139 + $0x160] sm:$0xf]
      %v237 = vld [vmem:[%s139 + $0x164] sm:$0xf]
      %v238 = vld [vmem:[%s139 + $0x168] sm:$0xf]
      %v239 = vld [vmem:[%s139 + $0x16c] sm:$0xf]
      %v240 = vld [vmem:[%s139 + $0x170] sm:$0xf]
      %v241 = vld [vmem:[%s139 + $0x174] sm:$0xf]
      %v242 = vld [vmem:[%s139 + $0x178] sm:$0xf]
      %v243 = vld [vmem:[%s139 + $0x17c] sm:$0xf]
      %v244 = vld [vmem:[%s139 + $0x180] sm:$0xf]
      %v245 = vld [vmem:[%s139 + $0x184] sm:$0xf]
      %v246 = vld [vmem:[%s139 + $0x188] sm:$0xf]
      %v247 = vld [vmem:[%s139 + $0x18c] sm:$0xf]
      %v248 = vld [vmem:[%s139 + $0x190] sm:$0xf]
      %v249 = vld [vmem:[%s139 + $0x194] sm:$0xf]
      %v250 = vld [vmem:[%s139 + $0x198] sm:$0xf]
      %v251 = vld [vmem:[%s139 + $0x19c] sm:$0xf]
      %v252 = vld [vmem:[%s139 + $0x1a0] sm:$0xf]
      %v253 = vld [vmem:[%s139 + $0x1a4] sm:$0xf]
      %v254 = vld [vmem:[%s139 + $0x1a8] sm:$0xf]
      %v255 = vld [vmem:[%s139 + $0x1ac] sm:$0xf]
      %v256 = vld [vmem:[%s139 + $0x1b0] sm:$0xf]
      %v257 = vld [vmem:[%s139 + $0x1b4] sm:$0xf]
      %v258 = vld [vmem:[%s139 + $0x1b8] sm:$0xf]
      %v259 = vld [vmem:[%s139 + $0x1bc] sm:$0xf]
      %v260 = vld [vmem:[%s139 + $0x1c0] sm:$0xf]
      %v261 = vld [vmem:[%s139 + $0x1c4] sm:$0xf]
      %v262 = vld [vmem:[%s139 + $0x1c8] sm:$0xf]
      %v263 = vld [vmem:[%s139 + $0x1cc] sm:$0xf]
      %v264 = vld [vmem:[%s139 + $0x1d0] sm:$0xf]
      %v265 = vld [vmem:[%s139 + $0x1d4] sm:$0xf]
      %v266 = vld [vmem:[%s139 + $0x1d8] sm:$0xf]
      %v267 = vld [vmem:[%s139 + $0x1dc] sm:$0xf]
      %v268 = vld [vmem:[%s139 + $0x1e0] sm:$0xf]
      %v269 = vld [vmem:[%s139 + $0x1e4] sm:$0xf]
      %v270 = vld [vmem:[%s139 + $0x1e8] sm:$0xf]
      %v271 = vld [vmem:[%s139 + $0x1ec] sm:$0xf]
      %v272 = vld [vmem:[%s139 + $0x1f0] sm:$0xf]
      %v273 = vld [vmem:[%s139 + $0x1f4] sm:$0xf]
      %v274 = vld [vmem:[%s139 + $0x1f8] sm:$0xf]
      %v275 = vld [vmem:[%s139 + $0x1fc] sm:$0xf]
      %v276 = vld [vmem:[%s1] sm:$0xf]
      %v277 = vld [vmem:[%s1 + $0x4] sm:$0xf]
      %v278 = vld [vmem:[%s1 + $0x8] sm:$0xf]
      %v279 = vld [vmem:[%s1 + $0xc] sm:$0xf]
      %v280 = vld [vmem:[%s1 + $0x10] sm:$0xf]
      %v281 = vld [vmem:[%s1 + $0x14] sm:$0xf]
      %v410 = vunpack.c.l.b16 %v148
      %v411 = vunpack.c.l.b16 %v149
      %v412 = vunpack.c.l.b16 %v150
      %v413 = vunpack.c.l.b16 %v151
      %v414 = vunpack.c.l.b16 %v152
      %v415 = vunpack.c.l.b16 %v153
      %v416 = vunpack.c.l.b16 %v154
      %v417 = vunpack.c.l.b16 %v155
      %v418 = vunpack.c.l.b16 %v156
      %v419 = vunpack.c.l.b16 %v157
      %v420 = vunpack.c.l.b16 %v158
      %v421 = vunpack.c.l.b16 %v159
      %v422 = vunpack.c.l.b16 %v160
      %v423 = vunpack.c.l.b16 %v161
      %v424 = vunpack.c.l.b16 %v162
      %v425 = vunpack.c.l.b16 %v163
      %v426 = vunpack.c.l.b16 %v164
      %v427 = vunpack.c.l.b16 %v165
      %v428 = vunpack.c.l.b16 %v166
      %v429 = vunpack.c.l.b16 %v167
      %v430 = vunpack.c.l.b16 %v168
      %v431 = vunpack.c.l.b16 %v169
      %v432 = vunpack.c.l.b16 %v170
      %v433 = vunpack.c.l.b16 %v171
      %v434 = vunpack.c.l.b16 %v172
      %v435 = vunpack.c.l.b16 %v173
      %v436 = vunpack.c.l.b16 %v174
      %v437 = vunpack.c.l.b16 %v175
      %v438 = vunpack.c.l.b16 %v176
      %v439 = vunpack.c.l.b16 %v177
      %v440 = vunpack.c.l.b16 %v178
      %v441 = vunpack.c.l.b16 %v179
      %v442 = vunpack.c.l.b16 %v180
      %v443 = vunpack.c.l.b16 %v181
      %v444 = vunpack.c.l.b16 %v182
      %v445 = vunpack.c.l.b16 %v183
      %v446 = vunpack.c.l.b16 %v184
      %v447 = vunpack.c.l.b16 %v185
      %v448 = vunpack.c.l.b16 %v186
      %v449 = vunpack.c.l.b16 %v187
      %v450 = vunpack.c.l.b16 %v188
      %v451 = vunpack.c.l.b16 %v189
      %v452 = vunpack.c.l.b16 %v190
      %v453 = vunpack.c.l.b16 %v191
      %v454 = vunpack.c.l.b16 %v192
      %v455 = vunpack.c.l.b16 %v193
      %v456 = vunpack.c.l.b16 %v194
      %v457 = vunpack.c.l.b16 %v195
      %v458 = vunpack.c.l.b16 %v196
      %v459 = vunpack.c.l.b16 %v197
      %v460 = vunpack.c.l.b16 %v198
      %v461 = vunpack.c.l.b16 %v199
      %v462 = vunpack.c.l.b16 %v200
      %v463 = vunpack.c.l.b16 %v201
      %v464 = vunpack.c.l.b16 %v202
      %v465 = vunpack.c.l.b16 %v203
      %v466 = vunpack.c.l.b16 %v204
      %v467 = vunpack.c.l.b16 %v205
      %v468 = vunpack.c.l.b16 %v206
      %v469 = vunpack.c.l.b16 %v207
      %v470 = vunpack.c.l.b16 %v208
      %v471 = vunpack.c.l.b16 %v209
      %v472 = vunpack.c.l.b16 %v210
      %v473 = vunpack.c.l.b16 %v211
      %v474 = vunpack.c.l.b16 %v212
      %v475 = vunpack.c.l.b16 %v213
      %v476 = vunpack.c.l.b16 %v214
      %v477 = vunpack.c.l.b16 %v215
      %v478 = vunpack.c.l.b16 %v216
      %v479 = vunpack.c.l.b16 %v217
      %v480 = vunpack.c.l.b16 %v218
      %v481 = vunpack.c.l.b16 %v219
      %v482 = vunpack.c.l.b16 %v220
      %v483 = vunpack.c.l.b16 %v221
      %v484 = vunpack.c.l.b16 %v222
      %v485 = vunpack.c.l.b16 %v223
      %v486 = vunpack.c.l.b16 %v224
      %v487 = vunpack.c.l.b16 %v225
      %v488 = vunpack.c.l.b16 %v226
      %v489 = vunpack.c.l.b16 %v227
      %v490 = vunpack.c.l.b16 %v228
      %v491 = vunpack.c.l.b16 %v229
      %v492 = vunpack.c.l.b16 %v230
      %v493 = vunpack.c.l.b16 %v231
      %v494 = vunpack.c.l.b16 %v232
      %v495 = vunpack.c.l.b16 %v233
      %v496 = vunpack.c.l.b16 %v234
      %v497 = vunpack.c.l.b16 %v235
      %v498 = vunpack.c.l.b16 %v236
      %v499 = vunpack.c.l.b16 %v237
      %v500 = vunpack.c.l.b16 %v238
      %v501 = vunpack.c.l.b16 %v239
      %v502 = vunpack.c.l.b16 %v240
      %v503 = vunpack.c.l.b16 %v241
      %v504 = vunpack.c.l.b16 %v242
      %v505 = vunpack.c.l.b16 %v243
      %v506 = vunpack.c.l.b16 %v244
      %v507 = vunpack.c.l.b16 %v245
      %v508 = vunpack.c.l.b16 %v246
      %v509 = vunpack.c.l.b16 %v247
      %v510 = vunpack.c.l.b16 %v248
      %v511 = vunpack.c.l.b16 %v249
      %v512 = vunpack.c.l.b16 %v250
      %v513 = vunpack.c.l.b16 %v251
      %v514 = vunpack.c.l.b16 %v252
      %v515 = vunpack.c.l.b16 %v253
      %v516 = vunpack.c.l.b16 %v254
      %v517 = vunpack.c.l.b16 %v255
      %v518 = vunpack.c.l.b16 %v256
      %v519 = vunpack.c.l.b16 %v257
      %v520 = vunpack.c.l.b16 %v258
      %v521 = vunpack.c.l.b16 %v259
      %v522 = vunpack.c.l.b16 %v260
      %v523 = vunpack.c.l.b16 %v261
      %v524 = vunpack.c.l.b16 %v262
      %v525 = vunpack.c.l.b16 %v263
      %v526 = vunpack.c.l.b16 %v264
      %v527 = vunpack.c.l.b16 %v265
      %v528 = vunpack.c.l.b16 %v266
      %v529 = vunpack.c.l.b16 %v267
      %v530 = vunpack.c.l.b16 %v268
      %v531 = vunpack.c.l.b16 %v269
      %v532 = vunpack.c.l.b16 %v270
      %v533 = vunpack.c.l.b16 %v271
      %v534 = vunpack.c.l.b16 %v272
      %v535 = vunpack.c.l.b16 %v273
      %v536 = vunpack.c.l.b16 %v274
      %v537 = vunpack.c.l.b16 %v275
      %v538 = vpack.c.b16 %v411, %v410
      %v539 = vpack.c.b16 %v413, %v412
      %v540 = vpack.c.b16 %v415, %v414
      %v541 = vpack.c.b16 %v417, %v416
      %v542 = vpack.c.b16 %v419, %v418
      %v543 = vpack.c.b16 %v421, %v420
      %v544 = vpack.c.b16 %v423, %v422
      %v545 = vpack.c.b16 %v425, %v424
      %v546 = vpack.c.b16 %v427, %v426
      %v547 = vpack.c.b16 %v429, %v428
      %v548 = vpack.c.b16 %v431, %v430
      %v549 = vpack.c.b16 %v433, %v432
      %v550 = vpack.c.b16 %v435, %v434
      %v551 = vpack.c.b16 %v437, %v436
      %v552 = vpack.c.b16 %v439, %v438
      %v553 = vpack.c.b16 %v441, %v440
      %v554 = vpack.c.b16 %v443, %v442
      %v555 = vpack.c.b16 %v445, %v444
      %v556 = vpack.c.b16 %v447, %v446
      %v557 = vpack.c.b16 %v449, %v448
      %v558 = vpack.c.b16 %v451, %v450
      %v559 = vpack.c.b16 %v453, %v452
      %v560 = vpack.c.b16 %v455, %v454
      %v561 = vpack.c.b16 %v457, %v456
      %v562 = vpack.c.b16 %v459, %v458
      %v563 = vpack.c.b16 %v461, %v460
      %v564 = vpack.c.b16 %v463, %v462
      %v565 = vpack.c.b16 %v465, %v464
      %v566 = vpack.c.b16 %v467, %v466
      %v567 = vpack.c.b16 %v469, %v468
      %v568 = vpack.c.b16 %v471, %v470
      %v569 = vpack.c.b16 %v473, %v472
      %v570 = vpack.c.b16 %v475, %v474
      %v571 = vpack.c.b16 %v477, %v476
      %v572 = vpack.c.b16 %v479, %v478
      %v573 = vpack.c.b16 %v481, %v480
      %v574 = vpack.c.b16 %v483, %v482
      %v575 = vpack.c.b16 %v485, %v484
      %v576 = vpack.c.b16 %v487, %v486
      %v577 = vpack.c.b16 %v489, %v488
      %v578 = vpack.c.b16 %v491, %v490
      %v579 = vpack.c.b16 %v493, %v492
      %v580 = vpack.c.b16 %v495, %v494
      %v581 = vpack.c.b16 %v497, %v496
      %v582 = vpack.c.b16 %v499, %v498
      %v583 = vpack.c.b16 %v501, %v500
      %v584 = vpack.c.b16 %v503, %v502
      %v585 = vpack.c.b16 %v505, %v504
      %v586 = vpack.c.b16 %v507, %v506
      %v587 = vpack.c.b16 %v509, %v508
      %v588 = vpack.c.b16 %v511, %v510
      %v589 = vpack.c.b16 %v513, %v512
      %v590 = vpack.c.b16 %v515, %v514
      %v591 = vpack.c.b16 %v517, %v516
      %v592 = vpack.c.b16 %v519, %v518
      %v593 = vpack.c.b16 %v521, %v520
      %v594 = vpack.c.b16 %v523, %v522
      %v595 = vpack.c.b16 %v525, %v524
      %v596 = vpack.c.b16 %v527, %v526
      %v597 = vpack.c.b16 %v529, %v528
      %v598 = vpack.c.b16 %v531, %v530
      %v599 = vpack.c.b16 %v533, %v532
      %v600 = vpack.c.b16 %v535, %v534
      %v601 = vpack.c.b16 %v537, %v536
      %v608 = vunpack.c.l.b16 %v276
      %v609 = vunpack.c.l.b16 %v277
      %v610 = vunpack.c.l.b16 %v278
      %v611 = vunpack.c.l.b16 %v279
      %v612 = vunpack.c.l.b16 %v280
      %v613 = vunpack.c.l.b16 %v281
      %v614 = vpack.c.b16 %v609, %v608
      %v615 = vpack.c.b16 %v611, %v610
      %v616 = vpack.c.b16 %v613, %v612
      %vm620 = vcmask 392192
      %v622 = vsel %vm620, %v538, 0
      %v625 = vsel %vm620, %v539, 0
      %v628 = vsel %vm620, %v540, 0
      %v631 = vsel %vm620, %v541, 0
      %v634 = vsel %vm620, %v542, 0
      %v637 = vsel %vm620, %v543, 0
      %v640 = vsel %vm620, %v544, 0
      %v643 = vsel %vm620, %v545, 0
      %v646 = vsel %vm620, %v546, 0
      %v649 = vsel %vm620, %v547, 0
      %v652 = vsel %vm620, %v548, 0
      %v655 = vsel %vm620, %v549, 0
      %v658 = vsel %vm620, %v550, 0
      %v661 = vsel %vm620, %v551, 0
      %v664 = vsel %vm620, %v552, 0
      %v667 = vsel %vm620, %v553, 0
      %v670 = vsel %vm620, %v554, 0
      %v673 = vsel %vm620, %v555, 0
      %v676 = vsel %vm620, %v556, 0
      %v679 = vsel %vm620, %v557, 0
      %v682 = vsel %vm620, %v558, 0
      %v685 = vsel %vm620, %v559, 0
      %v688 = vsel %vm620, %v560, 0
      %v691 = vsel %vm620, %v561, 0
      %v694 = vsel %vm620, %v562, 0
      %v697 = vsel %vm620, %v563, 0
      %v700 = vsel %vm620, %v564, 0
      %v703 = vsel %vm620, %v565, 0
      %v706 = vsel %vm620, %v566, 0
      %v709 = vsel %vm620, %v567, 0
      %v712 = vsel %vm620, %v568, 0
      %v715 = vsel %vm620, %v569, 0
      %v718 = vsel %vm620, %v570, 0
      %v721 = vsel %vm620, %v571, 0
      %v724 = vsel %vm620, %v572, 0
      %v727 = vsel %vm620, %v573, 0
      %v730 = vsel %vm620, %v574, 0
      %v733 = vsel %vm620, %v575, 0
      %v736 = vsel %vm620, %v576, 0
      %v739 = vsel %vm620, %v577, 0
      %v742 = vsel %vm620, %v578, 0
      %v745 = vsel %vm620, %v579, 0
      %v748 = vsel %vm620, %v580, 0
      %v751 = vsel %vm620, %v581, 0
      %v754 = vsel %vm620, %v582, 0
      %v757 = vsel %vm620, %v583, 0
      %v760 = vsel %vm620, %v584, 0
      %v763 = vsel %vm620, %v585, 0
      %v766 = vsel %vm620, %v586, 0
      %v769 = vsel %vm620, %v587, 0
      %v772 = vsel %vm620, %v588, 0
      %v775 = vsel %vm620, %v589, 0
      %v778 = vsel %vm620, %v590, 0
      %v781 = vsel %vm620, %v591, 0
      %v784 = vsel %vm620, %v592, 0
      %v787 = vsel %vm620, %v593, 0
      %v790 = vsel %vm620, %v594, 0
      %v793 = vsel %vm620, %v595, 0
      %v796 = vsel %vm620, %v596, 0
      %v799 = vsel %vm620, %v597, 0
      %v802 = vsel %vm620, %v598, 0
      %v805 = vsel %vm620, %v599, 0
      %v808 = vsel %vm620, %v600, 0
      %v811 = vsel %vm620, %v601, 0
      %813 = vmatprep.subr.bf16.mxu0 0
      %814 = vmatpush1.bf16.msra.mxu0 %v614
      %815 = vmatprep.subr.bf16.mxu0 0
      %816 = vmatpush1.bf16.msra.mxu0 %v615
      %817 = vmatprep.subr.bf16.mxu0 0
      %818 = vmatpush1.bf16.msra.mxu0 %v616
      %819 = vmatprep.subr.bf16.mxu0 0
      %820 = vmatpush1.bf16.msra.mxu0 0
      %821 = vmatprep.subr.bf16.mxu0 0
      %822 = vmatpush1.bf16.msra.mxu0 0
      %823 = vmatprep.subr.bf16.mxu0 0
      %824 = vmatpush1.bf16.msra.mxu0 0
      %825 = vmatprep.subr.bf16.mxu0 0
      %826 = vmatpush1.bf16.msra.mxu0 0
      %827 = vmatprep.subr.bf16.mxu0 0
      %828 = vmatpush1.bf16.msra.mxu0 0
      %829 = vmatprep.subr.bf16.mxu0 0
      %830 = vmatpush1.bf16.msra.mxu0 0
      %831 = vmatprep.subr.bf16.mxu0 0
      %832 = vmatpush1.bf16.msra.mxu0 0
      %833 = vmatprep.subr.bf16.mxu0 0
      %834 = vmatpush1.bf16.msra.mxu0 0
      %835 = vmatprep.subr.bf16.mxu0 0
      %836 = vmatpush1.bf16.msra.mxu0 0
      %837 = vmatprep.subr.bf16.mxu0 0
      %838 = vmatpush1.bf16.msra.mxu0 0
      %839 = vmatprep.subr.bf16.mxu0 0
      %840 = vmatpush1.bf16.msra.mxu0 0
      %841 = vmatprep.subr.bf16.mxu0 0
      %842 = vmatpush1.bf16.msra.mxu0 0
      %843 = vmatprep.subr.bf16.mxu0 0
      %844 = vmatpush1.bf16.msra.mxu0 0
      %845 = vmatprep.mubr.bf16.mxu0 0
      %846 = vmatmul.mubr.bf16.gmra.mrb[0].mxu0 %v622
      %v847 = vpop.f32.mrb[0].mxu0
      %v848 = vadd.f32 0.0, %v847
      %v849 = vpop.f32.mrb[0].mxu0
      %v850 = vpop.f32.mrb[0].mxu0
      %v851 = vadd.f32 0.0, %v850
      %v852 = vpop.f32.mrb[0].mxu0
      %853 = vmatprep.mubr.bf16.mxu0 0
      %854 = vmatmul.mubr.bf16.gmra.mrb[0].mxu0 %v625
      %v855 = vpop.f32.mrb[0].mxu0
      %v856 = vadd.f32 0.0, %v855
      %v857 = vpop.f32.mrb[0].mxu0
      %v858 = vpop.f32.mrb[0].mxu0
      %v859 = vadd.f32 0.0, %v858
      %v860 = vpop.f32.mrb[0].mxu0
      %861 = vmatprep.mubr.bf16.mxu0 0
      %862 = vmatmul.mubr.bf16.gmra.mrb[0].mxu0 %v628
      %v863 = vpop.f32.mrb[0].mxu0
      %v864 = vadd.f32 0.0, %v863
      %v865 = vpop.f32.mrb[0].mxu0
      %v866 = vpop.f32.mrb[0].mxu0
      %v867 = vadd.f32 0.0, %v866
      %v868 = vpop.f32.mrb[0].mxu0
      %869 = vmatprep.mubr.bf16.mxu0 0
      %870 = vmatmul.mubr.bf16.gmra.mrb[0].mxu0 %v631
      %v871 = vpop.f32.mrb[0].mxu0
      %v872 = vadd.f32 0.0, %v871
      %v873 = vpop.f32.mrb[0].mxu0
      %v874 = vpop.f32.mrb[0].mxu0
      %v875 = vadd.f32 0.0, %v874
      %v876 = vpop.f32.mrb[0].mxu0
      %877 = vmatprep.mubr.bf16.mxu0 0
      %878 = vmatmul.mubr.bf16.gmra.mrb[0].mxu0 %v634
      %v879 = vpop.f32.mrb[0].mxu0
      %v880 = vadd.f32 0.0, %v879
      %v881 = vpop.f32.mrb[0].mxu0
      %v882 = vpop.f32.mrb[0].mxu0
      %v883 = vadd.f32 0.0, %v882
      %v884 = vpop.f32.mrb[0].mxu0
      %885 = vmatprep.mubr.bf16.mxu0 0
      %886 = vmatmul.mubr.bf16.gmra.mrb[0].mxu0 %v637
      %v887 = vpop.f32.mrb[0].mxu0
      %v888 = vadd.f32 0.0, %v887
      %v889 = vpop.f32.mrb[0].mxu0
      %v890 = vpop.f32.mrb[0].mxu0
      %v891 = vadd.f32 0.0, %v890
      %v892 = vpop.f32.mrb[0].mxu0
      %893 = vmatprep.mubr.bf16.mxu0 0
      %894 = vmatmul.mubr.bf16.gmra.mrb[0].mxu0 %v640
      %v895 = vpop.f32.mrb[0].mxu0
      %v896 = vadd.f32 0.0, %v895
      %v897 = vpop.f32.mrb[0].mxu0
      %v898 = vpop.f32.mrb[0].mxu0
      %v899 = vadd.f32 0.0, %v898
      %v900 = vpop.f32.mrb[0].mxu0
      %901 = vmatprep.mubr.bf16.mxu0 0
      %902 = vmatmul.mubr.bf16.gmra.mrb[0].mxu0 %v643
      %v903 = vpop.f32.mrb[0].mxu0
      %v904 = vadd.f32 0.0, %v903
      %v905 = vpop.f32.mrb[0].mxu0
      %v906 = vpop.f32.mrb[0].mxu0
      %v907 = vadd.f32 0.0, %v906
      %v908 = vpop.f32.mrb[0].mxu0
      %909 = vmatprep.mubr.bf16.mxu0 0
      %910 = vmatmul.mubr.bf16.gmra.mrb[0].mxu0 %v646
      %v911 = vpop.f32.mrb[0].mxu0
      %v912 = vadd.f32 0.0, %v911
      %v913 = vpop.f32.mrb[0].mxu0
      %v914 = vpop.f32.mrb[0].mxu0
      %v915 = vadd.f32 0.0, %v914
      %v916 = vpop.f32.mrb[0].mxu0
      %917 = vmatprep.mubr.bf16.mxu0 0
      %918 = vmatmul.mubr.bf16.gmra.mrb[0].mxu0 %v649
      %v919 = vpop.f32.mrb[0].mxu0
      %v920 = vadd.f32 0.0, %v919
      %v921 = vpop.f32.mrb[0].mxu0
      %v922 = vpop.f32.mrb[0].mxu0
      %v923 = vadd.f32 0.0, %v922
      %v924 = vpop.f32.mrb[0].mxu0
      %925 = vmatprep.mubr.bf16.mxu0 0
      %926 = vmatmul.mubr.bf16.gmra.mrb[0].mxu0 %v652
      %v927 = vpop.f32.mrb[0].mxu0
      %v928 = vadd.f32 0.0, %v927
      %v929 = vpop.f32.mrb[0].mxu0
      %v930 = vpop.f32.mrb[0].mxu0
      %v931 = vadd.f32 0.0, %v930
      %v932 = vpop.f32.mrb[0].mxu0
      %933 = vmatprep.mubr.bf16.mxu0 0
      %934 = vmatmul.mubr.bf16.gmra.mrb[0].mxu0 %v655
      %v935 = vpop.f32.mrb[0].mxu0
      %v936 = vadd.f32 0.0, %v935
      %v937 = vpop.f32.mrb[0].mxu0
      %v938 = vpop.f32.mrb[0].mxu0
      %v939 = vadd.f32 0.0, %v938
      %v940 = vpop.f32.mrb[0].mxu0
      %941 = vmatprep.mubr.bf16.mxu0 0
      %942 = vmatmul.mubr.bf16.gmra.mrb[0].mxu0 %v658
      %v943 = vpop.f32.mrb[0].mxu0
      %v944 = vadd.f32 0.0, %v943
      %v945 = vpop.f32.mrb[0].mxu0
      %v946 = vpop.f32.mrb[0].mxu0
      %v947 = vadd.f32 0.0, %v946
      %v948 = vpop.f32.mrb[0].mxu0
      %949 = vmatprep.mubr.bf16.mxu0 0
      %950 = vmatmul.mubr.bf16.gmra.mrb[0].mxu0 %v661
      %v951 = vpop.f32.mrb[0].mxu0
      %v952 = vadd.f32 0.0, %v951
      %v953 = vpop.f32.mrb[0].mxu0
      %v954 = vpop.f32.mrb[0].mxu0
      %v955 = vadd.f32 0.0, %v954
      %v956 = vpop.f32.mrb[0].mxu0
      %957 = vmatprep.mubr.bf16.mxu0 0
      %958 = vmatmul.mubr.bf16.gmra.mrb[0].mxu0 %v664
      %v959 = vpop.f32.mrb[0].mxu0
      %v960 = vadd.f32 0.0, %v959
      %v961 = vpop.f32.mrb[0].mxu0
      %v962 = vpop.f32.mrb[0].mxu0
      %v963 = vadd.f32 0.0, %v962
      %v964 = vpop.f32.mrb[0].mxu0
      %965 = vmatprep.mubr.bf16.mxu0 0
      %966 = vmatmul.mubr.bf16.gmra.mrb[0].mxu0 %v667
      %v967 = vpop.f32.mrb[0].mxu0
      %v968 = vadd.f32 0.0, %v967
      %v969 = vpop.f32.mrb[0].mxu0
      %v970 = vpop.f32.mrb[0].mxu0
      %v971 = vadd.f32 0.0, %v970
      %v972 = vpop.f32.mrb[0].mxu0
      %973 = vmatprep.mubr.bf16.mxu0 0
      %974 = vmatmul.mubr.bf16.gmra.mrb[0].mxu0 %v670
      %v975 = vpop.f32.mrb[0].mxu0
      %v976 = vadd.f32 0.0, %v975
      %v977 = vpop.f32.mrb[0].mxu0
      %v978 = vpop.f32.mrb[0].mxu0
      %v979 = vadd.f32 0.0, %v978
      %v980 = vpop.f32.mrb[0].mxu0
      %981 = vmatprep.mubr.bf16.mxu0 0
      %982 = vmatmul.mubr.bf16.gmra.mrb[0].mxu0 %v673
      %v983 = vpop.f32.mrb[0].mxu0
      %v984 = vadd.f32 0.0, %v983
      %v985 = vpop.f32.mrb[0].mxu0
      %v986 = vpop.f32.mrb[0].mxu0
      %v987 = vadd.f32 0.0, %v986
      %v988 = vpop.f32.mrb[0].mxu0
      %989 = vmatprep.mubr.bf16.mxu0 0
      %990 = vmatmul.mubr.bf16.gmra.mrb[0].mxu0 %v676
      %v991 = vpop.f32.mrb[0].mxu0
      %v992 = vadd.f32 0.0, %v991
      %v993 = vpop.f32.mrb[0].mxu0
      %v994 = vpop.f32.mrb[0].mxu0
      %v995 = vadd.f32 0.0, %v994
      %v996 = vpop.f32.mrb[0].mxu0
      %997 = vmatprep.mubr.bf16.mxu0 0
      %998 = vmatmul.mubr.bf16.gmra.mrb[0].mxu0 %v679
      %v999 = vpop.f32.mrb[0].mxu0
      %v1000 = vadd.f32 0.0, %v999
      %v1001 = vpop.f32.mrb[0].mxu0
      %v1002 = vpop.f32.mrb[0].mxu0
      %v1003 = vadd.f32 0.0, %v1002
      %v1004 = vpop.f32.mrb[0].mxu0
      %1005 = vmatprep.mubr.bf16.mxu0 0
      %1006 = vmatmul.mubr.bf16.gmra.mrb[0].mxu0 %v682
      %v1007 = vpop.f32.mrb[0].mxu0
      %v1008 = vadd.f32 0.0, %v1007
      %v1009 = vpop.f32.mrb[0].mxu0
      %v1010 = vpop.f32.mrb[0].mxu0
      %v1011 = vadd.f32 0.0, %v1010
      %v1012 = vpop.f32.mrb[0].mxu0
      %1013 = vmatprep.mubr.bf16.mxu0 0
      %1014 = vmatmul.mubr.bf16.gmra.mrb[0].mxu0 %v685
      %v1015 = vpop.f32.mrb[0].mxu0
      %v1016 = vadd.f32 0.0, %v1015
      %v1017 = vpop.f32.mrb[0].mxu0
      %v1018 = vpop.f32.mrb[0].mxu0
      %v1019 = vadd.f32 0.0, %v1018
      %v1020 = vpop.f32.mrb[0].mxu0
      %1021 = vmatprep.mubr.bf16.mxu0 0
      %1022 = vmatmul.mubr.bf16.gmra.mrb[0].mxu0 %v688
      %v1023 = vpop.f32.mrb[0].mxu0
      %v1024 = vadd.f32 0.0, %v1023
      %v1025 = vpop.f32.mrb[0].mxu0
      %v1026 = vpop.f32.mrb[0].mxu0
      %v1027 = vadd.f32 0.0, %v1026
      %v1028 = vpop.f32.mrb[0].mxu0
      %1029 = vmatprep.mubr.bf16.mxu0 0
      %1030 = vmatmul.mubr.bf16.gmra.mrb[0].mxu0 %v691
      %v1031 = vpop.f32.mrb[0].mxu0
      %v1032 = vadd.f32 0.0, %v1031
      %v1033 = vpop.f32.mrb[0].mxu0
      %v1034 = vpop.f32.mrb[0].mxu0
      %v1035 = vadd.f32 0.0, %v1034
      %v1036 = vpop.f32.mrb[0].mxu0
      %1037 = vmatprep.mubr.bf16.mxu0 0
      %1038 = vmatmul.mubr.bf16.gmra.mrb[0].mxu0 %v694
      %v1039 = vpop.f32.mrb[0].mxu0
      %v1040 = vadd.f32 0.0, %v1039
      %v1041 = vpop.f32.mrb[0].mxu0
      %v1042 = vpop.f32.mrb[0].mxu0
      %v1043 = vadd.f32 0.0, %v1042
      %v1044 = vpop.f32.mrb[0].mxu0
      %1045 = vmatprep.mubr.bf16.mxu0 0
      %1046 = vmatmul.mubr.bf16.gmra.mrb[0].mxu0 %v697
      %v1047 = vpop.f32.mrb[0].mxu0
      %v1048 = vadd.f32 0.0, %v1047
      %v1049 = vpop.f32.mrb[0].mxu0
      %v1050 = vpop.f32.mrb[0].mxu0
      %v1051 = vadd.f32 0.0, %v1050
      %v1052 = vpop.f32.mrb[0].mxu0
      %1053 = vmatprep.mubr.bf16.mxu0 0
      %1054 = vmatmul.mubr.bf16.gmra.mrb[0].mxu0 %v700
      %v1055 = vpop.f32.mrb[0].mxu0
      %v1056 = vadd.f32 0.0, %v1055
      %v1057 = vpop.f32.mrb[0].mxu0
      %v1058 = vpop.f32.mrb[0].mxu0
      %v1059 = vadd.f32 0.0, %v1058
      %v1060 = vpop.f32.mrb[0].mxu0
      %1061 = vmatprep.mubr.bf16.mxu0 0
      %1062 = vmatmul.mubr.bf16.gmra.mrb[0].mxu0 %v703
      %v1063 = vpop.f32.mrb[0].mxu0
      %v1064 = vadd.f32 0.0, %v1063
      %v1065 = vpop.f32.mrb[0].mxu0
      %v1066 = vpop.f32.mrb[0].mxu0
      %v1067 = vadd.f32 0.0, %v1066
      %v1068 = vpop.f32.mrb[0].mxu0
      %1069 = vmatprep.mubr.bf16.mxu0 0
      %1070 = vmatmul.mubr.bf16.gmra.mrb[0].mxu0 %v706
      %v1071 = vpop.f32.mrb[0].mxu0
      %v1072 = vadd.f32 0.0, %v1071
      %v1073 = vpop.f32.mrb[0].mxu0
      %v1074 = vpop.f32.mrb[0].mxu0
      %v1075 = vadd.f32 0.0, %v1074
      %v1076 = vpop.f32.mrb[0].mxu0
      %1077 = vmatprep.mubr.bf16.mxu0 0
      %1078 = vmatmul.mubr.bf16.gmra.mrb[0].mxu0 %v709
      %v1079 = vpop.f32.mrb[0].mxu0
      %v1080 = vadd.f32 0.0, %v1079
      %v1081 = vpop.f32.mrb[0].mxu0
      %v1082 = vpop.f32.mrb[0].mxu0
      %v1083 = vadd.f32 0.0, %v1082
      %v1084 = vpop.f32.mrb[0].mxu0
      %1085 = vmatprep.mubr.bf16.mxu0 0
      %1086 = vmatmul.mubr.bf16.gmra.mrb[0].mxu0 %v712
      %v1087 = vpop.f32.mrb[0].mxu0
      %v1088 = vadd.f32 0.0, %v1087
      %v1089 = vpop.f32.mrb[0].mxu0
      %v1090 = vpop.f32.mrb[0].mxu0
      %v1091 = vadd.f32 0.0, %v1090
      %v1092 = vpop.f32.mrb[0].mxu0
      %1093 = vmatprep.mubr.bf16.mxu0 0
      %1094 = vmatmul.mubr.bf16.gmra.mrb[0].mxu0 %v715
      %v1095 = vpop.f32.mrb[0].mxu0
      %v1096 = vadd.f32 0.0, %v1095
      %v1097 = vpop.f32.mrb[0].mxu0
      %v1098 = vpop.f32.mrb[0].mxu0
      %v1099 = vadd.f32 0.0, %v1098
      %v1100 = vpop.f32.mrb[0].mxu0
      %1101 = vmatprep.mubr.bf16.mxu0 0
      %1102 = vmatmul.mubr.bf16.gmra.mrb[0].mxu0 %v718
      %v1103 = vpop.f32.mrb[0].mxu0
      %v1104 = vadd.f32 0.0, %v1103
      %v1105 = vpop.f32.mrb[0].mxu0
      %v1106 = vpop.f32.mrb[0].mxu0
      %v1107 = vadd.f32 0.0, %v1106
      %v1108 = vpop.f32.mrb[0].mxu0
      %1109 = vmatprep.mubr.bf16.mxu0 0
      %1110 = vmatmul.mubr.bf16.gmra.mrb[0].mxu0 %v721
      %v1111 = vpop.f32.mrb[0].mxu0
      %v1112 = vadd.f32 0.0, %v1111
      %v1113 = vpop.f32.mrb[0].mxu0
      %v1114 = vpop.f32.mrb[0].mxu0
      %v1115 = vadd.f32 0.0, %v1114
      %v1116 = vpop.f32.mrb[0].mxu0
      %1117 = vmatprep.mubr.bf16.mxu0 0
      %1118 = vmatmul.mubr.bf16.gmra.mrb[0].mxu0 %v724
      %v1119 = vpop.f32.mrb[0].mxu0
      %v1120 = vadd.f32 0.0, %v1119
      %v1121 = vpop.f32.mrb[0].mxu0
      %v1122 = vpop.f32.mrb[0].mxu0
      %v1123 = vadd.f32 0.0, %v1122
      %v1124 = vpop.f32.mrb[0].mxu0
      %1125 = vmatprep.mubr.bf16.mxu0 0
      %1126 = vmatmul.mubr.bf16.gmra.mrb[0].mxu0 %v727
      %v1127 = vpop.f32.mrb[0].mxu0
      %v1128 = vadd.f32 0.0, %v1127
      %v1129 = vpop.f32.mrb[0].mxu0
      %v1130 = vpop.f32.mrb[0].mxu0
      %v1131 = vadd.f32 0.0, %v1130
      %v1132 = vpop.f32.mrb[0].mxu0
      %1133 = vmatprep.mubr.bf16.mxu0 0
      %1134 = vmatmul.mubr.bf16.gmra.mrb[0].mxu0 %v730
      %v1135 = vpop.f32.mrb[0].mxu0
      %v1136 = vadd.f32 0.0, %v1135
      %v1137 = vpop.f32.mrb[0].mxu0
      %v1138 = vpop.f32.mrb[0].mxu0
      %v1139 = vadd.f32 0.0, %v1138
      %v1140 = vpop.f32.mrb[0].mxu0
      %1141 = vmatprep.mubr.bf16.mxu0 0
      %1142 = vmatmul.mubr.bf16.gmra.mrb[0].mxu0 %v733
      %v1143 = vpop.f32.mrb[0].mxu0
      %v1144 = vadd.f32 0.0, %v1143
      %v1145 = vpop.f32.mrb[0].mxu0
      %v1146 = vpop.f32.mrb[0].mxu0
      %v1147 = vadd.f32 0.0, %v1146
      %v1148 = vpop.f32.mrb[0].mxu0
      %1149 = vmatprep.mubr.bf16.mxu0 0
      %1150 = vmatmul.mubr.bf16.gmra.mrb[0].mxu0 %v736
      %v1151 = vpop.f32.mrb[0].mxu0
      %v1152 = vadd.f32 0.0, %v1151
      %v1153 = vpop.f32.mrb[0].mxu0
      %v1154 = vpop.f32.mrb[0].mxu0
      %v1155 = vadd.f32 0.0, %v1154
      %v1156 = vpop.f32.mrb[0].mxu0
      %1157 = vmatprep.mubr.bf16.mxu0 0
      %1158 = vmatmul.mubr.bf16.gmra.mrb[0].mxu0 %v739
      %v1159 = vpop.f32.mrb[0].mxu0
      %v1160 = vadd.f32 0.0, %v1159
      %v1161 = vpop.f32.mrb[0].mxu0
      %v1162 = vpop.f32.mrb[0].mxu0
      %v1163 = vadd.f32 0.0, %v1162
      %v1164 = vpop.f32.mrb[0].mxu0
      %1165 = vmatprep.mubr.bf16.mxu0 0
      %1166 = vmatmul.mubr.bf16.gmra.mrb[0].mxu0 %v742
      %v1167 = vpop.f32.mrb[0].mxu0
      %v1168 = vadd.f32 0.0, %v1167
      %v1169 = vpop.f32.mrb[0].mxu0
      %v1170 = vpop.f32.mrb[0].mxu0
      %v1171 = vadd.f32 0.0, %v1170
      %v1172 = vpop.f32.mrb[0].mxu0
      %1173 = vmatprep.mubr.bf16.mxu0 0
      %1174 = vmatmul.mubr.bf16.gmra.mrb[0].mxu0 %v745
      %v1175 = vpop.f32.mrb[0].mxu0
      %v1176 = vadd.f32 0.0, %v1175
      %v1177 = vpop.f32.mrb[0].mxu0
      %v1178 = vpop.f32.mrb[0].mxu0
      %v1179 = vadd.f32 0.0, %v1178
      %v1180 = vpop.f32.mrb[0].mxu0
      %1181 = vmatprep.mubr.bf16.mxu0 0
      %1182 = vmatmul.mubr.bf16.gmra.mrb[0].mxu0 %v748
      %v1183 = vpop.f32.mrb[0].mxu0
      %v1184 = vadd.f32 0.0, %v1183
      %v1185 = vpop.f32.mrb[0].mxu0
      %v1186 = vpop.f32.mrb[0].mxu0
      %v1187 = vadd.f32 0.0, %v1186
      %v1188 = vpop.f32.mrb[0].mxu0
      %1189 = vmatprep.mubr.bf16.mxu0 0
      %1190 = vmatmul.mubr.bf16.gmra.mrb[0].mxu0 %v751
      %v1191 = vpop.f32.mrb[0].mxu0
      %v1192 = vadd.f32 0.0, %v1191
      %v1193 = vpop.f32.mrb[0].mxu0
      %v1194 = vpop.f32.mrb[0].mxu0
      %v1195 = vadd.f32 0.0, %v1194
      %v1196 = vpop.f32.mrb[0].mxu0
      %1197 = vmatprep.mubr.bf16.mxu0 0
      %1198 = vmatmul.mubr.bf16.gmra.mrb[0].mxu0 %v754
      %v1199 = vpop.f32.mrb[0].mxu0
      %v1200 = vadd.f32 0.0, %v1199
      %v1201 = vpop.f32.mrb[0].mxu0
      %v1202 = vpop.f32.mrb[0].mxu0
      %v1203 = vadd.f32 0.0, %v1202
      %v1204 = vpop.f32.mrb[0].mxu0
      %1205 = vmatprep.mubr.bf16.mxu0 0
      %1206 = vmatmul.mubr.bf16.gmra.mrb[0].mxu0 %v757
      %v1207 = vpop.f32.mrb[0].mxu0
      %v1208 = vadd.f32 0.0, %v1207
      %v1209 = vpop.f32.mrb[0].mxu0
      %v1210 = vpop.f32.mrb[0].mxu0
      %v1211 = vadd.f32 0.0, %v1210
      %v1212 = vpop.f32.mrb[0].mxu0
      %1213 = vmatprep.mubr.bf16.mxu0 0
      %1214 = vmatmul.mubr.bf16.gmra.mrb[0].mxu0 %v760
      %v1215 = vpop.f32.mrb[0].mxu0
      %v1216 = vadd.f32 0.0, %v1215
      %v1217 = vpop.f32.mrb[0].mxu0
      %v1218 = vpop.f32.mrb[0].mxu0
      %v1219 = vadd.f32 0.0, %v1218
      %v1220 = vpop.f32.mrb[0].mxu0
      %1221 = vmatprep.mubr.bf16.mxu0 0
      %1222 = vmatmul.mubr.bf16.gmra.mrb[0].mxu0 %v763
      %v1223 = vpop.f32.mrb[0].mxu0
      %v1224 = vadd.f32 0.0, %v1223
      %v1225 = vpop.f32.mrb[0].mxu0
      %v1226 = vpop.f32.mrb[0].mxu0
      %v1227 = vadd.f32 0.0, %v1226
      %v1228 = vpop.f32.mrb[0].mxu0
      %1229 = vmatprep.mubr.bf16.mxu0 0
      %1230 = vmatmul.mubr.bf16.gmra.mrb[0].mxu0 %v766
      %v1231 = vpop.f32.mrb[0].mxu0
      %v1232 = vadd.f32 0.0, %v1231
      %v1233 = vpop.f32.mrb[0].mxu0
      %v1234 = vpop.f32.mrb[0].mxu0
      %v1235 = vadd.f32 0.0, %v1234
      %v1236 = vpop.f32.mrb[0].mxu0
      %1237 = vmatprep.mubr.bf16.mxu0 0
      %1238 = vmatmul.mubr.bf16.gmra.mrb[0].mxu0 %v769
      %v1239 = vpop.f32.mrb[0].mxu0
      %v1240 = vadd.f32 0.0, %v1239
      %v1241 = vpop.f32.mrb[0].mxu0
      %v1242 = vpop.f32.mrb[0].mxu0
      %v1243 = vadd.f32 0.0, %v1242
      %v1244 = vpop.f32.mrb[0].mxu0
      %1245 = vmatprep.mubr.bf16.mxu0 0
      %1246 = vmatmul.mubr.bf16.gmra.mrb[0].mxu0 %v772
      %v1247 = vpop.f32.mrb[0].mxu0
      %v1248 = vadd.f32 0.0, %v1247
      %v1249 = vpop.f32.mrb[0].mxu0
      %v1250 = vpop.f32.mrb[0].mxu0
      %v1251 = vadd.f32 0.0, %v1250
      %v1252 = vpop.f32.mrb[0].mxu0
      %1253 = vmatprep.mubr.bf16.mxu0 0
      %1254 = vmatmul.mubr.bf16.gmra.mrb[0].mxu0 %v775
      %v1255 = vpop.f32.mrb[0].mxu0
      %v1256 = vadd.f32 0.0, %v1255
      %v1257 = vpop.f32.mrb[0].mxu0
      %v1258 = vpop.f32.mrb[0].mxu0
      %v1259 = vadd.f32 0.0, %v1258
      %v1260 = vpop.f32.mrb[0].mxu0
      %1261 = vmatprep.mubr.bf16.mxu0 0
      %1262 = vmatmul.mubr.bf16.gmra.mrb[0].mxu0 %v778
      %v1263 = vpop.f32.mrb[0].mxu0
      %v1264 = vadd.f32 0.0, %v1263
      %v1265 = vpop.f32.mrb[0].mxu0
      %v1266 = vpop.f32.mrb[0].mxu0
      %v1267 = vadd.f32 0.0, %v1266
      %v1268 = vpop.f32.mrb[0].mxu0
      %1269 = vmatprep.mubr.bf16.mxu0 0
      %1270 = vmatmul.mubr.bf16.gmra.mrb[0].mxu0 %v781
      %v1271 = vpop.f32.mrb[0].mxu0
      %v1272 = vadd.f32 0.0, %v1271
      %v1273 = vpop.f32.mrb[0].mxu0
      %v1274 = vpop.f32.mrb[0].mxu0
      %v1275 = vadd.f32 0.0, %v1274
      %v1276 = vpop.f32.mrb[0].mxu0
      %1277 = vmatprep.mubr.bf16.mxu0 0
      %1278 = vmatmul.mubr.bf16.gmra.mrb[0].mxu0 %v784
      %v1279 = vpop.f32.mrb[0].mxu0
      %v1280 = vadd.f32 0.0, %v1279
      %v1281 = vpop.f32.mrb[0].mxu0
      %v1282 = vpop.f32.mrb[0].mxu0
      %v1283 = vadd.f32 0.0, %v1282
      %v1284 = vpop.f32.mrb[0].mxu0
      %1285 = vmatprep.mubr.bf16.mxu0 0
      %1286 = vmatmul.mubr.bf16.gmra.mrb[0].mxu0 %v787
      %v1287 = vpop.f32.mrb[0].mxu0
      %v1288 = vadd.f32 0.0, %v1287
      %v1289 = vpop.f32.mrb[0].mxu0
      %v1290 = vpop.f32.mrb[0].mxu0
      %v1291 = vadd.f32 0.0, %v1290
      %v1292 = vpop.f32.mrb[0].mxu0
      %1293 = vmatprep.mubr.bf16.mxu0 0
      %1294 = vmatmul.mubr.bf16.gmra.mrb[0].mxu0 %v790
      %v1295 = vpop.f32.mrb[0].mxu0
      %v1296 = vadd.f32 0.0, %v1295
      %v1297 = vpop.f32.mrb[0].mxu0
      %v1298 = vpop.f32.mrb[0].mxu0
      %v1299 = vadd.f32 0.0, %v1298
      %v1300 = vpop.f32.mrb[0].mxu0
      %1301 = vmatprep.mubr.bf16.mxu0 0
      %1302 = vmatmul.mubr.bf16.gmra.mrb[0].mxu0 %v793
      %v1303 = vpop.f32.mrb[0].mxu0
      %v1304 = vadd.f32 0.0, %v1303
      %v1305 = vpop.f32.mrb[0].mxu0
      %v1306 = vpop.f32.mrb[0].mxu0
      %v1307 = vadd.f32 0.0, %v1306
      %v1308 = vpop.f32.mrb[0].mxu0
      %1309 = vmatprep.mubr.bf16.mxu0 0
      %1310 = vmatmul.mubr.bf16.gmra.mrb[0].mxu0 %v796
      %v1311 = vpop.f32.mrb[0].mxu0
      %v1312 = vadd.f32 0.0, %v1311
      %v1313 = vpop.f32.mrb[0].mxu0
      %v1314 = vpop.f32.mrb[0].mxu0
      %v1315 = vadd.f32 0.0, %v1314
      %v1316 = vpop.f32.mrb[0].mxu0
      %1317 = vmatprep.mubr.bf16.mxu0 0
      %1318 = vmatmul.mubr.bf16.gmra.mrb[0].mxu0 %v799
      %v1319 = vpop.f32.mrb[0].mxu0
      %v1320 = vadd.f32 0.0, %v1319
      %v1321 = vpop.f32.mrb[0].mxu0
      %v1322 = vpop.f32.mrb[0].mxu0
      %v1323 = vadd.f32 0.0, %v1322
      %v1324 = vpop.f32.mrb[0].mxu0
      %1325 = vmatprep.mubr.bf16.mxu0 0
      %1326 = vmatmul.mubr.bf16.gmra.mrb[0].mxu0 %v802
      %v1327 = vpop.f32.mrb[0].mxu0
      %v1328 = vadd.f32 0.0, %v1327
      %v1329 = vpop.f32.mrb[0].mxu0
      %v1330 = vpop.f32.mrb[0].mxu0
      %v1331 = vadd.f32 0.0, %v1330
      %v1332 = vpop.f32.mrb[0].mxu0
      %1333 = vmatprep.mubr.bf16.mxu0 0
      %1334 = vmatmul.mubr.bf16.gmra.mrb[0].mxu0 %v805
      %v1335 = vpop.f32.mrb[0].mxu0
      %v1336 = vadd.f32 0.0, %v1335
      %v1337 = vpop.f32.mrb[0].mxu0
      %v1338 = vpop.f32.mrb[0].mxu0
      %v1339 = vadd.f32 0.0, %v1338
      %v1340 = vpop.f32.mrb[0].mxu0
      %1341 = vmatprep.mubr.bf16.mxu0 0
      %1342 = vmatmul.mubr.bf16.gmra.mrb[0].mxu0 %v808
      %v1343 = vpop.f32.mrb[0].mxu0
      %v1344 = vadd.f32 0.0, %v1343
      %v1345 = vpop.f32.mrb[0].mxu0
      %v1346 = vpop.f32.mrb[0].mxu0
      %v1347 = vadd.f32 0.0, %v1346
      %v1348 = vpop.f32.mrb[0].mxu0
      %1349 = vmatprep.mubr.bf16.mxu0 0
      %1350 = vmatmul.mubr.bf16.gmra.mrb[0].mxu0 %v811
      %v1351 = vpop.f32.mrb[0].mxu0
      %v1352 = vadd.f32 0.0, %v1351
      %v1353 = vpop.f32.mrb[0].mxu0
      %v1354 = vpop.f32.mrb[0].mxu0
      %v1355 = vadd.f32 0.0, %v1354
      %v1356 = vpop.f32.mrb[0].mxu0
      %1357 = vdwg.mxu0
      %vm1358 = vcmp.ge.f32.partialorder %v848, 0.0
      %vm1359 = vcmp.ge.f32.partialorder %v851, 0.0
      %vm1360 = vcmp.ge.f32.partialorder %v856, 0.0
      %vm1361 = vcmp.ge.f32.partialorder %v859, 0.0
      %vm1362 = vcmp.ge.f32.partialorder %v864, 0.0
      %vm1363 = vcmp.ge.f32.partialorder %v867, 0.0
      %vm1364 = vcmp.ge.f32.partialorder %v872, 0.0
      %vm1365 = vcmp.ge.f32.partialorder %v875, 0.0
      %vm1366 = vcmp.ge.f32.partialorder %v880, 0.0
      %vm1367 = vcmp.ge.f32.partialorder %v883, 0.0
      %vm1368 = vcmp.ge.f32.partialorder %v888, 0.0
      %vm1369 = vcmp.ge.f32.partialorder %v891, 0.0
      %vm1370 = vcmp.ge.f32.partialorder %v896, 0.0
      %vm1371 = vcmp.ge.f32.partialorder %v899, 0.0
      %vm1372 = vcmp.ge.f32.partialorder %v904, 0.0
      %vm1373 = vcmp.ge.f32.partialorder %v907, 0.0
      %vm1374 = vcmp.ge.f32.partialorder %v912, 0.0
      %vm1375 = vcmp.ge.f32.partialorder %v915, 0.0
      %vm1376 = vcmp.ge.f32.partialorder %v920, 0.0
      %vm1377 = vcmp.ge.f32.partialorder %v923, 0.0
      %vm1378 = vcmp.ge.f32.partialorder %v928, 0.0
      %vm1379 = vcmp.ge.f32.partialorder %v931, 0.0
      %vm1380 = vcmp.ge.f32.partialorder %v936, 0.0
      %vm1381 = vcmp.ge.f32.partialorder %v939, 0.0
      %vm1382 = vcmp.ge.f32.partialorder %v944, 0.0
      %vm1383 = vcmp.ge.f32.partialorder %v947, 0.0
      %vm1384 = vcmp.ge.f32.partialorder %v952, 0.0
      %vm1385 = vcmp.ge.f32.partialorder %v955, 0.0
      %vm1386 = vcmp.ge.f32.partialorder %v960, 0.0
      %vm1387 = vcmp.ge.f32.partialorder %v963, 0.0
      %vm1388 = vcmp.ge.f32.partialorder %v968, 0.0
      %vm1389 = vcmp.ge.f32.partialorder %v971, 0.0
      %vm1390 = vcmp.ge.f32.partialorder %v976, 0.0
      %vm1391 = vcmp.ge.f32.partialorder %v979, 0.0
      %vm1392 = vcmp.ge.f32.partialorder %v984, 0.0
      %vm1393 = vcmp.ge.f32.partialorder %v987, 0.0
      %vm1394 = vcmp.ge.f32.partialorder %v992, 0.0
      %vm1395 = vcmp.ge.f32.partialorder %v995, 0.0
      %vm1396 = vcmp.ge.f32.partialorder %v1000, 0.0
      %vm1397 = vcmp.ge.f32.partialorder %v1003, 0.0
      %vm1398 = vcmp.ge.f32.partialorder %v1008, 0.0
      %vm1399 = vcmp.ge.f32.partialorder %v1011, 0.0
      %vm1400 = vcmp.ge.f32.partialorder %v1016, 0.0
      %vm1401 = vcmp.ge.f32.partialorder %v1019, 0.0
      %vm1402 = vcmp.ge.f32.partialorder %v1024, 0.0
      %vm1403 = vcmp.ge.f32.partialorder %v1027, 0.0
      %vm1404 = vcmp.ge.f32.partialorder %v1032, 0.0
      %vm1405 = vcmp.ge.f32.partialorder %v1035, 0.0
      %vm1406 = vcmp.ge.f32.partialorder %v1040, 0.0
      %vm1407 = vcmp.ge.f32.partialorder %v1043, 0.0
      %vm1408 = vcmp.ge.f32.partialorder %v1048, 0.0
      %vm1409 = vcmp.ge.f32.partialorder %v1051, 0.0
      %vm1410 = vcmp.ge.f32.partialorder %v1056, 0.0
      %vm1411 = vcmp.ge.f32.partialorder %v1059, 0.0
      %vm1412 = vcmp.ge.f32.partialorder %v1064, 0.0
      %vm1413 = vcmp.ge.f32.partialorder %v1067, 0.0
      %vm1414 = vcmp.ge.f32.partialorder %v1072, 0.0
      %vm1415 = vcmp.ge.f32.partialorder %v1075, 0.0
      %vm1416 = vcmp.ge.f32.partialorder %v1080, 0.0
      %vm1417 = vcmp.ge.f32.partialorder %v1083, 0.0
      %vm1418 = vcmp.ge.f32.partialorder %v1088, 0.0
      %vm1419 = vcmp.ge.f32.partialorder %v1091, 0.0
      %vm1420 = vcmp.ge.f32.partialorder %v1096, 0.0
      %vm1421 = vcmp.ge.f32.partialorder %v1099, 0.0
      %vm1422 = vcmp.ge.f32.partialorder %v1104, 0.0
      %vm1423 = vcmp.ge.f32.partialorder %v1107, 0.0
      %vm1424 = vcmp.ge.f32.partialorder %v1112, 0.0
      %vm1425 = vcmp.ge.f32.partialorder %v1115, 0.0
      %vm1426 = vcmp.ge.f32.partialorder %v1120, 0.0
      %vm1427 = vcmp.ge.f32.partialorder %v1123, 0.0
      %vm1428 = vcmp.ge.f32.partialorder %v1128, 0.0
      %vm1429 = vcmp.ge.f32.partialorder %v1131, 0.0
      %vm1430 = vcmp.ge.f32.partialorder %v1136, 0.0
      %vm1431 = vcmp.ge.f32.partialorder %v1139, 0.0
      %vm1432 = vcmp.ge.f32.partialorder %v1144, 0.0
      %vm1433 = vcmp.ge.f32.partialorder %v1147, 0.0
      %vm1434 = vcmp.ge.f32.partialorder %v1152, 0.0
      %vm1435 = vcmp.ge.f32.partialorder %v1155, 0.0
      %vm1436 = vcmp.ge.f32.partialorder %v1160, 0.0
      %vm1437 = vcmp.ge.f32.partialorder %v1163, 0.0
      %vm1438 = vcmp.ge.f32.partialorder %v1168, 0.0
      %vm1439 = vcmp.ge.f32.partialorder %v1171, 0.0
      %vm1440 = vcmp.ge.f32.partialorder %v1176, 0.0
      %vm1441 = vcmp.ge.f32.partialorder %v1179, 0.0
      %vm1442 = vcmp.ge.f32.partialorder %v1184, 0.0
      %vm1443 = vcmp.ge.f32.partialorder %v1187, 0.0
      %vm1444 = vcmp.ge.f32.partialorder %v1192, 0.0
      %vm1445 = vcmp.ge.f32.partialorder %v1195, 0.0
      %vm1446 = vcmp.ge.f32.partialorder %v1200, 0.0
      %vm1447 = vcmp.ge.f32.partialorder %v1203, 0.0
      %vm1448 = vcmp.ge.f32.partialorder %v1208, 0.0
      %vm1449 = vcmp.ge.f32.partialorder %v1211, 0.0
      %vm1450 = vcmp.ge.f32.partialorder %v1216, 0.0
      %vm1451 = vcmp.ge.f32.partialorder %v1219, 0.0
      %vm1452 = vcmp.ge.f32.partialorder %v1224, 0.0
      %vm1453 = vcmp.ge.f32.partialorder %v1227, 0.0
      %vm1454 = vcmp.ge.f32.partialorder %v1232, 0.0
      %vm1455 = vcmp.ge.f32.partialorder %v1235, 0.0
      %vm1456 = vcmp.ge.f32.partialorder %v1240, 0.0
      %vm1457 = vcmp.ge.f32.partialorder %v1243, 0.0
      %vm1458 = vcmp.ge.f32.partialorder %v1248, 0.0
      %vm1459 = vcmp.ge.f32.partialorder %v1251, 0.0
      %vm1460 = vcmp.ge.f32.partialorder %v1256, 0.0
      %vm1461 = vcmp.ge.f32.partialorder %v1259, 0.0
      %vm1462 = vcmp.ge.f32.partialorder %v1264, 0.0
      %vm1463 = vcmp.ge.f32.partialorder %v1267, 0.0
      %vm1464 = vcmp.ge.f32.partialorder %v1272, 0.0
      %vm1465 = vcmp.ge.f32.partialorder %v1275, 0.0
      %vm1466 = vcmp.ge.f32.partialorder %v1280, 0.0
      %vm1467 = vcmp.ge.f32.partialorder %v1283, 0.0
      %vm1468 = vcmp.ge.f32.partialorder %v1288, 0.0
      %vm1469 = vcmp.ge.f32.partialorder %v1291, 0.0
      %vm1470 = vcmp.ge.f32.partialorder %v1296, 0.0
      %vm1471 = vcmp.ge.f32.partialorder %v1299, 0.0
      %vm1472 = vcmp.ge.f32.partialorder %v1304, 0.0
      %vm1473 = vcmp.ge.f32.partialorder %v1307, 0.0
      %vm1474 = vcmp.ge.f32.partialorder %v1312, 0.0
      %vm1475 = vcmp.ge.f32.partialorder %v1315, 0.0
      %vm1476 = vcmp.ge.f32.partialorder %v1320, 0.0
      %vm1477 = vcmp.ge.f32.partialorder %v1323, 0.0
      %vm1478 = vcmp.ge.f32.partialorder %v1328, 0.0
      %vm1479 = vcmp.ge.f32.partialorder %v1331, 0.0
      %vm1480 = vcmp.ge.f32.partialorder %v1336, 0.0
      %vm1481 = vcmp.ge.f32.partialorder %v1339, 0.0
      %vm1482 = vcmp.ge.f32.partialorder %v1344, 0.0
      %vm1483 = vcmp.ge.f32.partialorder %v1347, 0.0
      %vm1484 = vcmp.ge.f32.partialorder %v1352, 0.0
      %vm1485 = vcmp.ge.f32.partialorder %v1355, 0.0
      %v1486 = vmul.f32 %v848, 0.2
      %v1487 = vmul.f32 %v851, 0.2
      %v1488 = vmul.f32 %v856, 0.2
      %v1489 = vmul.f32 %v859, 0.2
      %v1490 = vmul.f32 %v864, 0.2
      %v1491 = vmul.f32 %v867, 0.2
      %v1492 = vmul.f32 %v872, 0.2
      %v1493 = vmul.f32 %v875, 0.2
      %v1494 = vmul.f32 %v880, 0.2
      %v1495 = vmul.f32 %v883, 0.2
      %v1496 = vmul.f32 %v888, 0.2
      %v1497 = vmul.f32 %v891, 0.2
      %v1498 = vmul.f32 %v896, 0.2
      %v1499 = vmul.f32 %v899, 0.2
      %v1500 = vmul.f32 %v904, 0.2
      %v1501 = vmul.f32 %v907, 0.2
      %v1502 = vmul.f32 %v912, 0.2
      %v1503 = vmul.f32 %v915, 0.2
      %v1504 = vmul.f32 %v920, 0.2
      %v1505 = vmul.f32 %v923, 0.2
      %v1506 = vmul.f32 %v928, 0.2
      %v1507 = vmul.f32 %v931, 0.2
      %v1508 = vmul.f32 %v936, 0.2
      %v1509 = vmul.f32 %v939, 0.2
      %v1510 = vmul.f32 %v944, 0.2
      %v1511 = vmul.f32 %v947, 0.2
      %v1512 = vmul.f32 %v952, 0.2
      %v1513 = vmul.f32 %v955, 0.2
      %v1514 = vmul.f32 %v960, 0.2
      %v1515 = vmul.f32 %v963, 0.2
      %v1516 = vmul.f32 %v968, 0.2
      %v1517 = vmul.f32 %v971, 0.2
      %v1518 = vmul.f32 %v976, 0.2
      %v1519 = vmul.f32 %v979, 0.2
      %v1520 = vmul.f32 %v984, 0.2
      %v1521 = vmul.f32 %v987, 0.2
      %v1522 = vmul.f32 %v992, 0.2
      %v1523 = vmul.f32 %v995, 0.2
      %v1524 = vmul.f32 %v1000, 0.2
      %v1525 = vmul.f32 %v1003, 0.2
      %v1526 = vmul.f32 %v1008, 0.2
      %v1527 = vmul.f32 %v1011, 0.2
      %v1528 = vmul.f32 %v1016, 0.2
      %v1529 = vmul.f32 %v1019, 0.2
      %v1530 = vmul.f32 %v1024, 0.2
      %v1531 = vmul.f32 %v1027, 0.2
      %v1532 = vmul.f32 %v1032, 0.2
      %v1533 = vmul.f32 %v1035, 0.2
      %v1534 = vmul.f32 %v1040, 0.2
      %v1535 = vmul.f32 %v1043, 0.2
      %v1536 = vmul.f32 %v1048, 0.2
      %v1537 = vmul.f32 %v1051, 0.2
      %v1538 = vmul.f32 %v1056, 0.2
      %v1539 = vmul.f32 %v1059, 0.2
      %v1540 = vmul.f32 %v1064, 0.2
      %v1541 = vmul.f32 %v1067, 0.2
      %v1542 = vmul.f32 %v1072, 0.2
      %v1543 = vmul.f32 %v1075, 0.2
      %v1544 = vmul.f32 %v1080, 0.2
      %v1545 = vmul.f32 %v1083, 0.2
      %v1546 = vmul.f32 %v1088, 0.2
      %v1547 = vmul.f32 %v1091, 0.2
      %v1548 = vmul.f32 %v1096, 0.2
      %v1549 = vmul.f32 %v1099, 0.2
      %v1550 = vmul.f32 %v1104, 0.2
      %v1551 = vmul.f32 %v1107, 0.2
      %v1552 = vmul.f32 %v1112, 0.2
      %v1553 = vmul.f32 %v1115, 0.2
      %v1554 = vmul.f32 %v1120, 0.2
      %v1555 = vmul.f32 %v1123, 0.2
      %v1556 = vmul.f32 %v1128, 0.2
      %v1557 = vmul.f32 %v1131, 0.2
      %v1558 = vmul.f32 %v1136, 0.2
      %v1559 = vmul.f32 %v1139, 0.2
      %v1560 = vmul.f32 %v1144, 0.2
      %v1561 = vmul.f32 %v1147, 0.2
      %v1562 = vmul.f32 %v1152, 0.2
      %v1563 = vmul.f32 %v1155, 0.2
      %v1564 = vmul.f32 %v1160, 0.2
      %v1565 = vmul.f32 %v1163, 0.2
      %v1566 = vmul.f32 %v1168, 0.2
      %v1567 = vmul.f32 %v1171, 0.2
      %v1568 = vmul.f32 %v1176, 0.2
      %v1569 = vmul.f32 %v1179, 0.2
      %v1570 = vmul.f32 %v1184, 0.2
      %v1571 = vmul.f32 %v1187, 0.2
      %v1572 = vmul.f32 %v1192, 0.2
      %v1573 = vmul.f32 %v1195, 0.2
      %v1574 = vmul.f32 %v1200, 0.2
      %v1575 = vmul.f32 %v1203, 0.2
      %v1576 = vmul.f32 %v1208, 0.2
      %v1577 = vmul.f32 %v1211, 0.2
      %v1578 = vmul.f32 %v1216, 0.2
      %v1579 = vmul.f32 %v1219, 0.2
      %v1580 = vmul.f32 %v1224, 0.2
      %v1581 = vmul.f32 %v1227, 0.2
      %v1582 = vmul.f32 %v1232, 0.2
      %v1583 = vmul.f32 %v1235, 0.2
      %v1584 = vmul.f32 %v1240, 0.2
      %v1585 = vmul.f32 %v1243, 0.2
      %v1586 = vmul.f32 %v1248, 0.2
      %v1587 = vmul.f32 %v1251, 0.2
      %v1588 = vmul.f32 %v1256, 0.2
      %v1589 = vmul.f32 %v1259, 0.2
      %v1590 = vmul.f32 %v1264, 0.2
      %v1591 = vmul.f32 %v1267, 0.2
      %v1592 = vmul.f32 %v1272, 0.2
      %v1593 = vmul.f32 %v1275, 0.2
      %v1594 = vmul.f32 %v1280, 0.2
      %v1595 = vmul.f32 %v1283, 0.2
      %v1596 = vmul.f32 %v1288, 0.2
      %v1597 = vmul.f32 %v1291, 0.2
      %v1598 = vmul.f32 %v1296, 0.2
      %v1599 = vmul.f32 %v1299, 0.2
      %v1600 = vmul.f32 %v1304, 0.2
      %v1601 = vmul.f32 %v1307, 0.2
      %v1602 = vmul.f32 %v1312, 0.2
      %v1603 = vmul.f32 %v1315, 0.2
      %v1604 = vmul.f32 %v1320, 0.2
      %v1605 = vmul.f32 %v1323, 0.2
      %v1606 = vmul.f32 %v1328, 0.2
      %v1607 = vmul.f32 %v1331, 0.2
      %v1608 = vmul.f32 %v1336, 0.2
      %v1609 = vmul.f32 %v1339, 0.2
      %v1610 = vmul.f32 %v1344, 0.2
      %v1611 = vmul.f32 %v1347, 0.2
      %v1612 = vmul.f32 %v1352, 0.2
      %v1613 = vmul.f32 %v1355, 0.2
      %v1614 = vsel %vm1358, %v848, %v1486
      %v1615 = vsel %vm1359, %v851, %v1487
      %v1616 = vsel %vm1360, %v856, %v1488
      %v1617 = vsel %vm1361, %v859, %v1489
      %v1618 = vsel %vm1362, %v864, %v1490
      %v1619 = vsel %vm1363, %v867, %v1491
      %v1620 = vsel %vm1364, %v872, %v1492
      %v1621 = vsel %vm1365, %v875, %v1493
      %v1622 = vsel %vm1366, %v880, %v1494
      %v1623 = vsel %vm1367, %v883, %v1495
      %v1624 = vsel %vm1368, %v888, %v1496
      %v1625 = vsel %vm1369, %v891, %v1497
      %v1626 = vsel %vm1370, %v896, %v1498
      %v1627 = vsel %vm1371, %v899, %v1499
      %v1628 = vsel %vm1372, %v904, %v1500
      %v1629 = vsel %vm1373, %v907, %v1501
      %v1630 = vsel %vm1374, %v912, %v1502
      %v1631 = vsel %vm1375, %v915, %v1503
      %v1632 = vsel %vm1376, %v920, %v1504
      %v1633 = vsel %vm1377, %v923, %v1505
      %v1634 = vsel %vm1378, %v928, %v1506
      %v1635 = vsel %vm1379, %v931, %v1507
      %v1636 = vsel %vm1380, %v936, %v1508
      %v1637 = vsel %vm1381, %v939, %v1509
      %v1638 = vsel %vm1382, %v944, %v1510
      %v1639 = vsel %vm1383, %v947, %v1511
      %v1640 = vsel %vm1384, %v952, %v1512
      %v1641 = vsel %vm1385, %v955, %v1513
      %v1642 = vsel %vm1386, %v960, %v1514
      %v1643 = vsel %vm1387, %v963, %v1515
      %v1644 = vsel %vm1388, %v968, %v1516
      %v1645 = vsel %vm1389, %v971, %v1517
      %v1646 = vsel %vm1390, %v976, %v1518
      %v1647 = vsel %vm1391, %v979, %v1519
      %v1648 = vsel %vm1392, %v984, %v1520
      %v1649 = vsel %vm1393, %v987, %v1521
      %v1650 = vsel %vm1394, %v992, %v1522
      %v1651 = vsel %vm1395, %v995, %v1523
      %v1652 = vsel %vm1396, %v1000, %v1524
      %v1653 = vsel %vm1397, %v1003, %v1525
      %v1654 = vsel %vm1398, %v1008, %v1526
      %v1655 = vsel %vm1399, %v1011, %v1527
      %v1656 = vsel %vm1400, %v1016, %v1528
      %v1657 = vsel %vm1401, %v1019, %v1529
      %v1658 = vsel %vm1402, %v1024, %v1530
      %v1659 = vsel %vm1403, %v1027, %v1531
      %v1660 = vsel %vm1404, %v1032, %v1532
      %v1661 = vsel %vm1405, %v1035, %v1533
      %v1662 = vsel %vm1406, %v1040, %v1534
      %v1663 = vsel %vm1407, %v1043, %v1535
      %v1664 = vsel %vm1408, %v1048, %v1536
      %v1665 = vsel %vm1409, %v1051, %v1537
      %v1666 = vsel %vm1410, %v1056, %v1538
      %v1667 = vsel %vm1411, %v1059, %v1539
      %v1668 = vsel %vm1412, %v1064, %v1540
      %v1669 = vsel %vm1413, %v1067, %v1541
      %v1670 = vsel %vm1414, %v1072, %v1542
      %v1671 = vsel %vm1415, %v1075, %v1543
      %v1672 = vsel %vm1416, %v1080, %v1544
      %v1673 = vsel %vm1417, %v1083, %v1545
      %v1674 = vsel %vm1418, %v1088, %v1546
      %v1675 = vsel %vm1419, %v1091, %v1547
      %v1676 = vsel %vm1420, %v1096, %v1548
      %v1677 = vsel %vm1421, %v1099, %v1549
      %v1678 = vsel %vm1422, %v1104, %v1550
      %v1679 = vsel %vm1423, %v1107, %v1551
      %v1680 = vsel %vm1424, %v1112, %v1552
      %v1681 = vsel %vm1425, %v1115, %v1553
      %v1682 = vsel %vm1426, %v1120, %v1554
      %v1683 = vsel %vm1427, %v1123, %v1555
      %v1684 = vsel %vm1428, %v1128, %v1556
      %v1685 = vsel %vm1429, %v1131, %v1557
      %v1686 = vsel %vm1430, %v1136, %v1558
      %v1687 = vsel %vm1431, %v1139, %v1559
      %v1688 = vsel %vm1432, %v1144, %v1560
      %v1689 = vsel %vm1433, %v1147, %v1561
      %v1690 = vsel %vm1434, %v1152, %v1562
      %v1691 = vsel %vm1435, %v1155, %v1563
      %v1692 = vsel %vm1436, %v1160, %v1564
      %v1693 = vsel %vm1437, %v1163, %v1565
      %v1694 = vsel %vm1438, %v1168, %v1566
      %v1695 = vsel %vm1439, %v1171, %v1567
      %v1696 = vsel %vm1440, %v1176, %v1568
      %v1697 = vsel %vm1441, %v1179, %v1569
      %v1698 = vsel %vm1442, %v1184, %v1570
      %v1699 = vsel %vm1443, %v1187, %v1571
      %v1700 = vsel %vm1444, %v1192, %v1572
      %v1701 = vsel %vm1445, %v1195, %v1573
      %v1702 = vsel %vm1446, %v1200, %v1574
      %v1703 = vsel %vm1447, %v1203, %v1575
      %v1704 = vsel %vm1448, %v1208, %v1576
      %v1705 = vsel %vm1449, %v1211, %v1577
      %v1706 = vsel %vm1450, %v1216, %v1578
      %v1707 = vsel %vm1451, %v1219, %v1579
      %v1708 = vsel %vm1452, %v1224, %v1580
      %v1709 = vsel %vm1453, %v1227, %v1581
      %v1710 = vsel %vm1454, %v1232, %v1582
      %v1711 = vsel %vm1455, %v1235, %v1583
      %v1712 = vsel %vm1456, %v1240, %v1584
      %v1713 = vsel %vm1457, %v1243, %v1585
      %v1714 = vsel %vm1458, %v1248, %v1586
      %v1715 = vsel %vm1459, %v1251, %v1587
      %v1716 = vsel %vm1460, %v1256, %v1588
      %v1717 = vsel %vm1461, %v1259, %v1589
      %v1718 = vsel %vm1462, %v1264, %v1590
      %v1719 = vsel %vm1463, %v1267, %v1591
      %v1720 = vsel %vm1464, %v1272, %v1592
      %v1721 = vsel %vm1465, %v1275, %v1593
      %v1722 = vsel %vm1466, %v1280, %v1594
      %v1723 = vsel %vm1467, %v1283, %v1595
      %v1724 = vsel %vm1468, %v1288, %v1596
      %v1725 = vsel %vm1469, %v1291, %v1597
      %v1726 = vsel %vm1470, %v1296, %v1598
      %v1727 = vsel %vm1471, %v1299, %v1599
      %v1728 = vsel %vm1472, %v1304, %v1600
      %v1729 = vsel %vm1473, %v1307, %v1601
      %v1730 = vsel %vm1474, %v1312, %v1602
      %v1731 = vsel %vm1475, %v1315, %v1603
      %v1732 = vsel %vm1476, %v1320, %v1604
      %v1733 = vsel %vm1477, %v1323, %v1605
      %v1734 = vsel %vm1478, %v1328, %v1606
      %v1735 = vsel %vm1479, %v1331, %v1607
      %v1736 = vsel %vm1480, %v1336, %v1608
      %v1737 = vsel %vm1481, %v1339, %v1609
      %v1738 = vsel %vm1482, %v1344, %v1610
      %v1739 = vsel %vm1483, %v1347, %v1611
      %v1740 = vsel %vm1484, %v1352, %v1612
      %v1741 = vsel %vm1485, %v1355, %v1613
      %v1742 = vpack.c.bf16 %v1615, %v1614
      %v1743 = vpack.c.bf16 %v1617, %v1616
      %v1744 = vpack.c.bf16 %v1619, %v1618
      %v1745 = vpack.c.bf16 %v1621, %v1620
      %v1746 = vpack.c.bf16 %v1623, %v1622
      %v1747 = vpack.c.bf16 %v1625, %v1624
      %v1748 = vpack.c.bf16 %v1627, %v1626
      %v1749 = vpack.c.bf16 %v1629, %v1628
      %v1750 = vpack.c.bf16 %v1631, %v1630
      %v1751 = vpack.c.bf16 %v1633, %v1632
      %v1752 = vpack.c.bf16 %v1635, %v1634
      %v1753 = vpack.c.bf16 %v1637, %v1636
      %v1754 = vpack.c.bf16 %v1639, %v1638
      %v1755 = vpack.c.bf16 %v1641, %v1640
      %v1756 = vpack.c.bf16 %v1643, %v1642
      %v1757 = vpack.c.bf16 %v1645, %v1644
      %v1758 = vpack.c.bf16 %v1647, %v1646
      %v1759 = vpack.c.bf16 %v1649, %v1648
      %v1760 = vpack.c.bf16 %v1651, %v1650
      %v1761 = vpack.c.bf16 %v1653, %v1652
      %v1762 = vpack.c.bf16 %v1655, %v1654
      %v1763 = vpack.c.bf16 %v1657, %v1656
      %v1764 = vpack.c.bf16 %v1659, %v1658
      %v1765 = vpack.c.bf16 %v1661, %v1660
      %v1766 = vpack.c.bf16 %v1663, %v1662
      %v1767 = vpack.c.bf16 %v1665, %v1664
      %v1768 = vpack.c.bf16 %v1667, %v1666
      %v1769 = vpack.c.bf16 %v1669, %v1668
      %v1770 = vpack.c.bf16 %v1671, %v1670
      %v1771 = vpack.c.bf16 %v1673, %v1672
      %v1772 = vpack.c.bf16 %v1675, %v1674
      %v1773 = vpack.c.bf16 %v1677, %v1676
      %v1774 = vpack.c.bf16 %v1679, %v1678
      %v1775 = vpack.c.bf16 %v1681, %v1680
      %v1776 = vpack.c.bf16 %v1683, %v1682
      %v1777 = vpack.c.bf16 %v1685, %v1684
      %v1778 = vpack.c.bf16 %v1687, %v1686
      %v1779 = vpack.c.bf16 %v1689, %v1688
      %v1780 = vpack.c.bf16 %v1691, %v1690
      %v1781 = vpack.c.bf16 %v1693, %v1692
      %v1782 = vpack.c.bf16 %v1695, %v1694
      %v1783 = vpack.c.bf16 %v1697, %v1696
      %v1784 = vpack.c.bf16 %v1699, %v1698
      %v1785 = vpack.c.bf16 %v1701, %v1700
      %v1786 = vpack.c.bf16 %v1703, %v1702
      %v1787 = vpack.c.bf16 %v1705, %v1704
      %v1788 = vpack.c.bf16 %v1707, %v1706
      %v1789 = vpack.c.bf16 %v1709, %v1708
      %v1790 = vpack.c.bf16 %v1711, %v1710
      %v1791 = vpack.c.bf16 %v1713, %v1712
      %v1792 = vpack.c.bf16 %v1715, %v1714
      %v1793 = vpack.c.bf16 %v1717, %v1716
      %v1794 = vpack.c.bf16 %v1719, %v1718
      %v1795 = vpack.c.bf16 %v1721, %v1720
      %v1796 = vpack.c.bf16 %v1723, %v1722
      %v1797 = vpack.c.bf16 %v1725, %v1724
      %v1798 = vpack.c.bf16 %v1727, %v1726
      %v1799 = vpack.c.bf16 %v1729, %v1728
      %v1800 = vpack.c.bf16 %v1731, %v1730
      %v1801 = vpack.c.bf16 %v1733, %v1732
      %v1802 = vpack.c.bf16 %v1735, %v1734
      %v1803 = vpack.c.bf16 %v1737, %v1736
      %v1804 = vpack.c.bf16 %v1739, %v1738
      %v1805 = vpack.c.bf16 %v1741, %v1740
      %v1870 = vunpack.c.l.b16 %v1742
      %v1871 = vunpack.c.h.b16 %v1742
      %v1872 = vunpack.c.l.b16 %v1743
      %v1873 = vunpack.c.h.b16 %v1743
      %v1874 = vunpack.c.l.b16 %v1744
      %v1875 = vunpack.c.h.b16 %v1744
      %v1876 = vunpack.c.l.b16 %v1745
      %v1877 = vunpack.c.h.b16 %v1745
      %v1878 = vunpack.c.l.b16 %v1746
      %v1879 = vunpack.c.h.b16 %v1746
      %v1880 = vunpack.c.l.b16 %v1747
      %v1881 = vunpack.c.h.b16 %v1747
      %v1882 = vunpack.c.l.b16 %v1748
      %v1883 = vunpack.c.h.b16 %v1748
      %v1884 = vunpack.c.l.b16 %v1749
      %v1885 = vunpack.c.h.b16 %v1749
      %v1886 = vunpack.c.l.b16 %v1750
      %v1887 = vunpack.c.h.b16 %v1750
      %v1888 = vunpack.c.l.b16 %v1751
      %v1889 = vunpack.c.h.b16 %v1751
      %v1890 = vunpack.c.l.b16 %v1752
      %v1891 = vunpack.c.h.b16 %v1752
      %v1892 = vunpack.c.l.b16 %v1753
      %v1893 = vunpack.c.h.b16 %v1753
      %v1894 = vunpack.c.l.b16 %v1754
      %v1895 = vunpack.c.h.b16 %v1754
      %v1896 = vunpack.c.l.b16 %v1755
      %v1897 = vunpack.c.h.b16 %v1755
      %v1898 = vunpack.c.l.b16 %v1756
      %v1899 = vunpack.c.h.b16 %v1756
      %v1900 = vunpack.c.l.b16 %v1757
      %v1901 = vunpack.c.h.b16 %v1757
      %v1902 = vunpack.c.l.b16 %v1758
      %v1903 = vunpack.c.h.b16 %v1758
      %v1904 = vunpack.c.l.b16 %v1759
      %v1905 = vunpack.c.h.b16 %v1759
      %v1906 = vunpack.c.l.b16 %v1760
      %v1907 = vunpack.c.h.b16 %v1760
      %v1908 = vunpack.c.l.b16 %v1761
      %v1909 = vunpack.c.h.b16 %v1761
      %v1910 = vunpack.c.l.b16 %v1762
      %v1911 = vunpack.c.h.b16 %v1762
      %v1912 = vunpack.c.l.b16 %v1763
      %v1913 = vunpack.c.h.b16 %v1763
      %v1914 = vunpack.c.l.b16 %v1764
      %v1915 = vunpack.c.h.b16 %v1764
      %v1916 = vunpack.c.l.b16 %v1765
      %v1917 = vunpack.c.h.b16 %v1765
      %v1918 = vunpack.c.l.b16 %v1766
      %v1919 = vunpack.c.h.b16 %v1766
      %v1920 = vunpack.c.l.b16 %v1767
      %v1921 = vunpack.c.h.b16 %v1767
      %v1922 = vunpack.c.l.b16 %v1768
      %v1923 = vunpack.c.h.b16 %v1768
      %v1924 = vunpack.c.l.b16 %v1769
      %v1925 = vunpack.c.h.b16 %v1769
      %v1926 = vunpack.c.l.b16 %v1770
      %v1927 = vunpack.c.h.b16 %v1770
      %v1928 = vunpack.c.l.b16 %v1771
      %v1929 = vunpack.c.h.b16 %v1771
      %v1930 = vunpack.c.l.b16 %v1772
      %v1931 = vunpack.c.h.b16 %v1772
      %v1932 = vunpack.c.l.b16 %v1773
      %v1933 = vunpack.c.h.b16 %v1773
      %v1934 = vunpack.c.l.b16 %v1774
      %v1935 = vunpack.c.h.b16 %v1774
      %v1936 = vunpack.c.l.b16 %v1775
      %v1937 = vunpack.c.h.b16 %v1775
      %v1938 = vunpack.c.l.b16 %v1776
      %v1939 = vunpack.c.h.b16 %v1776
      %v1940 = vunpack.c.l.b16 %v1777
      %v1941 = vunpack.c.h.b16 %v1777
      %v1942 = vunpack.c.l.b16 %v1778
      %v1943 = vunpack.c.h.b16 %v1778
      %v1944 = vunpack.c.l.b16 %v1779
      %v1945 = vunpack.c.h.b16 %v1779
      %v1946 = vunpack.c.l.b16 %v1780
      %v1947 = vunpack.c.h.b16 %v1780
      %v1948 = vunpack.c.l.b16 %v1781
      %v1949 = vunpack.c.h.b16 %v1781
      %v1950 = vunpack.c.l.b16 %v1782
      %v1951 = vunpack.c.h.b16 %v1782
      %v1952 = vunpack.c.l.b16 %v1783
      %v1953 = vunpack.c.h.b16 %v1783
      %v1954 = vunpack.c.l.b16 %v1784
      %v1955 = vunpack.c.h.b16 %v1784
      %v1956 = vunpack.c.l.b16 %v1785
      %v1957 = vunpack.c.h.b16 %v1785
      %v1958 = vunpack.c.l.b16 %v1786
      %v1959 = vunpack.c.h.b16 %v1786
      %v1960 = vunpack.c.l.b16 %v1787
      %v1961 = vunpack.c.h.b16 %v1787
      %v1962 = vunpack.c.l.b16 %v1788
      %v1963 = vunpack.c.h.b16 %v1788
      %v1964 = vunpack.c.l.b16 %v1789
      %v1965 = vunpack.c.h.b16 %v1789
      %v1966 = vunpack.c.l.b16 %v1790
      %v1967 = vunpack.c.h.b16 %v1790
      %v1968 = vunpack.c.l.b16 %v1791
      %v1969 = vunpack.c.h.b16 %v1791
      %v1970 = vunpack.c.l.b16 %v1792
      %v1971 = vunpack.c.h.b16 %v1792
      %v1972 = vunpack.c.l.b16 %v1793
      %v1973 = vunpack.c.h.b16 %v1793
      %v1974 = vunpack.c.l.b16 %v1794
      %v1975 = vunpack.c.h.b16 %v1794
      %v1976 = vunpack.c.l.b16 %v1795
      %v1977 = vunpack.c.h.b16 %v1795
      %v1978 = vunpack.c.l.b16 %v1796
      %v1979 = vunpack.c.h.b16 %v1796
      %v1980 = vunpack.c.l.b16 %v1797
      %v1981 = vunpack.c.h.b16 %v1797
      %v1982 = vunpack.c.l.b16 %v1798
      %v1983 = vunpack.c.h.b16 %v1798
      %v1984 = vunpack.c.l.b16 %v1799
      %v1985 = vunpack.c.h.b16 %v1799
      %v1986 = vunpack.c.l.b16 %v1800
      %v1987 = vunpack.c.h.b16 %v1800
      %v1988 = vunpack.c.l.b16 %v1801
      %v1989 = vunpack.c.h.b16 %v1801
      %v1990 = vunpack.c.l.b16 %v1802
      %v1991 = vunpack.c.h.b16 %v1802
      %v1992 = vunpack.c.l.b16 %v1803
      %v1993 = vunpack.c.h.b16 %v1803
      %v1994 = vunpack.c.l.b16 %v1804
      %v1995 = vunpack.c.h.b16 %v1804
      %v1996 = vunpack.c.l.b16 %v1805
      %v1997 = vunpack.c.h.b16 %v1805
      %v1998 = vpack.c.b16 %v1870, %v1870
      %v1999 = vpack.c.b16 %v1871, %v1871
      %v2000 = vpack.c.b16 %v1872, %v1872
      %v2001 = vpack.c.b16 %v1873, %v1873
      %v2002 = vpack.c.b16 %v1874, %v1874
      %v2003 = vpack.c.b16 %v1875, %v1875
      %v2004 = vpack.c.b16 %v1876, %v1876
      %v2005 = vpack.c.b16 %v1877, %v1877
      %v2006 = vpack.c.b16 %v1878, %v1878
      %v2007 = vpack.c.b16 %v1879, %v1879
      %v2008 = vpack.c.b16 %v1880, %v1880
      %v2009 = vpack.c.b16 %v1881, %v1881
      %v2010 = vpack.c.b16 %v1882, %v1882
      %v2011 = vpack.c.b16 %v1883, %v1883
      %v2012 = vpack.c.b16 %v1884, %v1884
      %v2013 = vpack.c.b16 %v1885, %v1885
      %v2014 = vpack.c.b16 %v1886, %v1886
      %v2015 = vpack.c.b16 %v1887, %v1887
      %v2016 = vpack.c.b16 %v1888, %v1888
      %v2017 = vpack.c.b16 %v1889, %v1889
      %v2018 = vpack.c.b16 %v1890, %v1890
      %v2019 = vpack.c.b16 %v1891, %v1891
      %v2020 = vpack.c.b16 %v1892, %v1892
      %v2021 = vpack.c.b16 %v1893, %v1893
      %v2022 = vpack.c.b16 %v1894, %v1894
      %v2023 = vpack.c.b16 %v1895, %v1895
      %v2024 = vpack.c.b16 %v1896, %v1896
      %v2025 = vpack.c.b16 %v1897, %v1897
      %v2026 = vpack.c.b16 %v1898, %v1898
      %v2027 = vpack.c.b16 %v1899, %v1899
      %v2028 = vpack.c.b16 %v1900, %v1900
      %v2029 = vpack.c.b16 %v1901, %v1901
      %v2030 = vpack.c.b16 %v1902, %v1902
      %v2031 = vpack.c.b16 %v1903, %v1903
      %v2032 = vpack.c.b16 %v1904, %v1904
      %v2033 = vpack.c.b16 %v1905, %v1905
      %v2034 = vpack.c.b16 %v1906, %v1906
      %v2035 = vpack.c.b16 %v1907, %v1907
      %v2036 = vpack.c.b16 %v1908, %v1908
      %v2037 = vpack.c.b16 %v1909, %v1909
      %v2038 = vpack.c.b16 %v1910, %v1910
      %v2039 = vpack.c.b16 %v1911, %v1911
      %v2040 = vpack.c.b16 %v1912, %v1912
      %v2041 = vpack.c.b16 %v1913, %v1913
      %v2042 = vpack.c.b16 %v1914, %v1914
      %v2043 = vpack.c.b16 %v1915, %v1915
      %v2044 = vpack.c.b16 %v1916, %v1916
      %v2045 = vpack.c.b16 %v1917, %v1917
      %v2046 = vpack.c.b16 %v1918, %v1918
      %v2047 = vpack.c.b16 %v1919, %v1919
      %v2048 = vpack.c.b16 %v1920, %v1920
      %v2049 = vpack.c.b16 %v1921, %v1921
      %v2050 = vpack.c.b16 %v1922, %v1922
      %v2051 = vpack.c.b16 %v1923, %v1923
      %v2052 = vpack.c.b16 %v1924, %v1924
      %v2053 = vpack.c.b16 %v1925, %v1925
      %v2054 = vpack.c.b16 %v1926, %v1926
      %v2055 = vpack.c.b16 %v1927, %v1927
      %v2056 = vpack.c.b16 %v1928, %v1928
      %v2057 = vpack.c.b16 %v1929, %v1929
      %v2058 = vpack.c.b16 %v1930, %v1930
      %v2059 = vpack.c.b16 %v1931, %v1931
      %v2060 = vpack.c.b16 %v1932, %v1932
      %v2061 = vpack.c.b16 %v1933, %v1933
      %v2062 = vpack.c.b16 %v1934, %v1934
      %v2063 = vpack.c.b16 %v1935, %v1935
      %v2064 = vpack.c.b16 %v1936, %v1936
      %v2065 = vpack.c.b16 %v1937, %v1937
      %v2066 = vpack.c.b16 %v1938, %v1938
      %v2067 = vpack.c.b16 %v1939, %v1939
      %v2068 = vpack.c.b16 %v1940, %v1940
      %v2069 = vpack.c.b16 %v1941, %v1941
      %v2070 = vpack.c.b16 %v1942, %v1942
      %v2071 = vpack.c.b16 %v1943, %v1943
      %v2072 = vpack.c.b16 %v1944, %v1944
      %v2073 = vpack.c.b16 %v1945, %v1945
      %v2074 = vpack.c.b16 %v1946, %v1946
      %v2075 = vpack.c.b16 %v1947, %v1947
      %v2076 = vpack.c.b16 %v1948, %v1948
      %v2077 = vpack.c.b16 %v1949, %v1949
      %v2078 = vpack.c.b16 %v1950, %v1950
      %v2079 = vpack.c.b16 %v1951, %v1951
      %v2080 = vpack.c.b16 %v1952, %v1952
      %v2081 = vpack.c.b16 %v1953, %v1953
      %v2082 = vpack.c.b16 %v1954, %v1954
      %v2083 = vpack.c.b16 %v1955, %v1955
      %v2084 = vpack.c.b16 %v1956, %v1956
      %v2085 = vpack.c.b16 %v1957, %v1957
      %v2086 = vpack.c.b16 %v1958, %v1958
      %v2087 = vpack.c.b16 %v1959, %v1959
      %v2088 = vpack.c.b16 %v1960, %v1960
      %v2089 = vpack.c.b16 %v1961, %v1961
      %v2090 = vpack.c.b16 %v1962, %v1962
      %v2091 = vpack.c.b16 %v1963, %v1963
      %v2092 = vpack.c.b16 %v1964, %v1964
      %v2093 = vpack.c.b16 %v1965, %v1965
      %v2094 = vpack.c.b16 %v1966, %v1966
      %v2095 = vpack.c.b16 %v1967, %v1967
      %v2096 = vpack.c.b16 %v1968, %v1968
      %v2097 = vpack.c.b16 %v1969, %v1969
      %v2098 = vpack.c.b16 %v1970, %v1970
      %v2099 = vpack.c.b16 %v1971, %v1971
      %v2100 = vpack.c.b16 %v1972, %v1972
      %v2101 = vpack.c.b16 %v1973, %v1973
      %v2102 = vpack.c.b16 %v1974, %v1974
      %v2103 = vpack.c.b16 %v1975, %v1975
      %v2104 = vpack.c.b16 %v1976, %v1976
      %v2105 = vpack.c.b16 %v1977, %v1977
      %v2106 = vpack.c.b16 %v1978, %v1978
      %v2107 = vpack.c.b16 %v1979, %v1979
      %v2108 = vpack.c.b16 %v1980, %v1980
      %v2109 = vpack.c.b16 %v1981, %v1981
      %v2110 = vpack.c.b16 %v1982, %v1982
      %v2111 = vpack.c.b16 %v1983, %v1983
      %v2112 = vpack.c.b16 %v1984, %v1984
      %v2113 = vpack.c.b16 %v1985, %v1985
      %v2114 = vpack.c.b16 %v1986, %v1986
      %v2115 = vpack.c.b16 %v1987, %v1987
      %v2116 = vpack.c.b16 %v1988, %v1988
      %v2117 = vpack.c.b16 %v1989, %v1989
      %v2118 = vpack.c.b16 %v1990, %v1990
      %v2119 = vpack.c.b16 %v1991, %v1991
      %v2120 = vpack.c.b16 %v1992, %v1992
      %v2121 = vpack.c.b16 %v1993, %v1993
      %v2122 = vpack.c.b16 %v1994, %v1994
      %v2123 = vpack.c.b16 %v1995, %v1995
      %v2124 = vpack.c.b16 %v1996, %v1996
      %v2125 = vpack.c.b16 %v1997, %v1997
      %vm2254 = vcmask 60416
      %2255 = vst.msk [vmem:[%s145] sm:$0xf] %vm2254, %v1998
      %2256 = vst.msk [vmem:[%s145 + $0x4] sm:$0xf] %vm2254, %v1999
      %2257 = vst.msk [vmem:[%s145 + $0x8] sm:$0xf] %vm2254, %v2000
      %2258 = vst.msk [vmem:[%s145 + $0xc] sm:$0xf] %vm2254, %v2001
      %2259 = vst.msk [vmem:[%s145 + $0x10] sm:$0xf] %vm2254, %v2002
      %2260 = vst.msk [vmem:[%s145 + $0x14] sm:$0xf] %vm2254, %v2003
      %2261 = vst.msk [vmem:[%s145 + $0x18] sm:$0xf] %vm2254, %v2004
      %2262 = vst.msk [vmem:[%s145 + $0x1c] sm:$0xf] %vm2254, %v2005
      %2263 = vst.msk [vmem:[%s145 + $0x20] sm:$0xf] %vm2254, %v2006
      %2264 = vst.msk [vmem:[%s145 + $0x24] sm:$0xf] %vm2254, %v2007
      %2265 = vst.msk [vmem:[%s145 + $0x28] sm:$0xf] %vm2254, %v2008
      %2266 = vst.msk [vmem:[%s145 + $0x2c] sm:$0xf] %vm2254, %v2009
      %2267 = vst.msk [vmem:[%s145 + $0x30] sm:$0xf] %vm2254, %v2010
      %2268 = vst.msk [vmem:[%s145 + $0x34] sm:$0xf] %vm2254, %v2011
      %2269 = vst.msk [vmem:[%s145 + $0x38] sm:$0xf] %vm2254, %v2012
      %2270 = vst.msk [vmem:[%s145 + $0x3c] sm:$0xf] %vm2254, %v2013
      %2271 = vst.msk [vmem:[%s145 + $0x40] sm:$0xf] %vm2254, %v2014
      %2272 = vst.msk [vmem:[%s145 + $0x44] sm:$0xf] %vm2254, %v2015
      %2273 = vst.msk [vmem:[%s145 + $0x48] sm:$0xf] %vm2254, %v2016
      %2274 = vst.msk [vmem:[%s145 + $0x4c] sm:$0xf] %vm2254, %v2017
      %2275 = vst.msk [vmem:[%s145 + $0x50] sm:$0xf] %vm2254, %v2018
      %2276 = vst.msk [vmem:[%s145 + $0x54] sm:$0xf] %vm2254, %v2019
      %2277 = vst.msk [vmem:[%s145 + $0x58] sm:$0xf] %vm2254, %v2020
      %2278 = vst.msk [vmem:[%s145 + $0x5c] sm:$0xf] %vm2254, %v2021
      %2279 = vst.msk [vmem:[%s145 + $0x60] sm:$0xf] %vm2254, %v2022
      %2280 = vst.msk [vmem:[%s145 + $0x64] sm:$0xf] %vm2254, %v2023
      %2281 = vst.msk [vmem:[%s145 + $0x68] sm:$0xf] %vm2254, %v2024
      %2282 = vst.msk [vmem:[%s145 + $0x6c] sm:$0xf] %vm2254, %v2025
      %2283 = vst.msk [vmem:[%s145 + $0x70] sm:$0xf] %vm2254, %v2026
      %2284 = vst.msk [vmem:[%s145 + $0x74] sm:$0xf] %vm2254, %v2027
      %2285 = vst.msk [vmem:[%s145 + $0x78] sm:$0xf] %vm2254, %v2028
      %2286 = vst.msk [vmem:[%s145 + $0x7c] sm:$0xf] %vm2254, %v2029
      %2287 = vst.msk [vmem:[%s145 + $0x80] sm:$0xf] %vm2254, %v2030
      %2288 = vst.msk [vmem:[%s145 + $0x84] sm:$0xf] %vm2254, %v2031
      %2289 = vst.msk [vmem:[%s145 + $0x88] sm:$0xf] %vm2254, %v2032
      %2290 = vst.msk [vmem:[%s145 + $0x8c] sm:$0xf] %vm2254, %v2033
      %2291 = vst.msk [vmem:[%s145 + $0x90] sm:$0xf] %vm2254, %v2034
      %2292 = vst.msk [vmem:[%s145 + $0x94] sm:$0xf] %vm2254, %v2035
      %2293 = vst.msk [vmem:[%s145 + $0x98] sm:$0xf] %vm2254, %v2036
      %2294 = vst.msk [vmem:[%s145 + $0x9c] sm:$0xf] %vm2254, %v2037
      %2295 = vst.msk [vmem:[%s145 + $0xa0] sm:$0xf] %vm2254, %v2038
      %2296 = vst.msk [vmem:[%s145 + $0xa4] sm:$0xf] %vm2254, %v2039
      %2297 = vst.msk [vmem:[%s145 + $0xa8] sm:$0xf] %vm2254, %v2040
      %2298 = vst.msk [vmem:[%s145 + $0xac] sm:$0xf] %vm2254, %v2041
      %2299 = vst.msk [vmem:[%s145 + $0xb0] sm:$0xf] %vm2254, %v2042
      %2300 = vst.msk [vmem:[%s145 + $0xb4] sm:$0xf] %vm2254, %v2043
      %2301 = vst.msk [vmem:[%s145 + $0xb8] sm:$0xf] %vm2254, %v2044
      %2302 = vst.msk [vmem:[%s145 + $0xbc] sm:$0xf] %vm2254, %v2045
      %2303 = vst.msk [vmem:[%s145 + $0xc0] sm:$0xf] %vm2254, %v2046
      %2304 = vst.msk [vmem:[%s145 + $0xc4] sm:$0xf] %vm2254, %v2047
      %2305 = vst.msk [vmem:[%s145 + $0xc8] sm:$0xf] %vm2254, %v2048
      %2306 = vst.msk [vmem:[%s145 + $0xcc] sm:$0xf] %vm2254, %v2049
      %2307 = vst.msk [vmem:[%s145 + $0xd0] sm:$0xf] %vm2254, %v2050
      %2308 = vst.msk [vmem:[%s145 + $0xd4] sm:$0xf] %vm2254, %v2051
      %2309 = vst.msk [vmem:[%s145 + $0xd8] sm:$0xf] %vm2254, %v2052
      %2310 = vst.msk [vmem:[%s145 + $0xdc] sm:$0xf] %vm2254, %v2053
      %2311 = vst.msk [vmem:[%s145 + $0xe0] sm:$0xf] %vm2254, %v2054
      %2312 = vst.msk [vmem:[%s145 + $0xe4] sm:$0xf] %vm2254, %v2055
      %2313 = vst.msk [vmem:[%s145 + $0xe8] sm:$0xf] %vm2254, %v2056
      %2314 = vst.msk [vmem:[%s145 + $0xec] sm:$0xf] %vm2254, %v2057
      %2315 = vst.msk [vmem:[%s145 + $0xf0] sm:$0xf] %vm2254, %v2058
      %2316 = vst.msk [vmem:[%s145 + $0xf4] sm:$0xf] %vm2254, %v2059
      %2317 = vst.msk [vmem:[%s145 + $0xf8] sm:$0xf] %vm2254, %v2060
      %2318 = vst.msk [vmem:[%s145 + $0xfc] sm:$0xf] %vm2254, %v2061
      %2319 = vst.msk [vmem:[%s145 + $0x100] sm:$0xf] %vm2254, %v2062
      %2320 = vst.msk [vmem:[%s145 + $0x104] sm:$0xf] %vm2254, %v2063
      %2321 = vst.msk [vmem:[%s145 + $0x108] sm:$0xf] %vm2254, %v2064
      %2322 = vst.msk [vmem:[%s145 + $0x10c] sm:$0xf] %vm2254, %v2065
      %2323 = vst.msk [vmem:[%s145 + $0x110] sm:$0xf] %vm2254, %v2066
      %2324 = vst.msk [vmem:[%s145 + $0x114] sm:$0xf] %vm2254, %v2067
      %2325 = vst.msk [vmem:[%s145 + $0x118] sm:$0xf] %vm2254, %v2068
      %2326 = vst.msk [vmem:[%s145 + $0x11c] sm:$0xf] %vm2254, %v2069
      %2327 = vst.msk [vmem:[%s145 + $0x120] sm:$0xf] %vm2254, %v2070
      %2328 = vst.msk [vmem:[%s145 + $0x124] sm:$0xf] %vm2254, %v2071
      %2329 = vst.msk [vmem:[%s145 + $0x128] sm:$0xf] %vm2254, %v2072
      %2330 = vst.msk [vmem:[%s145 + $0x12c] sm:$0xf] %vm2254, %v2073
      %2331 = vst.msk [vmem:[%s145 + $0x130] sm:$0xf] %vm2254, %v2074
      %2332 = vst.msk [vmem:[%s145 + $0x134] sm:$0xf] %vm2254, %v2075
      %2333 = vst.msk [vmem:[%s145 + $0x138] sm:$0xf] %vm2254, %v2076
      %2334 = vst.msk [vmem:[%s145 + $0x13c] sm:$0xf] %vm2254, %v2077
      %2335 = vst.msk [vmem:[%s145 + $0x140] sm:$0xf] %vm2254, %v2078
      %2336 = vst.msk [vmem:[%s145 + $0x144] sm:$0xf] %vm2254, %v2079
      %2337 = vst.msk [vmem:[%s145 + $0x148] sm:$0xf] %vm2254, %v2080
      %2338 = vst.msk [vmem:[%s145 + $0x14c] sm:$0xf] %vm2254, %v2081
      %2339 = vst.msk [vmem:[%s145 + $0x150] sm:$0xf] %vm2254, %v2082
      %2340 = vst.msk [vmem:[%s145 + $0x154] sm:$0xf] %vm2254, %v2083
      %2341 = vst.msk [vmem:[%s145 + $0x158] sm:$0xf] %vm2254, %v2084
      %2342 = vst.msk [vmem:[%s145 + $0x15c] sm:$0xf] %vm2254, %v2085
      %2343 = vst.msk [vmem:[%s145 + $0x160] sm:$0xf] %vm2254, %v2086
      %2344 = vst.msk [vmem:[%s145 + $0x164] sm:$0xf] %vm2254, %v2087
      %2345 = vst.msk [vmem:[%s145 + $0x168] sm:$0xf] %vm2254, %v2088
      %2346 = vst.msk [vmem:[%s145 + $0x16c] sm:$0xf] %vm2254, %v2089
      %2347 = vst.msk [vmem:[%s145 + $0x170] sm:$0xf] %vm2254, %v2090
      %2348 = vst.msk [vmem:[%s145 + $0x174] sm:$0xf] %vm2254, %v2091
      %2349 = vst.msk [vmem:[%s145 + $0x178] sm:$0xf] %vm2254, %v2092
      %2350 = vst.msk [vmem:[%s145 + $0x17c] sm:$0xf] %vm2254, %v2093
      %2351 = vst.msk [vmem:[%s145 + $0x180] sm:$0xf] %vm2254, %v2094
      %2352 = vst.msk [vmem:[%s145 + $0x184] sm:$0xf] %vm2254, %v2095
      %2353 = vst.msk [vmem:[%s145 + $0x188] sm:$0xf] %vm2254, %v2096
      %2354 = vst.msk [vmem:[%s145 + $0x18c] sm:$0xf] %vm2254, %v2097
      %2355 = vst.msk [vmem:[%s145 + $0x190] sm:$0xf] %vm2254, %v2098
      %2356 = vst.msk [vmem:[%s145 + $0x194] sm:$0xf] %vm2254, %v2099
      %2357 = vst.msk [vmem:[%s145 + $0x198] sm:$0xf] %vm2254, %v2100
      %2358 = vst.msk [vmem:[%s145 + $0x19c] sm:$0xf] %vm2254, %v2101
      %2359 = vst.msk [vmem:[%s145 + $0x1a0] sm:$0xf] %vm2254, %v2102
      %2360 = vst.msk [vmem:[%s145 + $0x1a4] sm:$0xf] %vm2254, %v2103
      %2361 = vst.msk [vmem:[%s145 + $0x1a8] sm:$0xf] %vm2254, %v2104
      %2362 = vst.msk [vmem:[%s145 + $0x1ac] sm:$0xf] %vm2254, %v2105
      %2363 = vst.msk [vmem:[%s145 + $0x1b0] sm:$0xf] %vm2254, %v2106
      %2364 = vst.msk [vmem:[%s145 + $0x1b4] sm:$0xf] %vm2254, %v2107
      %2365 = vst.msk [vmem:[%s145 + $0x1b8] sm:$0xf] %vm2254, %v2108
      %2366 = vst.msk [vmem:[%s145 + $0x1bc] sm:$0xf] %vm2254, %v2109
      %2367 = vst.msk [vmem:[%s145 + $0x1c0] sm:$0xf] %vm2254, %v2110
      %2368 = vst.msk [vmem:[%s145 + $0x1c4] sm:$0xf] %vm2254, %v2111
      %2369 = vst.msk [vmem:[%s145 + $0x1c8] sm:$0xf] %vm2254, %v2112
      %2370 = vst.msk [vmem:[%s145 + $0x1cc] sm:$0xf] %vm2254, %v2113
      %2371 = vst.msk [vmem:[%s145 + $0x1d0] sm:$0xf] %vm2254, %v2114
      %2372 = vst.msk [vmem:[%s145 + $0x1d4] sm:$0xf] %vm2254, %v2115
      %2373 = vst.msk [vmem:[%s145 + $0x1d8] sm:$0xf] %vm2254, %v2116
      %2374 = vst.msk [vmem:[%s145 + $0x1dc] sm:$0xf] %vm2254, %v2117
      %2375 = vst.msk [vmem:[%s145 + $0x1e0] sm:$0xf] %vm2254, %v2118
      %2376 = vst.msk [vmem:[%s145 + $0x1e4] sm:$0xf] %vm2254, %v2119
      %2377 = vst.msk [vmem:[%s145 + $0x1e8] sm:$0xf] %vm2254, %v2120
      %2378 = vst.msk [vmem:[%s145 + $0x1ec] sm:$0xf] %vm2254, %v2121
      %2379 = vst.msk [vmem:[%s145 + $0x1f0] sm:$0xf] %vm2254, %v2122
      %2380 = vst.msk [vmem:[%s145 + $0x1f4] sm:$0xf] %vm2254, %v2123
      %2381 = vst.msk [vmem:[%s145 + $0x1f8] sm:$0xf] %vm2254, %v2124
      %2382 = vst.msk [vmem:[%s145 + $0x1fc] sm:$0xf] %vm2254, %v2125
      %s2383 = smul.u32 128, %s13
      %p2384 = scmp.lt.s32.totalorder %s2383, 255
      %s2385 = scalar_select %p2384, %s2383, 255
      %s2386 = smul.addr %s2385, 4
      %s2387 = scalar_lea.vmem %s2, %s2386
      // Predicated region
      $region29: #{discriminator_forward.4} parent=27 // pred_check
        %p2388 = pneg %p78
      $region30: #{discriminator_forward.4} parent=27 // pred_check_branch
        %2390 = sbr.rel (%p2388) target = $region32
      $region31: #{discriminator_forward.4} parent=27 // pred_region
        %s2391 = smul.u32 128, %s13
      $region32: #{discriminator_forward.4} parent=27 // pred_fallthru
        _
    $region28: #{discriminator_forward.4} parent=5 // pred_fallthru
      _
    %p2392 = scmp.le.s32.totalorder 2, %s8
    // Predicated region
    $region33: #{discriminator_forward.4} parent=5 // pred_check
      %p2393 = pneg %p2392
    $region34: #{discriminator_forward.4} parent=5 // pred_check_branch
      %2395 = sbr.rel (%p2393) target = $region36
    $region35: #{discriminator_forward.4} parent=5 // pred_region
      %s2396 = ssub.s32 %s8, 2
      // Predicated region
      $region37: #{discriminator_forward.4} parent=35 // pred_check
        %p2397 = pneg %p84
      $region38: #{discriminator_forward.4} parent=35 // pred_check_branch
        %2399 = sbr.rel (%p2397) target = $region40
      $region39: #{discriminator_forward.4} parent=35 // pred_region
        %s2400 = smul.u32 128, %s14
        %p2401 = scmp.lt.s32.totalorder %s2400, 255
        %s2402 = scalar_select %p2401, %s2400, 255
        %s2403 = smul.addr %s2402, 4
        %s2404 = scalar_lea.vmem %s2, %s2403
      $region40: #{discriminator_forward.4} parent=35 // pred_fallthru
        _
    $region36: #{discriminator_forward.4} parent=5 // pred_fallthru
      _
  $region6: #{discriminator_forward.4} parent=0 // loop_footer
    %s12 = sadd.s32 1, %s8
  $region7: #{discriminator_forward.4} parent=0 // loop_footer_branch
    %7 = sbr.rel target = $region3
  $region8: #{discriminator_forward.4} parent=0 // loop_exit
    _

// kernel: discriminator_forward.5
$region0: #{discriminator_forward.5}
  #allocation0 [shape = 'u32[]', space=smem, size = 0x4, offset = 0x4, fixed_abs, tag = 'smem constant byte address 0x4 - core index']
  #allocation1 [shape = 'u32[144,128]{1,0:T(1,128)}', space=vmem, size = 0x12000, scoped, tag = 'internal scratch']
  %s0 = inlined_call_operand.vmem [shape: bf16[512,128], index: 0, kind: input, shape index: {}]
  %s1 = inlined_call_operand.vmem [shape: bf16[128,16], index: 1, kind: input, shape index: {}]
  %s2 = inlined_call_operand.vmem [shape: f32[1,16], index: 2, kind: input, shape index: {}]
  %s3 = inlined_call_operand.vmem [shape: f32[1,16], index: 3, kind: input, shape index: {}]
  %s4 = inlined_call_operand.vmem [shape: bf16[512,16], index: 4, kind: output, shape index: {}]
  %s5 = sld [smem:[#allocation0]]
  $region26: #{discriminator_forward.5} parent=0
    _
  %s7 = ssub.s32 1, %s5
  %s8 = scalar_select 0, %s7, %s5
  // Predicated region
  $region2: #{discriminator_forward.5} parent=0 // pred_check
    _
  $region3: #{discriminator_forward.5} parent=0 // pred_check_branch
    %10 = sbr.rel (0) target = $region5
  $region4: #{discriminator_forward.5} parent=0 // pred_region
    _
  $region5: #{discriminator_forward.5} parent=0 // pred_fallthru
    _
  // Predicated region
  $region6: #{discriminator_forward.5} parent=0 // pred_check
    _
  $region7: #{discriminator_forward.5} parent=0 // pred_check_branch
    %12 = sbr.rel (0) target = $region9
  $region8: #{discriminator_forward.5} parent=0 // pred_region
    _
  $region9: #{discriminator_forward.5} parent=0 // pred_fallthru
    _
  // Predicated region
  $region10: #{discriminator_forward.5} parent=0 // pred_check
    _
  $region11: #{discriminator_forward.5} parent=0 // pred_check_branch
    %14 = sbr.rel (0) target = $region13
  $region12: #{discriminator_forward.5} parent=0 // pred_region
    _
  $region13: #{discriminator_forward.5} parent=0 // pred_fallthru
    _
  // Predicated region
  $region14: #{discriminator_forward.5} parent=0 // pred_check
    _
  $region15: #{discriminator_forward.5} parent=0 // pred_check_branch
    %16 = sbr.rel (0) target = $region17
  $region16: #{discriminator_forward.5} parent=0 // pred_region
    _
  $region17: #{discriminator_forward.5} parent=0 // pred_fallthru
    _
  %v18 = vld [vmem:[%s0] sm:$0xf]
  %v19 = vld [vmem:[%s0 + $0x4] sm:$0xf]
  %v20 = vld [vmem:[%s0 + $0x8] sm:$0xf]
  %v21 = vld [vmem:[%s0 + $0xc] sm:$0xf]
  %v22 = vld [vmem:[%s0 + $0x10] sm:$0xf]
  %v23 = vld [vmem:[%s0 + $0x14] sm:$0xf]
  %v24 = vld [vmem:[%s0 + $0x18] sm:$0xf]
  %v25 = vld [vmem:[%s0 + $0x1c] sm:$0xf]
  %v26 = vld [vmem:[%s0 + $0x20] sm:$0xf]
  %v27 = vld [vmem:[%s0 + $0x24] sm:$0xf]
  %v28 = vld [vmem:[%s0 + $0x28] sm:$0xf]
  %v29 = vld [vmem:[%s0 + $0x2c] sm:$0xf]
  %v30 = vld [vmem:[%s0 + $0x30] sm:$0xf]
  %v31 = vld [vmem:[%s0 + $0x34] sm:$0xf]
  %v32 = vld [vmem:[%s0 + $0x38] sm:$0xf]
  %v33 = vld [vmem:[%s0 + $0x3c] sm:$0xf]
  %v34 = vld [vmem:[%s0 + $0x40] sm:$0xf]
  %v35 = vld [vmem:[%s0 + $0x44] sm:$0xf]
  %v36 = vld [vmem:[%s0 + $0x48] sm:$0xf]
  %v37 = vld [vmem:[%s0 + $0x4c] sm:$0xf]
  %v38 = vld [vmem:[%s0 + $0x50] sm:$0xf]
  %v39 = vld [vmem:[%s0 + $0x54] sm:$0xf]
  %v40 = vld [vmem:[%s0 + $0x58] sm:$0xf]
  %v41 = vld [vmem:[%s0 + $0x5c] sm:$0xf]
  %v42 = vld [vmem:[%s0 + $0x60] sm:$0xf]
  %v43 = vld [vmem:[%s0 + $0x64] sm:$0xf]
  %v44 = vld [vmem:[%s0 + $0x68] sm:$0xf]
  %v45 = vld [vmem:[%s0 + $0x6c] sm:$0xf]
  %v46 = vld [vmem:[%s0 + $0x70] sm:$0xf]
  %v47 = vld [vmem:[%s0 + $0x74] sm:$0xf]
  %v48 = vld [vmem:[%s0 + $0x78] sm:$0xf]
  %v49 = vld [vmem:[%s0 + $0x7c] sm:$0xf]
  %v50 = vld [vmem:[%s0 + $0x80] sm:$0xf]
  %v51 = vld [vmem:[%s0 + $0x84] sm:$0xf]
  %v52 = vld [vmem:[%s0 + $0x88] sm:$0xf]
  %v53 = vld [vmem:[%s0 + $0x8c] sm:$0xf]
  %v54 = vld [vmem:[%s0 + $0x90] sm:$0xf]
  %v55 = vld [vmem:[%s0 + $0x94] sm:$0xf]
  %v56 = vld [vmem:[%s0 + $0x98] sm:$0xf]
  %v57 = vld [vmem:[%s0 + $0x9c] sm:$0xf]
  %v58 = vld [vmem:[%s0 + $0xa0] sm:$0xf]
  %v59 = vld [vmem:[%s0 + $0xa4] sm:$0xf]
  %v60 = vld [vmem:[%s0 + $0xa8] sm:$0xf]
  %v61 = vld [vmem:[%s0 + $0xac] sm:$0xf]
  %v62 = vld [vmem:[%s0 + $0xb0] sm:$0xf]
  %v63 = vld [vmem:[%s0 + $0xb4] sm:$0xf]
  %v64 = vld [vmem:[%s0 + $0xb8] sm:$0xf]
  %v65 = vld [vmem:[%s0 + $0xbc] sm:$0xf]
  %v66 = vld [vmem:[%s0 + $0xc0] sm:$0xf]
  %v67 = vld [vmem:[%s0 + $0xc4] sm:$0xf]
  %v68 = vld [vmem:[%s0 + $0xc8] sm:$0xf]
  %v69 = vld [vmem:[%s0 + $0xcc] sm:$0xf]
  %v70 = vld [vmem:[%s0 + $0xd0] sm:$0xf]
  %v71 = vld [vmem:[%s0 + $0xd4] sm:$0xf]
  %v72 = vld [vmem:[%s0 + $0xd8] sm:$0xf]
  %v73 = vld [vmem:[%s0 + $0xdc] sm:$0xf]
  %v74 = vld [vmem:[%s0 + $0xe0] sm:$0xf]
  %v75 = vld [vmem:[%s0 + $0xe4] sm:$0xf]
  %v76 = vld [vmem:[%s0 + $0xe8] sm:$0xf]
  %v77 = vld [vmem:[%s0 + $0xec] sm:$0xf]
  %v78 = vld [vmem:[%s0 + $0xf0] sm:$0xf]
  %v79 = vld [vmem:[%s0 + $0xf4] sm:$0xf]
  %v80 = vld [vmem:[%s0 + $0xf8] sm:$0xf]
  %v81 = vld [vmem:[%s0 + $0xfc] sm:$0xf]
  %v82 = vld [vmem:[%s1] sm:$0xf]
  %v83 = vld [vmem:[%s1 + $0x4] sm:$0xf]
  %v84 = vld [vmem:[%s1 + $0x8] sm:$0xf]
  %v85 = vld [vmem:[%s1 + $0xc] sm:$0xf]
  %v86 = vld [vmem:[%s1 + $0x10] sm:$0xf]
  %v87 = vld [vmem:[%s1 + $0x14] sm:$0xf]
  %v88 = vld [vmem:[%s1 + $0x18] sm:$0xf]
  %v89 = vld [vmem:[%s1 + $0x1c] sm:$0xf]
  %v90 = vld [vmem:[%s1 + $0x20] sm:$0xf]
  %v91 = vld [vmem:[%s1 + $0x24] sm:$0xf]
  %v92 = vld [vmem:[%s1 + $0x28] sm:$0xf]
  %v93 = vld [vmem:[%s1 + $0x2c] sm:$0xf]
  %v94 = vld [vmem:[%s1 + $0x30] sm:$0xf]
  %v95 = vld [vmem:[%s1 + $0x34] sm:$0xf]
  %v96 = vld [vmem:[%s1 + $0x38] sm:$0xf]
  %v97 = vld [vmem:[%s1 + $0x3c] sm:$0xf]
  %v162 = vunpack.c.l.b16 %v18
  %v163 = vunpack.c.l.b16 %v19
  %v164 = vunpack.c.l.b16 %v20
  %v165 = vunpack.c.l.b16 %v21
  %v166 = vunpack.c.l.b16 %v22
  %v167 = vunpack.c.l.b16 %v23
  %v168 = vunpack.c.l.b16 %v24
  %v169 = vunpack.c.l.b16 %v25
  %v170 = vunpack.c.l.b16 %v26
  %v171 = vunpack.c.l.b16 %v27
  %v172 = vunpack.c.l.b16 %v28
  %v173 = vunpack.c.l.b16 %v29
  %v174 = vunpack.c.l.b16 %v30
  %v175 = vunpack.c.l.b16 %v31
  %v176 = vunpack.c.l.b16 %v32
  %v177 = vunpack.c.l.b16 %v33
  %v178 = vunpack.c.l.b16 %v34
  %v179 = vunpack.c.l.b16 %v35
  %v180 = vunpack.c.l.b16 %v36
  %v181 = vunpack.c.l.b16 %v37
  %v182 = vunpack.c.l.b16 %v38
  %v183 = vunpack.c.l.b16 %v39
  %v184 = vunpack.c.l.b16 %v40
  %v185 = vunpack.c.l.b16 %v41
  %v186 = vunpack.c.l.b16 %v42
  %v187 = vunpack.c.l.b16 %v43
  %v188 = vunpack.c.l.b16 %v44
  %v189 = vunpack.c.l.b16 %v45
  %v190 = vunpack.c.l.b16 %v46
  %v191 = vunpack.c.l.b16 %v47
  %v192 = vunpack.c.l.b16 %v48
  %v193 = vunpack.c.l.b16 %v49
  %v194 = vunpack.c.l.b16 %v50
  %v195 = vunpack.c.l.b16 %v51
  %v196 = vunpack.c.l.b16 %v52
  %v197 = vunpack.c.l.b16 %v53
  %v198 = vunpack.c.l.b16 %v54
  %v199 = vunpack.c.l.b16 %v55
  %v200 = vunpack.c.l.b16 %v56
  %v201 = vunpack.c.l.b16 %v57
  %v202 = vunpack.c.l.b16 %v58
  %v203 = vunpack.c.l.b16 %v59
  %v204 = vunpack.c.l.b16 %v60
  %v205 = vunpack.c.l.b16 %v61
  %v206 = vunpack.c.l.b16 %v62
  %v207 = vunpack.c.l.b16 %v63
  %v208 = vunpack.c.l.b16 %v64
  %v209 = vunpack.c.l.b16 %v65
  %v210 = vunpack.c.l.b16 %v66
  %v211 = vunpack.c.l.b16 %v67
  %v212 = vunpack.c.l.b16 %v68
  %v213 = vunpack.c.l.b16 %v69
  %v214 = vunpack.c.l.b16 %v70
  %v215 = vunpack.c.l.b16 %v71
  %v216 = vunpack.c.l.b16 %v72
  %v217 = vunpack.c.l.b16 %v73
  %v218 = vunpack.c.l.b16 %v74
  %v219 = vunpack.c.l.b16 %v75
  %v220 = vunpack.c.l.b16 %v76
  %v221 = vunpack.c.l.b16 %v77
  %v222 = vunpack.c.l.b16 %v78
  %v223 = vunpack.c.l.b16 %v79
  %v224 = vunpack.c.l.b16 %v80
  %v225 = vunpack.c.l.b16 %v81
  %v226 = vpack.c.b16 %v163, %v162
  %v227 = vpack.c.b16 %v165, %v164
  %v228 = vpack.c.b16 %v167, %v166
  %v229 = vpack.c.b16 %v169, %v168
  %v230 = vpack.c.b16 %v171, %v170
  %v231 = vpack.c.b16 %v173, %v172
  %v232 = vpack.c.b16 %v175, %v174
  %v233 = vpack.c.b16 %v177, %v176
  %v234 = vpack.c.b16 %v179, %v178
  %v235 = vpack.c.b16 %v181, %v180
  %v236 = vpack.c.b16 %v183, %v182
  %v237 = vpack.c.b16 %v185, %v184
  %v238 = vpack.c.b16 %v187, %v186
  %v239 = vpack.c.b16 %v189, %v188
  %v240 = vpack.c.b16 %v191, %v190
  %v241 = vpack.c.b16 %v193, %v192
  %v242 = vpack.c.b16 %v195, %v194
  %v243 = vpack.c.b16 %v197, %v196
  %v244 = vpack.c.b16 %v199, %v198
  %v245 = vpack.c.b16 %v201, %v200
  %v246 = vpack.c.b16 %v203, %v202
  %v247 = vpack.c.b16 %v205, %v204
  %v248 = vpack.c.b16 %v207, %v206
  %v249 = vpack.c.b16 %v209, %v208
  %v250 = vpack.c.b16 %v211, %v210
  %v251 = vpack.c.b16 %v213, %v212
  %v252 = vpack.c.b16 %v215, %v214
  %v253 = vpack.c.b16 %v217, %v216
  %v254 = vpack.c.b16 %v219, %v218
  %v255 = vpack.c.b16 %v221, %v220
  %v256 = vpack.c.b16 %v223, %v222
  %v257 = vpack.c.b16 %v225, %v224
  %v306 = vunpack.c.l.b16 %v82
  %v307 = vunpack.c.l.b16 %v83
  %v308 = vunpack.c.l.b16 %v84
  %v309 = vunpack.c.l.b16 %v85
  %v310 = vunpack.c.l.b16 %v86
  %v311 = vunpack.c.l.b16 %v87
  %v312 = vunpack.c.l.b16 %v88
  %v313 = vunpack.c.l.b16 %v89
  %v314 = vunpack.c.l.b16 %v90
  %v315 = vunpack.c.l.b16 %v91
  %v316 = vunpack.c.l.b16 %v92
  %v317 = vunpack.c.l.b16 %v93
  %v318 = vunpack.c.l.b16 %v94
  %v319 = vunpack.c.l.b16 %v95
  %v320 = vunpack.c.l.b16 %v96
  %v321 = vunpack.c.l.b16 %v97
  %v322 = vpack.c.b16 %v307, %v306
  %v323 = vpack.c.b16 %v309, %v308
  %v324 = vpack.c.b16 %v311, %v310
  %v325 = vpack.c.b16 %v313, %v312
  %v326 = vpack.c.b16 %v315, %v314
  %v327 = vpack.c.b16 %v317, %v316
  %v328 = vpack.c.b16 %v319, %v318
  %v329 = vpack.c.b16 %v321, %v320
  %338 = vmatprep.subr.bf16.mxu0 0
  %339 = vmatpush1.bf16.msra.mxu0 %v322
  %340 = vmatprep.subr.bf16.mxu0 0
  %341 = vmatpush1.bf16.msra.mxu0 %v323
  %342 = vmatprep.subr.bf16.mxu0 0
  %343 = vmatpush1.bf16.msra.mxu0 %v324
  %344 = vmatprep.subr.bf16.mxu0 0
  %345 = vmatpush1.bf16.msra.mxu0 %v325
  %346 = vmatprep.subr.bf16.mxu0 0
  %347 = vmatpush1.bf16.msra.mxu0 %v326
  %348 = vmatprep.subr.bf16.mxu0 0
  %349 = vmatpush1.bf16.msra.mxu0 %v327
  %350 = vmatprep.subr.bf16.mxu0 0
  %351 = vmatpush1.bf16.msra.mxu0 %v328
  %352 = vmatprep.subr.bf16.mxu0 0
  %353 = vmatpush1.bf16.msra.mxu0 %v329
  %354 = vmatprep.subr.bf16.mxu0 0
  %355 = vmatpush1.bf16.msra.mxu0 0
  %356 = vmatprep.subr.bf16.mxu0 0
  %357 = vmatpush1.bf16.msra.mxu0 0
  %358 = vmatprep.subr.bf16.mxu0 0
  %359 = vmatpush1.bf16.msra.mxu0 0
  %360 = vmatprep.subr.bf16.mxu0 0
  %361 = vmatpush1.bf16.msra.mxu0 0
  %362 = vmatprep.subr.bf16.mxu0 0
  %363 = vmatpush1.bf16.msra.mxu0 0
  %364 = vmatprep.subr.bf16.mxu0 0
  %365 = vmatpush1.bf16.msra.mxu0 0
  %366 = vmatprep.subr.bf16.mxu0 0
  %367 = vmatpush1.bf16.msra.mxu0 0
  %368 = vmatprep.subr.bf16.mxu0 0
  %369 = vmatpush1.bf16.msra.mxu0 0
  %370 = vmatprep.mubr.bf16.mxu0 0
  %371 = vmatmul.mubr.bf16.gmra.mrb[0].mxu0 %v226
  %v372 = vpop.f32.mrb[0].mxu0
  %v373 = vadd.f32 0.0, %v372
  %v374 = vpop.f32.mrb[0].mxu0
  %v375 = vpop.f32.mrb[0].mxu0
  %v376 = vadd.f32 0.0, %v375
  %v377 = vpop.f32.mrb[0].mxu0
  %378 = vmatprep.mubr.bf16.mxu0 0
  %379 = vmatmul.mubr.bf16.gmra.mrb[0].mxu0 %v227
  %v380 = vpop.f32.mrb[0].mxu0
  %v381 = vadd.f32 0.0, %v380
  %v382 = vpop.f32.mrb[0].mxu0
  %v383 = vpop.f32.mrb[0].mxu0
  %v384 = vadd.f32 0.0, %v383
  %v385 = vpop.f32.mrb[0].mxu0
  %386 = vmatprep.mubr.bf16.mxu0 0
  %387 = vmatmul.mubr.bf16.gmra.mrb[0].mxu0 %v228
  %v388 = vpop.f32.mrb[0].mxu0
  %v389 = vadd.f32 0.0, %v388
  %v390 = vpop.f32.mrb[0].mxu0
  %v391 = vpop.f32.mrb[0].mxu0
  %v392 = vadd.f32 0.0, %v391
  %v393 = vpop.f32.mrb[0].mxu0
  %394 = vmatprep.mubr.bf16.mxu0 0
  %395 = vmatmul.mubr.bf16.gmra.mrb[0].mxu0 %v229
  %v396 = vpop.f32.mrb[0].mxu0
  %v397 = vadd.f32 0.0, %v396
  %v398 = vpop.f32.mrb[0].mxu0
  %v399 = vpop.f32.mrb[0].mxu0
  %v400 = vadd.f32 0.0, %v399
  %v401 = vpop.f32.mrb[0].mxu0
  %402 = vmatprep.mubr.bf16.mxu0 0
  %403 = vmatmul.mubr.bf16.gmra.mrb[0].mxu0 %v230
  %v404 = vpop.f32.mrb[0].mxu0
  %v405 = vadd.f32 0.0, %v404
  %v406 = vpop.f32.mrb[0].mxu0
  %v407 = vpop.f32.mrb[0].mxu0
  %v408 = vadd.f32 0.0, %v407
  %v409 = vpop.f32.mrb[0].mxu0
  %410 = vmatprep.mubr.bf16.mxu0 0
  %411 = vmatmul.mubr.bf16.gmra.mrb[0].mxu0 %v231
  %v412 = vpop.f32.mrb[0].mxu0
  %v413 = vadd.f32 0.0, %v412
  %v414 = vpop.f32.mrb[0].mxu0
  %v415 = vpop.f32.mrb[0].mxu0
  %v416 = vadd.f32 0.0, %v415
  %v417 = vpop.f32.mrb[0].mxu0
  %418 = vmatprep.mubr.bf16.mxu0 0
  %419 = vmatmul.mubr.bf16.gmra.mrb[0].mxu0 %v232
  %v420 = vpop.f32.mrb[0].mxu0
  %v421 = vadd.f32 0.0, %v420
  %v422 = vpop.f32.mrb[0].mxu0
  %v423 = vpop.f32.mrb[0].mxu0
  %v424 = vadd.f32 0.0, %v423
  %v425 = vpop.f32.mrb[0].mxu0
  %426 = vmatprep.mubr.bf16.mxu0 0
  %427 = vmatmul.mubr.bf16.gmra.mrb[0].mxu0 %v233
  %v428 = vpop.f32.mrb[0].mxu0
  %v429 = vadd.f32 0.0, %v428
  %v430 = vpop.f32.mrb[0].mxu0
  %v431 = vpop.f32.mrb[0].mxu0
  %v432 = vadd.f32 0.0, %v431
  %v433 = vpop.f32.mrb[0].mxu0
  %434 = vmatprep.mubr.bf16.mxu0 0
  %435 = vmatmul.mubr.bf16.gmra.mrb[0].mxu0 %v234
  %v436 = vpop.f32.mrb[0].mxu0
  %v437 = vadd.f32 0.0, %v436
  %v438 = vpop.f32.mrb[0].mxu0
  %v439 = vpop.f32.mrb[0].mxu0
  %v440 = vadd.f32 0.0, %v439
  %v441 = vpop.f32.mrb[0].mxu0
  %442 = vmatprep.mubr.bf16.mxu0 0
  %443 = vmatmul.mubr.bf16.gmra.mrb[0].mxu0 %v235
  %v444 = vpop.f32.mrb[0].mxu0
  %v445 = vadd.f32 0.0, %v444
  %v446 = vpop.f32.mrb[0].mxu0
  %v447 = vpop.f32.mrb[0].mxu0
  %v448 = vadd.f32 0.0, %v447
  %v449 = vpop.f32.mrb[0].mxu0
  %450 = vmatprep.mubr.bf16.mxu0 0
  %451 = vmatmul.mubr.bf16.gmra.mrb[0].mxu0 %v236
  %v452 = vpop.f32.mrb[0].mxu0
  %v453 = vadd.f32 0.0, %v452
  %v454 = vpop.f32.mrb[0].mxu0
  %v455 = vpop.f32.mrb[0].mxu0
  %v456 = vadd.f32 0.0, %v455
  %v457 = vpop.f32.mrb[0].mxu0
  %458 = vmatprep.mubr.bf16.mxu0 0
  %459 = vmatmul.mubr.bf16.gmra.mrb[0].mxu0 %v237
  %v460 = vpop.f32.mrb[0].mxu0
  %v461 = vadd.f32 0.0, %v460
  %v462 = vpop.f32.mrb[0].mxu0
  %v463 = vpop.f32.mrb[0].mxu0
  %v464 = vadd.f32 0.0, %v463
  %v465 = vpop.f32.mrb[0].mxu0
  %466 = vmatprep.mubr.bf16.mxu0 0
  %467 = vmatmul.mubr.bf16.gmra.mrb[0].mxu0 %v238
  %v468 = vpop.f32.mrb[0].mxu0
  %v469 = vadd.f32 0.0, %v468
  %v470 = vpop.f32.mrb[0].mxu0
  %v471 = vpop.f32.mrb[0].mxu0
  %v472 = vadd.f32 0.0, %v471
  %v473 = vpop.f32.mrb[0].mxu0
  %474 = vmatprep.mubr.bf16.mxu0 0
  %475 = vmatmul.mubr.bf16.gmra.mrb[0].mxu0 %v239
  %v476 = vpop.f32.mrb[0].mxu0
  %v477 = vadd.f32 0.0, %v476
  %v478 = vpop.f32.mrb[0].mxu0
  %v479 = vpop.f32.mrb[0].mxu0
  %v480 = vadd.f32 0.0, %v479
  %v481 = vpop.f32.mrb[0].mxu0
  %482 = vmatprep.mubr.bf16.mxu0 0
  %483 = vmatmul.mubr.bf16.gmra.mrb[0].mxu0 %v240
  %v484 = vpop.f32.mrb[0].mxu0
  %v485 = vadd.f32 0.0, %v484
  %v486 = vpop.f32.mrb[0].mxu0
  %v487 = vpop.f32.mrb[0].mxu0
  %v488 = vadd.f32 0.0, %v487
  %v489 = vpop.f32.mrb[0].mxu0
  %490 = vmatprep.mubr.bf16.mxu0 0
  %491 = vmatmul.mubr.bf16.gmra.mrb[0].mxu0 %v241
  %v492 = vpop.f32.mrb[0].mxu0
  %v493 = vadd.f32 0.0, %v492
  %v494 = vpop.f32.mrb[0].mxu0
  %v495 = vpop.f32.mrb[0].mxu0
  %v496 = vadd.f32 0.0, %v495
  %v497 = vpop.f32.mrb[0].mxu0
  %498 = vmatprep.mubr.bf16.mxu0 0
  %499 = vmatmul.mubr.bf16.gmra.mrb[0].mxu0 %v242
  %v500 = vpop.f32.mrb[0].mxu0
  %v501 = vadd.f32 0.0, %v500
  %v502 = vpop.f32.mrb[0].mxu0
  %v503 = vpop.f32.mrb[0].mxu0
  %v504 = vadd.f32 0.0, %v503
  %v505 = vpop.f32.mrb[0].mxu0
  %506 = vmatprep.mubr.bf16.mxu0 0
  %507 = vmatmul.mubr.bf16.gmra.mrb[0].mxu0 %v243
  %v508 = vpop.f32.mrb[0].mxu0
  %v509 = vadd.f32 0.0, %v508
  %v510 = vpop.f32.mrb[0].mxu0
  %v511 = vpop.f32.mrb[0].mxu0
  %v512 = vadd.f32 0.0, %v511
  %v513 = vpop.f32.mrb[0].mxu0
  %514 = vmatprep.mubr.bf16.mxu0 0
  %515 = vmatmul.mubr.bf16.gmra.mrb[0].mxu0 %v244
  %v516 = vpop.f32.mrb[0].mxu0
  %v517 = vadd.f32 0.0, %v516
  %v518 = vpop.f32.mrb[0].mxu0
  %v519 = vpop.f32.mrb[0].mxu0
  %v520 = vadd.f32 0.0, %v519
  %v521 = vpop.f32.mrb[0].mxu0
  %522 = vmatprep.mubr.bf16.mxu0 0
  %523 = vmatmul.mubr.bf16.gmra.mrb[0].mxu0 %v245
  %v524 = vpop.f32.mrb[0].mxu0
  %v525 = vadd.f32 0.0, %v524
  %v526 = vpop.f32.mrb[0].mxu0
  %v527 = vpop.f32.mrb[0].mxu0
  %v528 = vadd.f32 0.0, %v527
  %v529 = vpop.f32.mrb[0].mxu0
  %530 = vmatprep.mubr.bf16.mxu0 0
  %531 = vmatmul.mubr.bf16.gmra.mrb[0].mxu0 %v246
  %v532 = vpop.f32.mrb[0].mxu0
  %v533 = vadd.f32 0.0, %v532
  %v534 = vpop.f32.mrb[0].mxu0
  %v535 = vpop.f32.mrb[0].mxu0
  %v536 = vadd.f32 0.0, %v535
  %v537 = vpop.f32.mrb[0].mxu0
  %538 = vmatprep.mubr.bf16.mxu0 0
  %539 = vmatmul.mubr.bf16.gmra.mrb[0].mxu0 %v247
  %v540 = vpop.f32.mrb[0].mxu0
  %v541 = vadd.f32 0.0, %v540
  %v542 = vpop.f32.mrb[0].mxu0
  %v543 = vpop.f32.mrb[0].mxu0
  %v544 = vadd.f32 0.0, %v543
  %v545 = vpop.f32.mrb[0].mxu0
  %546 = vmatprep.mubr.bf16.mxu0 0
  %547 = vmatmul.mubr.bf16.gmra.mrb[0].mxu0 %v248
  %v548 = vpop.f32.mrb[0].mxu0
  %v549 = vadd.f32 0.0, %v548
  %v550 = vpop.f32.mrb[0].mxu0
  %v551 = vpop.f32.mrb[0].mxu0
  %v552 = vadd.f32 0.0, %v551
  %v553 = vpop.f32.mrb[0].mxu0
  %554 = vmatprep.mubr.bf16.mxu0 0
  %555 = vmatmul.mubr.bf16.gmra.mrb[0].mxu0 %v249
  %v556 = vpop.f32.mrb[0].mxu0
  %v557 = vadd.f32 0.0, %v556
  %v558 = vpop.f32.mrb[0].mxu0
  %v559 = vpop.f32.mrb[0].mxu0
  %v560 = vadd.f32 0.0, %v559
  %v561 = vpop.f32.mrb[0].mxu0
  %562 = vmatprep.mubr.bf16.mxu0 0
  %563 = vmatmul.mubr.bf16.gmra.mrb[0].mxu0 %v250
  %v564 = vpop.f32.mrb[0].mxu0
  %v565 = vadd.f32 0.0, %v564
  %v566 = vpop.f32.mrb[0].mxu0
  %v567 = vpop.f32.mrb[0].mxu0
  %v568 = vadd.f32 0.0, %v567
  %v569 = vpop.f32.mrb[0].mxu0
  %570 = vmatprep.mubr.bf16.mxu0 0
  %571 = vmatmul.mubr.bf16.gmra.mrb[0].mxu0 %v251
  %v572 = vpop.f32.mrb[0].mxu0
  %v573 = vadd.f32 0.0, %v572
  %v574 = vpop.f32.mrb[0].mxu0
  %v575 = vpop.f32.mrb[0].mxu0
  %v576 = vadd.f32 0.0, %v575
  %v577 = vpop.f32.mrb[0].mxu0
  %578 = vmatprep.mubr.bf16.mxu0 0
  %579 = vmatmul.mubr.bf16.gmra.mrb[0].mxu0 %v252
  %v580 = vpop.f32.mrb[0].mxu0
  %v581 = vadd.f32 0.0, %v580
  %v582 = vpop.f32.mrb[0].mxu0
  %v583 = vpop.f32.mrb[0].mxu0
  %v584 = vadd.f32 0.0, %v583
  %v585 = vpop.f32.mrb[0].mxu0
  %586 = vmatprep.mubr.bf16.mxu0 0
  %587 = vmatmul.mubr.bf16.gmra.mrb[0].mxu0 %v253
  %v588 = vpop.f32.mrb[0].mxu0
  %v589 = vadd.f32 0.0, %v588
  %v590 = vpop.f32.mrb[0].mxu0
  %v591 = vpop.f32.mrb[0].mxu0
  %v592 = vadd.f32 0.0, %v591
  %v593 = vpop.f32.mrb[0].mxu0
  %594 = vmatprep.mubr.bf16.mxu0 0
  %595 = vmatmul.mubr.bf16.gmra.mrb[0].mxu0 %v254
  %v596 = vpop.f32.mrb[0].mxu0
  %v597 = vadd.f32 0.0, %v596
  %v598 = vpop.f32.mrb[0].mxu0
  %v599 = vpop.f32.mrb[0].mxu0
  %v600 = vadd.f32 0.0, %v599
  %v601 = vpop.f32.mrb[0].mxu0
  %602 = vmatprep.mubr.bf16.mxu0 0
  %603 = vmatmul.mubr.bf16.gmra.mrb[0].mxu0 %v255
  %v604 = vpop.f32.mrb[0].mxu0
  %v605 = vadd.f32 0.0, %v604
  %v606 = vpop.f32.mrb[0].mxu0
  %v607 = vpop.f32.mrb[0].mxu0
  %v608 = vadd.f32 0.0, %v607
  %v609 = vpop.f32.mrb[0].mxu0
  %610 = vmatprep.mubr.bf16.mxu0 0
  %611 = vmatmul.mubr.bf16.gmra.mrb[0].mxu0 %v256
  %v612 = vpop.f32.mrb[0].mxu0
  %v613 = vadd.f32 0.0, %v612
  %v614 = vpop.f32.mrb[0].mxu0
  %v615 = vpop.f32.mrb[0].mxu0
  %v616 = vadd.f32 0.0, %v615
  %v617 = vpop.f32.mrb[0].mxu0
  %618 = vmatprep.mubr.bf16.mxu0 0
  %619 = vmatmul.mubr.bf16.gmra.mrb[0].mxu0 %v257
  %v620 = vpop.f32.mrb[0].mxu0
  %v621 = vadd.f32 0.0, %v620
  %v622 = vpop.f32.mrb[0].mxu0
  %v623 = vpop.f32.mrb[0].mxu0
  %v624 = vadd.f32 0.0, %v623
  %v625 = vpop.f32.mrb[0].mxu0
  %626 = vdwg.mxu0
  %vm627 = vcmask 130048
  %v628 = vsel %vm627, %v373, 0.0
  %v629 = vsel %vm627, %v376, 0.0
  %v630 = vadd.f32 %v628, %v629
  %v631 = vsel %vm627, %v381, 0.0
  %v632 = vadd.f32 %v630, %v631
  %v633 = vsel %vm627, %v384, 0.0
  %v634 = vadd.f32 %v632, %v633
  %v635 = vsel %vm627, %v389, 0.0
  %v636 = vadd.f32 %v634, %v635
  %v637 = vsel %vm627, %v392, 0.0
  %v638 = vadd.f32 %v636, %v637
  %v639 = vsel %vm627, %v397, 0.0
  %v640 = vadd.f32 %v638, %v639
  %v641 = vsel %vm627, %v400, 0.0
  %v642 = vadd.f32 %v640, %v641
  %v643 = vsel %vm627, %v405, 0.0
  %v644 = vadd.f32 %v642, %v643
  %v645 = vsel %vm627, %v408, 0.0
  %v646 = vadd.f32 %v644, %v645
  %v647 = vsel %vm627, %v413, 0.0
  %v648 = vadd.f32 %v646, %v647
  %v649 = vsel %vm627, %v416, 0.0
  %v650 = vadd.f32 %v648, %v649
  %v651 = vsel %vm627, %v421, 0.0
  %v652 = vadd.f32 %v650, %v651
  %v653 = vsel %vm627, %v424, 0.0
  %v654 = vadd.f32 %v652, %v653
  %v655 = vsel %vm627, %v429, 0.0
  %v656 = vadd.f32 %v654, %v655
  %v657 = vsel %vm627, %v432, 0.0
  %v658 = vadd.f32 %v656, %v657
  %v659 = vsel %vm627, %v437, 0.0
  %v660 = vadd.f32 %v658, %v659
  %v661 = vsel %vm627, %v440, 0.0
  %v662 = vadd.f32 %v660, %v661
  %v663 = vsel %vm627, %v445, 0.0
  %v664 = vadd.f32 %v662, %v663
  %v665 = vsel %vm627, %v448, 0.0
  %v666 = vadd.f32 %v664, %v665
  %v667 = vsel %vm627, %v453, 0.0
  %v668 = vadd.f32 %v666, %v667
  %v669 = vsel %vm627, %v456, 0.0
  %v670 = vadd.f32 %v668, %v669
  %v671 = vsel %vm627, %v461, 0.0
  %v672 = vadd.f32 %v670, %v671
  %v673 = vsel %vm627, %v464, 0.0
  %v674 = vadd.f32 %v672, %v673
  %v675 = vsel %vm627, %v469, 0.0
  %v676 = vadd.f32 %v674, %v675
  %v677 = vsel %vm627, %v472, 0.0
  %v678 = vadd.f32 %v676, %v677
  %v679 = vsel %vm627, %v477, 0.0
  %v680 = vadd.f32 %v678, %v679
  %v681 = vsel %vm627, %v480, 0.0
  %v682 = vadd.f32 %v680, %v681
  %v683 = vsel %vm627, %v485, 0.0
  %v684 = vadd.f32 %v682, %v683
  %v685 = vsel %vm627, %v488, 0.0
  %v686 = vadd.f32 %v684, %v685
  %v687 = vsel %vm627, %v493, 0.0
  %v688 = vadd.f32 %v686, %v687
  %v689 = vsel %vm627, %v496, 0.0
  %v690 = vadd.f32 %v688, %v689
  %v691 = vsel %vm627, %v501, 0.0
  %v692 = vadd.f32 %v690, %v691
  %v693 = vsel %vm627, %v504, 0.0
  %v694 = vadd.f32 %v692, %v693
  %v695 = vsel %vm627, %v509, 0.0
  %v696 = vadd.f32 %v694, %v695
  %v697 = vsel %vm627, %v512, 0.0
  %v698 = vadd.f32 %v696, %v697
  %v699 = vsel %vm627, %v517, 0.0
  %v700 = vadd.f32 %v698, %v699
  %v701 = vsel %vm627, %v520, 0.0
  %v702 = vadd.f32 %v700, %v701
  %v703 = vsel %vm627, %v525, 0.0
  %v704 = vadd.f32 %v702, %v703
  %v705 = vsel %vm627, %v528, 0.0
  %v706 = vadd.f32 %v704, %v705
  %v707 = vsel %vm627, %v533, 0.0
  %v708 = vadd.f32 %v706, %v707
  %v709 = vsel %vm627, %v536, 0.0
  %v710 = vadd.f32 %v708, %v709
  %v711 = vsel %vm627, %v541, 0.0
  %v712 = vadd.f32 %v710, %v711
  %v713 = vsel %vm627, %v544, 0.0
  %v714 = vadd.f32 %v712, %v713
  %v715 = vsel %vm627, %v549, 0.0
  %v716 = vadd.f32 %v714, %v715
  %v717 = vsel %vm627, %v552, 0.0
  %v718 = vadd.f32 %v716, %v717
  %v719 = vsel %vm627, %v557, 0.0
  %v720 = vadd.f32 %v718, %v719
  %v721 = vsel %vm627, %v560, 0.0
  %v722 = vadd.f32 %v720, %v721
  %v723 = vsel %vm627, %v565, 0.0
  %v724 = vadd.f32 %v722, %v723
  %v725 = vsel %vm627, %v568, 0.0
  %v726 = vadd.f32 %v724, %v725
  %v727 = vsel %vm627, %v573, 0.0
  %v728 = vadd.f32 %v726, %v727
  %v729 = vsel %vm627, %v576, 0.0
  %v730 = vadd.f32 %v728, %v729
  %v731 = vsel %vm627, %v581, 0.0
  %v732 = vadd.f32 %v730, %v731
  %v733 = vsel %vm627, %v584, 0.0
  %v734 = vadd.f32 %v732, %v733
  %v735 = vsel %vm627, %v589, 0.0
  %v736 = vadd.f32 %v734, %v735
  %v737 = vsel %vm627, %v592, 0.0
  %v738 = vadd.f32 %v736, %v737
  %v739 = vsel %vm627, %v597, 0.0
  %v740 = vadd.f32 %v738, %v739
  %v741 = vsel %vm627, %v600, 0.0
  %v742 = vadd.f32 %v740, %v741
  %v743 = vsel %vm627, %v605, 0.0
  %v744 = vadd.f32 %v742, %v743
  %v745 = vsel %vm627, %v608, 0.0
  %v746 = vadd.f32 %v744, %v745
  %v747 = vsel %vm627, %v613, 0.0
  %v748 = vadd.f32 %v746, %v747
  %v749 = vsel %vm627, %v616, 0.0
  %v750 = vadd.f32 %v748, %v749
  %v751 = vsel %vm627, %v621, 0.0
  %v752 = vadd.f32 %v750, %v751
  %v753 = vsel %vm627, %v624, 0.0
  %v754 = vadd.f32 %v752, %v753
  %v755 = vrot.slane %v754, 4
  %v756 = vadd.f32 %v754, %v755
  %v757 = vrot.slane %v756, 2
  %v758 = vadd.f32 %v756, %v757
  %v759 = vrot.slane %v758, 1
  %v760 = vadd.f32 %v758, %v759
  %v761 = vrcp.pop 512.0
  %v762 = vmul.f32 %v760, %v761
  %v763 = vsub.f32 %v373, %v762
  %v764 = vsub.f32 %v376, %v762
  %v765 = vsub.f32 %v381, %v762
  %v766 = vsub.f32 %v384, %v762
  %v767 = vsub.f32 %v389, %v762
  %v768 = vsub.f32 %v392, %v762
  %v769 = vsub.f32 %v397, %v762
  %v770 = vsub.f32 %v400, %v762
  %v771 = vsub.f32 %v405, %v762
  %v772 = vsub.f32 %v408, %v762
  %v773 = vsub.f32 %v413, %v762
  %v774 = vsub.f32 %v416, %v762
  %v775 = vsub.f32 %v421, %v762
  %v776 = vsub.f32 %v424, %v762
  %v777 = vsub.f32 %v429, %v762
  %v778 = vsub.f32 %v432, %v762
  %v779 = vsub.f32 %v437, %v762
  %v780 = vsub.f32 %v440, %v762
  %v781 = vsub.f32 %v445, %v762
  %v782 = vsub.f32 %v448, %v762
  %v783 = vsub.f32 %v453, %v762
  %v784 = vsub.f32 %v456, %v762
  %v785 = vsub.f32 %v461, %v762
  %v786 = vsub.f32 %v464, %v762
  %v787 = vsub.f32 %v469, %v762
  %v788 = vsub.f32 %v472, %v762
  %v789 = vsub.f32 %v477, %v762
  %v790 = vsub.f32 %v480, %v762
  %v791 = vsub.f32 %v485, %v762
  %v792 = vsub.f32 %v488, %v762
  %v793 = vsub.f32 %v493, %v762
  %v794 = vsub.f32 %v496, %v762
  %v795 = vsub.f32 %v501, %v762
  %v796 = vsub.f32 %v504, %v762
  %v797 = vsub.f32 %v509, %v762
  %v798 = vsub.f32 %v512, %v762
  %v799 = vsub.f32 %v517, %v762
  %v800 = vsub.f32 %v520, %v762
  %v801 = vsub.f32 %v525, %v762
  %v802 = vsub.f32 %v528, %v762
  %v803 = vsub.f32 %v533, %v762
  %v804 = vsub.f32 %v536, %v762
  %v805 = vsub.f32 %v541, %v762
  %v806 = vsub.f32 %v544, %v762
  %v807 = vsub.f32 %v549, %v762
  %v808 = vsub.f32 %v552, %v762
  %v809 = vsub.f32 %v557, %v762
  %v810 = vsub.f32 %v560, %v762
  %v811 = vsub.f32 %v565, %v762
  %v812 = vsub.f32 %v568, %v762
  %v813 = vsub.f32 %v573, %v762
  %v814 = vsub.f32 %v576, %v762
  %v815 = vsub.f32 %v581, %v762
  %v816 = vsub.f32 %v584, %v762
  %v817 = vsub.f32 %v589, %v762
  %v818 = vsub.f32 %v592, %v762
  %v819 = vsub.f32 %v597, %v762
  %v820 = vsub.f32 %v600, %v762
  %v821 = vsub.f32 %v605, %v762
  %v822 = vsub.f32 %v608, %v762
  %v823 = vsub.f32 %v613, %v762
  %v824 = vsub.f32 %v616, %v762
  %v825 = vsub.f32 %v621, %v762
  %v826 = vsub.f32 %v624, %v762
  %v827 = vmul.f32 %v763, %v763
  %v828 = vmul.f32 %v764, %v764
  %v829 = vmul.f32 %v765, %v765
  %v830 = vmul.f32 %v766, %v766
  %v831 = vmul.f32 %v767, %v767
  %v832 = vmul.f32 %v768, %v768
  %v833 = vmul.f32 %v769, %v769
  %v834 = vmul.f32 %v770, %v770
  %v835 = vmul.f32 %v771, %v771
  %v836 = vmul.f32 %v772, %v772
  %v837 = vmul.f32 %v773, %v773
  %v838 = vmul.f32 %v774, %v774
  %v839 = vmul.f32 %v775, %v775
  %v840 = vmul.f32 %v776, %v776
  %v841 = vmul.f32 %v777, %v777
  %v842 = vmul.f32 %v778, %v778
  %v843 = vmul.f32 %v779, %v779
  %v844 = vmul.f32 %v780, %v780
  %v845 = vmul.f32 %v781, %v781
  %v846 = vmul.f32 %v782, %v782
  %v847 = vmul.f32 %v783, %v783
  %v848 = vmul.f32 %v784, %v784
  %v849 = vmul.f32 %v785, %v785
  %v850 = vmul.f32 %v786, %v786
  %v851 = vmul.f32 %v787, %v787
  %v852 = vmul.f32 %v788, %v788
  %v853 = vmul.f32 %v789, %v789
  %v854 = vmul.f32 %v790, %v790
  %v855 = vmul.f32 %v791, %v791
  %v856 = vmul.f32 %v792, %v792
  %v857 = vmul.f32 %v793, %v793
  %v858 = vmul.f32 %v794, %v794
  %v859 = vmul.f32 %v795, %v795
  %v860 = vmul.f32 %v796, %v796
  %v861 = vmul.f32 %v797, %v797
  %v862 = vmul.f32 %v798, %v798
  %v863 = vmul.f32 %v799, %v799
  %v864 = vmul.f32 %v800, %v800
  %v865 = vmul.f32 %v801, %v801
  %v866 = vmul.f32 %v802, %v802
  %v867 = vmul.f32 %v803, %v803
  %v868 = vmul.f32 %v804, %v804
  %v869 = vmul.f32 %v805, %v805
  %v870 = vmul.f32 %v806, %v806
  %v871 = vmul.f32 %v807, %v807
  %v872 = vmul.f32 %v808, %v808
  %v873 = vmul.f32 %v809, %v809
  %v874 = vmul.f32 %v810, %v810
  %v875 = vmul.f32 %v811, %v811
  %v876 = vmul.f32 %v812, %v812
  %v877 = vmul.f32 %v813, %v813
  %v878 = vmul.f32 %v814, %v814
  %v879 = vmul.f32 %v815, %v815
  %v880 = vmul.f32 %v816, %v816
  %v881 = vmul.f32 %v817, %v817
  %v882 = vmul.f32 %v818, %v818
  %v883 = vmul.f32 %v819, %v819
  %v884 = vmul.f32 %v820, %v820
  %v885 = vmul.f32 %v821, %v821
  %v886 = vmul.f32 %v822, %v822
  %v887 = vmul.f32 %v823, %v823
  %v888 = vmul.f32 %v824, %v824
  %v889 = vmul.f32 %v825, %v825
  %v890 = vmul.f32 %v826, %v826
  %v891 = vsel %vm627, %v827, 0.0
  %v892 = vsel %vm627, %v828, 0.0
  %v893 = vadd.f32 %v891, %v892
  %v894 = vsel %vm627, %v829, 0.0
  %v895 = vadd.f32 %v893, %v894
  %v896 = vsel %vm627, %v830, 0.0
  %v897 = vadd.f32 %v895, %v896
  %v898 = vsel %vm627, %v831, 0.0
  %v899 = vadd.f32 %v897, %v898
  %v900 = vsel %vm627, %v832, 0.0
  %v901 = vadd.f32 %v899, %v900
  %v902 = vsel %vm627, %v833, 0.0
  %v903 = vadd.f32 %v901, %v902
  %v904 = vsel %vm627, %v834, 0.0
  %v905 = vadd.f32 %v903, %v904
  %v906 = vsel %vm627, %v835, 0.0
  %v907 = vadd.f32 %v905, %v906
  %v908 = vsel %vm627, %v836, 0.0
  %v909 = vadd.f32 %v907, %v908
  %v910 = vsel %vm627, %v837, 0.0
  %v911 = vadd.f32 %v909, %v910
  %v912 = vsel %vm627, %v838, 0.0
  %v913 = vadd.f32 %v911, %v912
  %v914 = vsel %vm627, %v839, 0.0
  %v915 = vadd.f32 %v913, %v914
  %v916 = vsel %vm627, %v840, 0.0
  %v917 = vadd.f32 %v915, %v916
  %v918 = vsel %vm627, %v841, 0.0
  %v919 = vadd.f32 %v917, %v918
  %v920 = vsel %vm627, %v842, 0.0
  %v921 = vadd.f32 %v919, %v920
  %v922 = vsel %vm627, %v843, 0.0
  %v923 = vadd.f32 %v921, %v922
  %v924 = vsel %vm627, %v844, 0.0
  %v925 = vadd.f32 %v923, %v924
  %v926 = vsel %vm627, %v845, 0.0
  %v927 = vadd.f32 %v925, %v926
  %v928 = vsel %vm627, %v846, 0.0
  %v929 = vadd.f32 %v927, %v928
  %v930 = vsel %vm627, %v847, 0.0
  %v931 = vadd.f32 %v929, %v930
  %v932 = vsel %vm627, %v848, 0.0
  %v933 = vadd.f32 %v931, %v932
  %v934 = vsel %vm627, %v849, 0.0
  %v935 = vadd.f32 %v933, %v934
  %v936 = vsel %vm627, %v850, 0.0
  %v937 = vadd.f32 %v935, %v936
  %v938 = vsel %vm627, %v851, 0.0
  %v939 = vadd.f32 %v937, %v938
  %v940 = vsel %vm627, %v852, 0.0
  %v941 = vadd.f32 %v939, %v940
  %v942 = vsel %vm627, %v853, 0.0
  %v943 = vadd.f32 %v941, %v942
  %v944 = vsel %vm627, %v854, 0.0
  %v945 = vadd.f32 %v943, %v944
  %v946 = vsel %vm627, %v855, 0.0
  %v947 = vadd.f32 %v945, %v946
  %v948 = vsel %vm627, %v856, 0.0
  %v949 = vadd.f32 %v947, %v948
  %v950 = vsel %vm627, %v857, 0.0
  %v951 = vadd.f32 %v949, %v950
  %v952 = vsel %vm627, %v858, 0.0
  %v953 = vadd.f32 %v951, %v952
  %v954 = vsel %vm627, %v859, 0.0
  %v955 = vadd.f32 %v953, %v954
  %v956 = vsel %vm627, %v860, 0.0
  %v957 = vadd.f32 %v955, %v956
  %v958 = vsel %vm627, %v861, 0.0
  %v959 = vadd.f32 %v957, %v958
  %v960 = vsel %vm627, %v862, 0.0
  %v961 = vadd.f32 %v959, %v960
  %v962 = vsel %vm627, %v863, 0.0
  %v963 = vadd.f32 %v961, %v962
  %v964 = vsel %vm627, %v864, 0.0
  %v965 = vadd.f32 %v963, %v964
  %v966 = vsel %vm627, %v865, 0.0
  %v967 = vadd.f32 %v965, %v966
  %v968 = vsel %vm627, %v866, 0.0
  %v969 = vadd.f32 %v967, %v968
  %v970 = vsel %vm627, %v867, 0.0
  %v971 = vadd.f32 %v969, %v970
  %v972 = vsel %vm627, %v868, 0.0
  %v973 = vadd.f32 %v971, %v972
  %v974 = vsel %vm627, %v869, 0.0
  %v975 = vadd.f32 %v973, %v974
  %v976 = vsel %vm627, %v870, 0.0
  %v977 = vadd.f32 %v975, %v976
  %v978 = vsel %vm627, %v871, 0.0
  %v979 = vadd.f32 %v977, %v978
  %v980 = vsel %vm627, %v872, 0.0
  %v981 = vadd.f32 %v979, %v980
  %v982 = vsel %vm627, %v873, 0.0
  %v983 = vadd.f32 %v981, %v982
  %v984 = vsel %vm627, %v874, 0.0
  %v985 = vadd.f32 %v983, %v984
  %v986 = vsel %vm627, %v875, 0.0
  %v987 = vadd.f32 %v985, %v986
  %v988 = vsel %vm627, %v876, 0.0
  %v989 = vadd.f32 %v987, %v988
  %v990 = vsel %vm627, %v877, 0.0
  %v991 = vadd.f32 %v989, %v990
  %v992 = vsel %vm627, %v878, 0.0
  %v993 = vadd.f32 %v991, %v992
  %v994 = vsel %vm627, %v879, 0.0
  %v995 = vadd.f32 %v993, %v994
  %v996 = vsel %vm627, %v880, 0.0
  %v997 = vadd.f32 %v995, %v996
  %v998 = vsel %vm627, %v881, 0.0
  %v999 = vadd.f32 %v997, %v998
  %v1000 = vsel %vm627, %v882, 0.0
  %v1001 = vadd.f32 %v999, %v1000
  %v1002 = vsel %vm627, %v883, 0.0
  %v1003 = vadd.f32 %v1001, %v1002
  %v1004 = vsel %vm627, %v884, 0.0
  %v1005 = vadd.f32 %v1003, %v1004
  %v1006 = vsel %vm627, %v885, 0.0
  %v1007 = vadd.f32 %v1005, %v1006
  %v1008 = vsel %vm627, %v886, 0.0
  %v1009 = vadd.f32 %v1007, %v1008
  %v1010 = vsel %vm627, %v887, 0.0
  %v1011 = vadd.f32 %v1009, %v1010
  %v1012 = vsel %vm627, %v888, 0.0
  %v1013 = vadd.f32 %v1011, %v1012
  %v1014 = vsel %vm627, %v889, 0.0
  %v1015 = vadd.f32 %v1013, %v1014
  %v1016 = vsel %vm627, %v890, 0.0
  %v1017 = vadd.f32 %v1015, %v1016
  %v1018 = vrot.slane %v1017, 4
  %v1019 = vadd.f32 %v1017, %v1018
  %v1020 = vrot.slane %v1019, 2
  %v1021 = vadd.f32 %v1019, %v1020
  %v1022 = vrot.slane %v1021, 1
  %v1023 = vadd.f32 %v1021, %v1022
  %v1024 = vmul.f32 %v1023, %v761
  %v1025 = vadd.f32 %v1024, 1e-05
  %v1026 = vrsqrt.pop %v1025
  %v1027 = vmul.f32 %v763, %v1026
  %v1028 = vmul.f32 %v764, %v1026
  %v1029 = vmul.f32 %v765, %v1026
  %v1030 = vmul.f32 %v766, %v1026
  %v1031 = vmul.f32 %v767, %v1026
  %v1032 = vmul.f32 %v768, %v1026
  %v1033 = vmul.f32 %v769, %v1026
  %v1034 = vmul.f32 %v770, %v1026
  %v1035 = vmul.f32 %v771, %v1026
  %v1036 = vmul.f32 %v772, %v1026
  %v1037 = vmul.f32 %v773, %v1026
  %v1038 = vmul.f32 %v774, %v1026
  %v1039 = vmul.f32 %v775, %v1026
  %v1040 = vmul.f32 %v776, %v1026
  %v1041 = vmul.f32 %v777, %v1026
  %v1042 = vmul.f32 %v778, %v1026
  %v1043 = vmul.f32 %v779, %v1026
  %v1044 = vmul.f32 %v780, %v1026
  %v1045 = vmul.f32 %v781, %v1026
  %v1046 = vmul.f32 %v782, %v1026
  %v1047 = vmul.f32 %v783, %v1026
  %v1048 = vmul.f32 %v784, %v1026
  %v1049 = vmul.f32 %v785, %v1026
  %v1050 = vmul.f32 %v786, %v1026
  %v1051 = vmul.f32 %v787, %v1026
  %v1052 = vmul.f32 %v788, %v1026
  %v1053 = vmul.f32 %v789, %v1026
  %v1054 = vmul.f32 %v790, %v1026
  %v1055 = vmul.f32 %v791, %v1026
  %v1056 = vmul.f32 %v792, %v1026
  %v1057 = vmul.f32 %v793, %v1026
  %v1058 = vmul.f32 %v794, %v1026
  %v1059 = vmul.f32 %v795, %v1026
  %v1060 = vmul.f32 %v796, %v1026
  %v1061 = vmul.f32 %v797, %v1026
  %v1062 = vmul.f32 %v798, %v1026
  %v1063 = vmul.f32 %v799, %v1026
  %v1064 = vmul.f32 %v800, %v1026
  %v1065 = vmul.f32 %v801, %v1026
  %v1066 = vmul.f32 %v802, %v1026
  %v1067 = vmul.f32 %v803, %v1026
  %v1068 = vmul.f32 %v804, %v1026
  %v1069 = vmul.f32 %v805, %v1026
  %v1070 = vmul.f32 %v806, %v1026
  %v1071 = vmul.f32 %v807, %v1026
  %v1072 = vmul.f32 %v808, %v1026
  %v1073 = vmul.f32 %v809, %v1026
  %v1074 = vmul.f32 %v810, %v1026
  %v1075 = vmul.f32 %v811, %v1026
  %v1076 = vmul.f32 %v812, %v1026
  %v1077 = vmul.f32 %v813, %v1026
  %v1078 = vmul.f32 %v814, %v1026
  %v1079 = vmul.f32 %v815, %v1026
  %v1080 = vmul.f32 %v816, %v1026
  %v1081 = vmul.f32 %v817, %v1026
  %v1082 = vmul.f32 %v818, %v1026
  %v1083 = vmul.f32 %v819, %v1026
  %v1084 = vmul.f32 %v820, %v1026
  %v1085 = vmul.f32 %v821, %v1026
  %v1086 = vmul.f32 %v822, %v1026
  %v1087 = vmul.f32 %v823, %v1026
  %v1088 = vmul.f32 %v824, %v1026
  %v1089 = vmul.f32 %v825, %v1026
  %v1090 = vmul.f32 %v826, %v1026
  %v1091 = vld [vmem:[%s2] sm:$0x1]
  %v1093 = vlaneseq
  %v1094 = vshrl.u32 %v1093, 7
  %v1095 = vsub.s32 0, %v1094
  %v1096 = vrot.slane %v1091, %v1095
  %v1098 = vmul.f32 %v1027, %v1096
  %v1099 = vmul.f32 %v1028, %v1096
  %v1100 = vmul.f32 %v1029, %v1096
  %v1101 = vmul.f32 %v1030, %v1096
  %v1102 = vmul.f32 %v1031, %v1096
  %v1103 = vmul.f32 %v1032, %v1096
  %v1104 = vmul.f32 %v1033, %v1096
  %v1105 = vmul.f32 %v1034, %v1096
  %v1106 = vmul.f32 %v1035, %v1096
  %v1107 = vmul.f32 %v1036, %v1096
  %v1108 = vmul.f32 %v1037, %v1096
  %v1109 = vmul.f32 %v1038, %v1096
  %v1110 = vmul.f32 %v1039, %v1096
  %v1111 = vmul.f32 %v1040, %v1096
  %v1112 = vmul.f32 %v1041, %v1096
  %v1113 = vmul.f32 %v1042, %v1096
  %v1114 = vmul.f32 %v1043, %v1096
  %v1115 = vmul.f32 %v1044, %v1096
  %v1116 = vmul.f32 %v1045, %v1096
  %v1117 = vmul.f32 %v1046, %v1096
  %v1118 = vmul.f32 %v1047, %v1096
  %v1119 = vmul.f32 %v1048, %v1096
  %v1120 = vmul.f32 %v1049, %v1096
  %v1121 = vmul.f32 %v1050, %v1096
  %v1122 = vmul.f32 %v1051, %v1096
  %v1123 = vmul.f32 %v1052, %v1096
  %v1124 = vmul.f32 %v1053, %v1096
  %v1125 = vmul.f32 %v1054, %v1096
  %v1126 = vmul.f32 %v1055, %v1096
  %v1127 = vmul.f32 %v1056, %v1096
  %v1128 = vmul.f32 %v1057, %v1096
  %v1129 = vmul.f32 %v1058, %v1096
  %v1130 = vmul.f32 %v1059, %v1096
  %v1131 = vmul.f32 %v1060, %v1096
  %v1132 = vmul.f32 %v1061, %v1096
  %v1133 = vmul.f32 %v1062, %v1096
  %v1134 = vmul.f32 %v1063, %v1096
  %v1135 = vmul.f32 %v1064, %v1096
  %v1136 = vmul.f32 %v1065, %v1096
  %v1137 = vmul.f32 %v1066, %v1096
  %v1138 = vmul.f32 %v1067, %v1096
  %v1139 = vmul.f32 %v1068, %v1096
  %v1140 = vmul.f32 %v1069, %v1096
  %v1141 = vmul.f32 %v1070, %v1096
  %v1142 = vmul.f32 %v1071, %v1096
  %v1143 = vmul.f32 %v1072, %v1096
  %v1144 = vmul.f32 %v1073, %v1096
  %v1145 = vmul.f32 %v1074, %v1096
  %v1146 = vmul.f32 %v1075, %v1096
  %v1147 = vmul.f32 %v1076, %v1096
  %v1148 = vmul.f32 %v1077, %v1096
  %v1149 = vmul.f32 %v1078, %v1096
  %v1150 = vmul.f32 %v1079, %v1096
  %v1151 = vmul.f32 %v1080, %v1096
  %v1152 = vmul.f32 %v1081, %v1096
  %v1153 = vmul.f32 %v1082, %v1096
  %v1154 = vmul.f32 %v1083, %v1096
  %v1155 = vmul.f32 %v1084, %v1096
  %v1156 = vmul.f32 %v1085, %v1096
  %v1157 = vmul.f32 %v1086, %v1096
  %v1158 = vmul.f32 %v1087, %v1096
  %v1159 = vmul.f32 %v1088, %v1096
  %v1160 = vmul.f32 %v1089, %v1096
  %v1161 = vmul.f32 %v1090, %v1096
  %v1162 = vld [vmem:[%s3] sm:$0x1]
  %v1164 = vlaneseq
  %v1165 = vshrl.u32 %v1164, 7
  %v1166 = vsub.s32 0, %v1165
  %v1167 = vrot.slane %v1162, %v1166
  %v1169 = vadd.f32 %v1098, %v1167
  %v1170 = vadd.f32 %v1099, %v1167
  %v1171 = vadd.f32 %v1100, %v1167
  %v1172 = vadd.f32 %v1101, %v1167
  %v1173 = vadd.f32 %v1102, %v1167
  %v1174 = vadd.f32 %v1103, %v1167
  %v1175 = vadd.f32 %v1104, %v1167
  %v1176 = vadd.f32 %v1105, %v1167
  %v1177 = vadd.f32 %v1106, %v1167
  %v1178 = vadd.f32 %v1107, %v1167
  %v1179 = vadd.f32 %v1108, %v1167
  %v1180 = vadd.f32 %v1109, %v1167
  %v1181 = vadd.f32 %v1110, %v1167
  %v1182 = vadd.f32 %v1111, %v1167
  %v1183 = vadd.f32 %v1112, %v1167
  %v1184 = vadd.f32 %v1113, %v1167
  %v1185 = vadd.f32 %v1114, %v1167
  %v1186 = vadd.f32 %v1115, %v1167
  %v1187 = vadd.f32 %v1116, %v1167
  %v1188 = vadd.f32 %v1117, %v1167
  %v1189 = vadd.f32 %v1118, %v1167
  %v1190 = vadd.f32 %v1119, %v1167
  %v1191 = vadd.f32 %v1120, %v1167
  %v1192 = vadd.f32 %v1121, %v1167
  %v1193 = vadd.f32 %v1122, %v1167
  %v1194 = vadd.f32 %v1123, %v1167
  %v1195 = vadd.f32 %v1124, %v1167
  %v1196 = vadd.f32 %v1125, %v1167
  %v1197 = vadd.f32 %v1126, %v1167
  %v1198 = vadd.f32 %v1127, %v1167
  %v1199 = vadd.f32 %v1128, %v1167
  %v1200 = vadd.f32 %v1129, %v1167
  %v1201 = vadd.f32 %v1130, %v1167
  %v1202 = vadd.f32 %v1131, %v1167
  %v1203 = vadd.f32 %v1132, %v1167
  %v1204 = vadd.f32 %v1133, %v1167
  %v1205 = vadd.f32 %v1134, %v1167
  %v1206 = vadd.f32 %v1135, %v1167
  %v1207 = vadd.f32 %v1136, %v1167
  %v1208 = vadd.f32 %v1137, %v1167
  %v1209 = vadd.f32 %v1138, %v1167
  %v1210 = vadd.f32 %v1139, %v1167
  %v1211 = vadd.f32 %v1140, %v1167
  %v1212 = vadd.f32 %v1141, %v1167
  %v1213 = vadd.f32 %v1142, %v1167
  %v1214 = vadd.f32 %v1143, %v1167
  %v1215 = vadd.f32 %v1144, %v1167
  %v1216 = vadd.f32 %v1145, %v1167
  %v1217 = vadd.f32 %v1146, %v1167
  %v1218 = vadd.f32 %v1147, %v1167
  %v1219 = vadd.f32 %v1148, %v1167
  %v1220 = vadd.f32 %v1149, %v1167
  %v1221 = vadd.f32 %v1150, %v1167
  %v1222 = vadd.f32 %v1151, %v1167
  %v1223 = vadd.f32 %v1152, %v1167
  %v1224 = vadd.f32 %v1153, %v1167
  %v1225 = vadd.f32 %v1154, %v1167
  %v1226 = vadd.f32 %v1155, %v1167
  %v1227 = vadd.f32 %v1156, %v1167
  %v1228 = vadd.f32 %v1157, %v1167
  %v1229 = vadd.f32 %v1158, %v1167
  %v1230 = vadd.f32 %v1159, %v1167
  %v1231 = vadd.f32 %v1160, %v1167
  %v1232 = vadd.f32 %v1161, %v1167
  %vm1233 = vcmp.ge.f32.partialorder %v1169, 0.0
  %vm1234 = vcmp.ge.f32.partialorder %v1170, 0.0
  %vm1235 = vcmp.ge.f32.partialorder %v1171, 0.0
  %vm1236 = vcmp.ge.f32.partialorder %v1172, 0.0
  %vm1237 = vcmp.ge.f32.partialorder %v1173, 0.0
  %vm1238 = vcmp.ge.f32.partialorder %v1174, 0.0
  %vm1239 = vcmp.ge.f32.partialorder %v1175, 0.0
  %vm1240 = vcmp.ge.f32.partialorder %v1176, 0.0
  %vm1241 = vcmp.ge.f32.partialorder %v1177, 0.0
  %vm1242 = vcmp.ge.f32.partialorder %v1178, 0.0
  %vm1243 = vcmp.ge.f32.partialorder %v1179, 0.0
  %vm1244 = vcmp.ge.f32.partialorder %v1180, 0.0
  %vm1245 = vcmp.ge.f32.partialorder %v1181, 0.0
  %vm1246 = vcmp.ge.f32.partialorder %v1182, 0.0
  %vm1247 = vcmp.ge.f32.partialorder %v1183, 0.0
  %vm1248 = vcmp.ge.f32.partialorder %v1184, 0.0
  %vm1249 = vcmp.ge.f32.partialorder %v1185, 0.0
  %vm1250 = vcmp.ge.f32.partialorder %v1186, 0.0
  %vm1251 = vcmp.ge.f32.partialorder %v1187, 0.0
  %vm1252 = vcmp.ge.f32.partialorder %v1188, 0.0
  %vm1253 = vcmp.ge.f32.partialorder %v1189, 0.0
  %vm1254 = vcmp.ge.f32.partialorder %v1190, 0.0
  %vm1255 = vcmp.ge.f32.partialorder %v1191, 0.0
  %vm1256 = vcmp.ge.f32.partialorder %v1192, 0.0
  %vm1257 = vcmp.ge.f32.partialorder %v1193, 0.0
  %vm1258 = vcmp.ge.f32.partialorder %v1194, 0.0
  %vm1259 = vcmp.ge.f32.partialorder %v1195, 0.0
  %vm1260 = vcmp.ge.f32.partialorder %v1196, 0.0
  %vm1261 = vcmp.ge.f32.partialorder %v1197, 0.0
  %vm1262 = vcmp.ge.f32.partialorder %v1198, 0.0
  %vm1263 = vcmp.ge.f32.partialorder %v1199, 0.0
  %vm1264 = vcmp.ge.f32.partialorder %v1200, 0.0
  %vm1265 = vcmp.ge.f32.partialorder %v1201, 0.0
  %vm1266 = vcmp.ge.f32.partialorder %v1202, 0.0
  %vm1267 = vcmp.ge.f32.partialorder %v1203, 0.0
  %vm1268 = vcmp.ge.f32.partialorder %v1204, 0.0
  %vm1269 = vcmp.ge.f32.partialorder %v1205, 0.0
  %vm1270 = vcmp.ge.f32.partialorder %v1206, 0.0
  %vm1271 = vcmp.ge.f32.partialorder %v1207, 0.0
  %vm1272 = vcmp.ge.f32.partialorder %v1208, 0.0
  %vm1273 = vcmp.ge.f32.partialorder %v1209, 0.0
  %vm1274 = vcmp.ge.f32.partialorder %v1210, 0.0
  %vm1275 = vcmp.ge.f32.partialorder %v1211, 0.0
  %vm1276 = vcmp.ge.f32.partialorder %v1212, 0.0
  %vm1277 = vcmp.ge.f32.partialorder %v1213, 0.0
  %vm1278 = vcmp.ge.f32.partialorder %v1214, 0.0
  %vm1279 = vcmp.ge.f32.partialorder %v1215, 0.0
  %vm1280 = vcmp.ge.f32.partialorder %v1216, 0.0
  %vm1281 = vcmp.ge.f32.partialorder %v1217, 0.0
  %vm1282 = vcmp.ge.f32.partialorder %v1218, 0.0
  %vm1283 = vcmp.ge.f32.partialorder %v1219, 0.0
  %vm1284 = vcmp.ge.f32.partialorder %v1220, 0.0
  %vm1285 = vcmp.ge.f32.partialorder %v1221, 0.0
  %vm1286 = vcmp.ge.f32.partialorder %v1222, 0.0
  %vm1287 = vcmp.ge.f32.partialorder %v1223, 0.0
  %vm1288 = vcmp.ge.f32.partialorder %v1224, 0.0
  %vm1289 = vcmp.ge.f32.partialorder %v1225, 0.0
  %vm1290 = vcmp.ge.f32.partialorder %v1226, 0.0
  %vm1291 = vcmp.ge.f32.partialorder %v1227, 0.0
  %vm1292 = vcmp.ge.f32.partialorder %v1228, 0.0
  %vm1293 = vcmp.ge.f32.partialorder %v1229, 0.0
  %vm1294 = vcmp.ge.f32.partialorder %v1230, 0.0
  %vm1295 = vcmp.ge.f32.partialorder %v1231, 0.0
  %vm1296 = vcmp.ge.f32.partialorder %v1232, 0.0
  %v1297 = vmul.f32 %v1169, 0.2
  %v1298 = vmul.f32 %v1170, 0.2
  %v1299 = vmul.f32 %v1171, 0.2
  %v1300 = vmul.f32 %v1172, 0.2
  %v1301 = vmul.f32 %v1173, 0.2
  %v1302 = vmul.f32 %v1174, 0.2
  %v1303 = vmul.f32 %v1175, 0.2
  %v1304 = vmul.f32 %v1176, 0.2
  %v1305 = vmul.f32 %v1177, 0.2
  %v1306 = vmul.f32 %v1178, 0.2
  %v1307 = vmul.f32 %v1179, 0.2
  %v1308 = vmul.f32 %v1180, 0.2
  %v1309 = vmul.f32 %v1181, 0.2
  %v1310 = vmul.f32 %v1182, 0.2
  %v1311 = vmul.f32 %v1183, 0.2
  %v1312 = vmul.f32 %v1184, 0.2
  %v1313 = vmul.f32 %v1185, 0.2
  %v1314 = vmul.f32 %v1186, 0.2
  %v1315 = vmul.f32 %v1187, 0.2
  %v1316 = vmul.f32 %v1188, 0.2
  %v1317 = vmul.f32 %v1189, 0.2
  %v1318 = vmul.f32 %v1190, 0.2
  %v1319 = vmul.f32 %v1191, 0.2
  %v1320 = vmul.f32 %v1192, 0.2
  %v1321 = vmul.f32 %v1193, 0.2
  %v1322 = vmul.f32 %v1194, 0.2
  %v1323 = vmul.f32 %v1195, 0.2
  %v1324 = vmul.f32 %v1196, 0.2
  %v1325 = vmul.f32 %v1197, 0.2
  %v1326 = vmul.f32 %v1198, 0.2
  %v1327 = vmul.f32 %v1199, 0.2
  %v1328 = vmul.f32 %v1200, 0.2
  %v1329 = vmul.f32 %v1201, 0.2
  %v1330 = vmul.f32 %v1202, 0.2
  %v1331 = vmul.f32 %v1203, 0.2
  %v1332 = vmul.f32 %v1204, 0.2
  %v1333 = vmul.f32 %v1205, 0.2
  %v1334 = vmul.f32 %v1206, 0.2
  %v1335 = vmul.f32 %v1207, 0.2
  %v1336 = vmul.f32 %v1208, 0.2
  %v1337 = vmul.f32 %v1209, 0.2
  %v1338 = vmul.f32 %v1210, 0.2
  %v1339 = vmul.f32 %v1211, 0.2
  %v1340 = vmul.f32 %v1212, 0.2
  %v1341 = vmul.f32 %v1213, 0.2
  %v1342 = vmul.f32 %v1214, 0.2
  %v1343 = vmul.f32 %v1215, 0.2
  %v1344 = vmul.f32 %v1216, 0.2
  %v1345 = vmul.f32 %v1217, 0.2
  %v1346 = vmul.f32 %v1218, 0.2
  %v1347 = vmul.f32 %v1219, 0.2
  %v1348 = vmul.f32 %v1220, 0.2
  %v1349 = vmul.f32 %v1221, 0.2
  %v1350 = vmul.f32 %v1222, 0.2
  %v1351 = vmul.f32 %v1223, 0.2
  %v1352 = vmul.f32 %v1224, 0.2
  %v1353 = vmul.f32 %v1225, 0.2
  %v1354 = vmul.f32 %v1226, 0.2
  %v1355 = vmul.f32 %v1227, 0.2
  %v1356 = vmul.f32 %v1228, 0.2
  %v1357 = vmul.f32 %v1229, 0.2
  %v1358 = vmul.f32 %v1230, 0.2
  %v1359 = vmul.f32 %v1231, 0.2
  %v1360 = vmul.f32 %v1232, 0.2
  %v1361 = vsel %vm1233, %v1169, %v1297
  %v1362 = vsel %vm1234, %v1170, %v1298
  %v1363 = vsel %vm1235, %v1171, %v1299
  %v1364 = vsel %vm1236, %v1172, %v1300
  %v1365 = vsel %vm1237, %v1173, %v1301
  %v1366 = vsel %vm1238, %v1174, %v1302
  %v1367 = vsel %vm1239, %v1175, %v1303
  %v1368 = vsel %vm1240, %v1176, %v1304
  %v1369 = vsel %vm1241, %v1177, %v1305
  %v1370 = vsel %vm1242, %v1178, %v1306
  %v1371 = vsel %vm1243, %v1179, %v1307
  %v1372 = vsel %vm1244, %v1180, %v1308
  %v1373 = vsel %vm1245, %v1181, %v1309
  %v1374 = vsel %vm1246, %v1182, %v1310
  %v1375 = vsel %vm1247, %v1183, %v1311
  %v1376 = vsel %vm1248, %v1184, %v1312
  %v1377 = vsel %vm1249, %v1185, %v1313
  %v1378 = vsel %vm1250, %v1186, %v1314
  %v1379 = vsel %vm1251, %v1187, %v1315
  %v1380 = vsel %vm1252, %v1188, %v1316
  %v1381 = vsel %vm1253, %v1189, %v1317
  %v1382 = vsel %vm1254, %v1190, %v1318
  %v1383 = vsel %vm1255, %v1191, %v1319
  %v1384 = vsel %vm1256, %v1192, %v1320
  %v1385 = vsel %vm1257, %v1193, %v1321
  %v1386 = vsel %vm1258, %v1194, %v1322
  %v1387 = vsel %vm1259, %v1195, %v1323
  %v1388 = vsel %vm1260, %v1196, %v1324
  %v1389 = vsel %vm1261, %v1197, %v1325
  %v1390 = vsel %vm1262, %v1198, %v1326
  %v1391 = vsel %vm1263, %v1199, %v1327
  %v1392 = vsel %vm1264, %v1200, %v1328
  %v1393 = vsel %vm1265, %v1201, %v1329
  %v1394 = vsel %vm1266, %v1202, %v1330
  %v1395 = vsel %vm1267, %v1203, %v1331
  %v1396 = vsel %vm1268, %v1204, %v1332
  %v1397 = vsel %vm1269, %v1205, %v1333
  %v1398 = vsel %vm1270, %v1206, %v1334
  %v1399 = vsel %vm1271, %v1207, %v1335
  %v1400 = vsel %vm1272, %v1208, %v1336
  %v1401 = vsel %vm1273, %v1209, %v1337
  %v1402 = vsel %vm1274, %v1210, %v1338
  %v1403 = vsel %vm1275, %v1211, %v1339
  %v1404 = vsel %vm1276, %v1212, %v1340
  %v1405 = vsel %vm1277, %v1213, %v1341
  %v1406 = vsel %vm1278, %v1214, %v1342
  %v1407 = vsel %vm1279, %v1215, %v1343
  %v1408 = vsel %vm1280, %v1216, %v1344
  %v1409 = vsel %vm1281, %v1217, %v1345
  %v1410 = vsel %vm1282, %v1218, %v1346
  %v1411 = vsel %vm1283, %v1219, %v1347
  %v1412 = vsel %vm1284, %v1220, %v1348
  %v1413 = vsel %vm1285, %v1221, %v1349
  %v1414 = vsel %vm1286, %v1222, %v1350
  %v1415 = vsel %vm1287, %v1223, %v1351
  %v1416 = vsel %vm1288, %v1224, %v1352
  %v1417 = vsel %vm1289, %v1225, %v1353
  %v1418 = vsel %vm1290, %v1226, %v1354
  %v1419 = vsel %vm1291, %v1227, %v1355
  %v1420 = vsel %vm1292, %v1228, %v1356
  %v1421 = vsel %vm1293, %v1229, %v1357
  %v1422 = vsel %vm1294, %v1230, %v1358
  %v1423 = vsel %vm1295, %v1231, %v1359
  %v1424 = vsel %vm1296, %v1232, %v1360
  %v1425 = vpack.c.bf16 %v1362, %v1361
  %v1426 = vpack.c.bf16 %v1364, %v1363
  %v1427 = vpack.c.bf16 %v1366, %v1365
  %v1428 = vpack.c.bf16 %v1368, %v1367
  %v1429 = vpack.c.bf16 %v1370, %v1369
  %v1430 = vpack.c.bf16 %v1372, %v1371
  %v1431 = vpack.c.bf16 %v1374, %v1373
  %v1432 = vpack.c.bf16 %v1376, %v1375
  %v1433 = vpack.c.bf16 %v1378, %v1377
  %v1434 = vpack.c.bf16 %v1380, %v1379
  %v1435 = vpack.c.bf16 %v1382, %v1381
  %v1436 = vpack.c.bf16 %v1384, %v1383
  %v1437 = vpack.c.bf16 %v1386, %v1385
  %v1438 = vpack.c.bf16 %v1388, %v1387
  %v1439 = vpack.c.bf16 %v1390, %v1389
  %v1440 = vpack.c.bf16 %v1392, %v1391
  %v1441 = vpack.c.bf16 %v1394, %v1393
  %v1442 = vpack.c.bf16 %v1396, %v1395
  %v1443 = vpack.c.bf16 %v1398, %v1397
  %v1444 = vpack.c.bf16 %v1400, %v1399
  %v1445 = vpack.c.bf16 %v1402, %v1401
  %v1446 = vpack.c.bf16 %v1404, %v1403
  %v1447 = vpack.c.bf16 %v1406, %v1405
  %v1448 = vpack.c.bf16 %v1408, %v1407
  %v1449 = vpack.c.bf16 %v1410, %v1409
  %v1450 = vpack.c.bf16 %v1412, %v1411
  %v1451 = vpack.c.bf16 %v1414, %v1413
  %v1452 = vpack.c.bf16 %v1416, %v1415
  %v1453 = vpack.c.bf16 %v1418, %v1417
  %v1454 = vpack.c.bf16 %v1420, %v1419
  %v1455 = vpack.c.bf16 %v1422, %v1421
  %v1456 = vpack.c.bf16 %v1424, %v1423
  %v1489 = vunpack.c.l.b16 %v1425
  %v1490 = vunpack.c.h.b16 %v1425
  %v1491 = vunpack.c.l.b16 %v1426
  %v1492 = vunpack.c.h.b16 %v1426
  %v1493 = vunpack.c.l.b16 %v1427
  %v1494 = vunpack.c.h.b16 %v1427
  %v1495 = vunpack.c.l.b16 %v1428
  %v1496 = vunpack.c.h.b16 %v1428
  %v1497 = vunpack.c.l.b16 %v1429
  %v1498 = vunpack.c.h.b16 %v1429
  %v1499 = vunpack.c.l.b16 %v1430
  %v1500 = vunpack.c.h.b16 %v1430
  %v1501 = vunpack.c.l.b16 %v1431
  %v1502 = vunpack.c.h.b16 %v1431
  %v1503 = vunpack.c.l.b16 %v1432
  %v1504 = vunpack.c.h.b16 %v1432
  %v1505 = vunpack.c.l.b16 %v1433
  %v1506 = vunpack.c.h.b16 %v1433
  %v1507 = vunpack.c.l.b16 %v1434
  %v1508 = vunpack.c.h.b16 %v1434
  %v1509 = vunpack.c.l.b16 %v1435
  %v1510 = vunpack.c.h.b16 %v1435
  %v1511 = vunpack.c.l.b16 %v1436
  %v1512 = vunpack.c.h.b16 %v1436
  %v1513 = vunpack.c.l.b16 %v1437
  %v1514 = vunpack.c.h.b16 %v1437
  %v1515 = vunpack.c.l.b16 %v1438
  %v1516 = vunpack.c.h.b16 %v1438
  %v1517 = vunpack.c.l.b16 %v1439
  %v1518 = vunpack.c.h.b16 %v1439
  %v1519 = vunpack.c.l.b16 %v1440
  %v1520 = vunpack.c.h.b16 %v1440
  %v1521 = vunpack.c.l.b16 %v1441
  %v1522 = vunpack.c.h.b16 %v1441
  %v1523 = vunpack.c.l.b16 %v1442
  %v1524 = vunpack.c.h.b16 %v1442
  %v1525 = vunpack.c.l.b16 %v1443
  %v1526 = vunpack.c.h.b16 %v1443
  %v1527 = vunpack.c.l.b16 %v1444
  %v1528 = vunpack.c.h.b16 %v1444
  %v1529 = vunpack.c.l.b16 %v1445
  %v1530 = vunpack.c.h.b16 %v1445
  %v1531 = vunpack.c.l.b16 %v1446
  %v1532 = vunpack.c.h.b16 %v1446
  %v1533 = vunpack.c.l.b16 %v1447
  %v1534 = vunpack.c.h.b16 %v1447
  %v1535 = vunpack.c.l.b16 %v1448
  %v1536 = vunpack.c.h.b16 %v1448
  %v1537 = vunpack.c.l.b16 %v1449
  %v1538 = vunpack.c.h.b16 %v1449
  %v1539 = vunpack.c.l.b16 %v1450
  %v1540 = vunpack.c.h.b16 %v1450
  %v1541 = vunpack.c.l.b16 %v1451
  %v1542 = vunpack.c.h.b16 %v1451
  %v1543 = vunpack.c.l.b16 %v1452
  %v1544 = vunpack.c.h.b16 %v1452
  %v1545 = vunpack.c.l.b16 %v1453
  %v1546 = vunpack.c.h.b16 %v1453
  %v1547 = vunpack.c.l.b16 %v1454
  %v1548 = vunpack.c.h.b16 %v1454
  %v1549 = vunpack.c.l.b16 %v1455
  %v1550 = vunpack.c.h.b16 %v1455
  %v1551 = vunpack.c.l.b16 %v1456
  %v1552 = vunpack.c.h.b16 %v1456
  %v1553 = vpack.c.b16 %v1489, %v1489
  %v1554 = vpack.c.b16 %v1490, %v1490
  %v1555 = vpack.c.b16 %v1491, %v1491
  %v1556 = vpack.c.b16 %v1492, %v1492
  %v1557 = vpack.c.b16 %v1493, %v1493
  %v1558 = vpack.c.b16 %v1494, %v1494
  %v1559 = vpack.c.b16 %v1495, %v1495
  %v1560 = vpack.c.b16 %v1496, %v1496
  %v1561 = vpack.c.b16 %v1497, %v1497
  %v1562 = vpack.c.b16 %v1498, %v1498
  %v1563 = vpack.c.b16 %v1499, %v1499
  %v1564 = vpack.c.b16 %v1500, %v1500
  %v1565 = vpack.c.b16 %v1501, %v1501
  %v1566 = vpack.c.b16 %v1502, %v1502
  %v1567 = vpack.c.b16 %v1503, %v1503
  %v1568 = vpack.c.b16 %v1504, %v1504
  %v1569 = vpack.c.b16 %v1505, %v1505
  %v1570 = vpack.c.b16 %v1506, %v1506
  %v1571 = vpack.c.b16 %v1507, %v1507
  %v1572 = vpack.c.b16 %v1508, %v1508
  %v1573 = vpack.c.b16 %v1509, %v1509
  %v1574 = vpack.c.b16 %v1510, %v1510
  %v1575 = vpack.c.b16 %v1511, %v1511
  %v1576 = vpack.c.b16 %v1512, %v1512
  %v1577 = vpack.c.b16 %v1513, %v1513
  %v1578 = vpack.c.b16 %v1514, %v1514
  %v1579 = vpack.c.b16 %v1515, %v1515
  %v1580 = vpack.c.b16 %v1516, %v1516
  %v1581 = vpack.c.b16 %v1517, %v1517
  %v1582 = vpack.c.b16 %v1518, %v1518
  %v1583 = vpack.c.b16 %v1519, %v1519
  %v1584 = vpack.c.b16 %v1520, %v1520
  %v1585 = vpack.c.b16 %v1521, %v1521
  %v1586 = vpack.c.b16 %v1522, %v1522
  %v1587 = vpack.c.b16 %v1523, %v1523
  %v1588 = vpack.c.b16 %v1524, %v1524
  %v1589 = vpack.c.b16 %v1525, %v1525
  %v1590 = vpack.c.b16 %v1526, %v1526
  %v1591 = vpack.c.b16 %v1527, %v1527
  %v1592 = vpack.c.b16 %v1528, %v1528
  %v1593 = vpack.c.b16 %v1529, %v1529
  %v1594 = vpack.c.b16 %v1530, %v1530
  %v1595 = vpack.c.b16 %v1531, %v1531
  %v1596 = vpack.c.b16 %v1532, %v1532
  %v1597 = vpack.c.b16 %v1533, %v1533
  %v1598 = vpack.c.b16 %v1534, %v1534
  %v1599 = vpack.c.b16 %v1535, %v1535
  %v1600 = vpack.c.b16 %v1536, %v1536
  %v1601 = vpack.c.b16 %v1537, %v1537
  %v1602 = vpack.c.b16 %v1538, %v1538
  %v1603 = vpack.c.b16 %v1539, %v1539
  %v1604 = vpack.c.b16 %v1540, %v1540
  %v1605 = vpack.c.b16 %v1541, %v1541
  %v1606 = vpack.c.b16 %v1542, %v1542
  %v1607 = vpack.c.b16 %v1543, %v1543
  %v1608 = vpack.c.b16 %v1544, %v1544
  %v1609 = vpack.c.b16 %v1545, %v1545
  %v1610 = vpack.c.b16 %v1546, %v1546
  %v1611 = vpack.c.b16 %v1547, %v1547
  %v1612 = vpack.c.b16 %v1548, %v1548
  %v1613 = vpack.c.b16 %v1549, %v1549
  %v1614 = vpack.c.b16 %v1550, %v1550
  %v1615 = vpack.c.b16 %v1551, %v1551
  %v1616 = vpack.c.b16 %v1552, %v1552
  %vm1681 = vcmask 125952
  %1682 = vst.msk [vmem:[%s4] sm:$0xf] %vm1681, %v1553
  %1683 = vst.msk [vmem:[%s4 + $0x4] sm:$0xf] %vm1681, %v1554
  %1684 = vst.msk [vmem:[%s4 + $0x8] sm:$0xf] %vm1681, %v1555
  %1685 = vst.msk [vmem:[%s4 + $0xc] sm:$0xf] %vm1681, %v1556
  %1686 = vst.msk [vmem:[%s4 + $0x10] sm:$0xf] %vm1681, %v1557
  %1687 = vst.msk [vmem:[%s4 + $0x14] sm:$0xf] %vm1681, %v1558
  %1688 = vst.msk [vmem:[%s4 + $0x18] sm:$0xf] %vm1681, %v1559
  %1689 = vst.msk [vmem:[%s4 + $0x1c] sm:$0xf] %vm1681, %v1560
  %1690 = vst.msk [vmem:[%s4 + $0x20] sm:$0xf] %vm1681, %v1561
  %1691 = vst.msk [vmem:[%s4 + $0x24] sm:$0xf] %vm1681, %v1562
  %1692 = vst.msk [vmem:[%s4 + $0x28] sm:$0xf] %vm1681, %v1563
  %1693 = vst.msk [vmem:[%s4 + $0x2c] sm:$0xf] %vm1681, %v1564
  %1694 = vst.msk [vmem:[%s4 + $0x30] sm:$0xf] %vm1681, %v1565
  %1695 = vst.msk [vmem:[%s4 + $0x34] sm:$0xf] %vm1681, %v1566
  %1696 = vst.msk [vmem:[%s4 + $0x38] sm:$0xf] %vm1681, %v1567
  %1697 = vst.msk [vmem:[%s4 + $0x3c] sm:$0xf] %vm1681, %v1568
  %1698 = vst.msk [vmem:[%s4 + $0x40] sm:$0xf] %vm1681, %v1569
  %1699 = vst.msk [vmem:[%s4 + $0x44] sm:$0xf] %vm1681, %v1570
  %1700 = vst.msk [vmem:[%s4 + $0x48] sm:$0xf] %vm1681, %v1571
  %1701 = vst.msk [vmem:[%s4 + $0x4c] sm:$0xf] %vm1681, %v1572
  %1702 = vst.msk [vmem:[%s4 + $0x50] sm:$0xf] %vm1681, %v1573
  %1703 = vst.msk [vmem:[%s4 + $0x54] sm:$0xf] %vm1681, %v1574
  %1704 = vst.msk [vmem:[%s4 + $0x58] sm:$0xf] %vm1681, %v1575
  %1705 = vst.msk [vmem:[%s4 + $0x5c] sm:$0xf] %vm1681, %v1576
  %1706 = vst.msk [vmem:[%s4 + $0x60] sm:$0xf] %vm1681, %v1577
  %1707 = vst.msk [vmem:[%s4 + $0x64] sm:$0xf] %vm1681, %v1578
  %1708 = vst.msk [vmem:[%s4 + $0x68] sm:$0xf] %vm1681, %v1579
  %1709 = vst.msk [vmem:[%s4 + $0x6c] sm:$0xf] %vm1681, %v1580
  %1710 = vst.msk [vmem:[%s4 + $0x70] sm:$0xf] %vm1681, %v1581
  %1711 = vst.msk [vmem:[%s4 + $0x74] sm:$0xf] %vm1681, %v1582
  %1712 = vst.msk [vmem:[%s4 + $0x78] sm:$0xf] %vm1681, %v1583
  %1713 = vst.msk [vmem:[%s4 + $0x7c] sm:$0xf] %vm1681, %v1584
  %1714 = vst.msk [vmem:[%s4 + $0x80] sm:$0xf] %vm1681, %v1585
  %1715 = vst.msk [vmem:[%s4 + $0x84] sm:$0xf] %vm1681, %v1586
  %1716 = vst.msk [vmem:[%s4 + $0x88] sm:$0xf] %vm1681, %v1587
  %1717 = vst.msk [vmem:[%s4 + $0x8c] sm:$0xf] %vm1681, %v1588
  %1718 = vst.msk [vmem:[%s4 + $0x90] sm:$0xf] %vm1681, %v1589
  %1719 = vst.msk [vmem:[%s4 + $0x94] sm:$0xf] %vm1681, %v1590
  %1720 = vst.msk [vmem:[%s4 + $0x98] sm:$0xf] %vm1681, %v1591
  %1721 = vst.msk [vmem:[%s4 + $0x9c] sm:$0xf] %vm1681, %v1592
  %1722 = vst.msk [vmem:[%s4 + $0xa0] sm:$0xf] %vm1681, %v1593
  %1723 = vst.msk [vmem:[%s4 + $0xa4] sm:$0xf] %vm1681, %v1594
  %1724 = vst.msk [vmem:[%s4 + $0xa8] sm:$0xf] %vm1681, %v1595
  %1725 = vst.msk [vmem:[%s4 + $0xac] sm:$0xf] %vm1681, %v1596
  %1726 = vst.msk [vmem:[%s4 + $0xb0] sm:$0xf] %vm1681, %v1597
  %1727 = vst.msk [vmem:[%s4 + $0xb4] sm:$0xf] %vm1681, %v1598
  %1728 = vst.msk [vmem:[%s4 + $0xb8] sm:$0xf] %vm1681, %v1599
  %1729 = vst.msk [vmem:[%s4 + $0xbc] sm:$0xf] %vm1681, %v1600
  %1730 = vst.msk [vmem:[%s4 + $0xc0] sm:$0xf] %vm1681, %v1601
  %1731 = vst.msk [vmem:[%s4 + $0xc4] sm:$0xf] %vm1681, %v1602
  %1732 = vst.msk [vmem:[%s4 + $0xc8] sm:$0xf] %vm1681, %v1603
  %1733 = vst.msk [vmem:[%s4 + $0xcc] sm:$0xf] %vm1681, %v1604
  %1734 = vst.msk [vmem:[%s4 + $0xd0] sm:$0xf] %vm1681, %v1605
  %1735 = vst.msk [vmem:[%s4 + $0xd4] sm:$0xf] %vm1681, %v1606
  %1736 = vst.msk [vmem:[%s4 + $0xd8] sm:$0xf] %vm1681, %v1607
  %1737 = vst.msk [vmem:[%s4 + $0xdc] sm:$0xf] %vm1681, %v1608
  %1738 = vst.msk [vmem:[%s4 + $0xe0] sm:$0xf] %vm1681, %v1609
  %1739 = vst.msk [vmem:[%s4 + $0xe4] sm:$0xf] %vm1681, %v1610
  %1740 = vst.msk [vmem:[%s4 + $0xe8] sm:$0xf] %vm1681, %v1611
  %1741 = vst.msk [vmem:[%s4 + $0xec] sm:$0xf] %vm1681, %v1612
  %1742 = vst.msk [vmem:[%s4 + $0xf0] sm:$0xf] %vm1681, %v1613
  %1743 = vst.msk [vmem:[%s4 + $0xf4] sm:$0xf] %vm1681, %v1614
  %1744 = vst.msk [vmem:[%s4 + $0xf8] sm:$0xf] %vm1681, %v1615
  %1745 = vst.msk [vmem:[%s4 + $0xfc] sm:$0xf] %vm1681, %v1616
  // Predicated region
  $region18: #{discriminator_forward.5} parent=0 // pred_check
    _
  $region19: #{discriminator_forward.5} parent=0 // pred_check_branch
    %1747 = sbr.rel (0) target = $region21
  $region20: #{discriminator_forward.5} parent=0 // pred_region
    _
  $region21: #{discriminator_forward.5} parent=0 // pred_fallthru
    _
  // Predicated region
  $region22: #{discriminator_forward.5} parent=0 // pred_check
    _
  $region23: #{discriminator_forward.5} parent=0 // pred_check_branch
    %1749 = sbr.rel (0) target = $region25
  $region24: #{discriminator_forward.5} parent=0 // pred_region
    _
  $region25: #{discriminator_forward.5} parent=0 // pred_fallthru
    _

// kernel: discriminator_forward.6
$region0: #{discriminator_forward.6}
  #allocation0 [shape = 'u32[]', space=smem, size = 0x4, offset = 0x4, fixed_abs, tag = 'smem constant byte address 0x4 - core index']
  #allocation1 [shape = 'u32[144,128]{1,0:T(1,128)}', space=vmem, size = 0x12000, scoped, tag = 'internal scratch']
  %s0 = inlined_call_operand.vmem [shape: bf16[128,256], index: 0, kind: input, shape index: {}]
  %s1 = inlined_call_operand.vmem [shape: bf16[256,32], index: 1, kind: input, shape index: {}]
  %s2 = inlined_call_operand.vmem [shape: f32[1,32], index: 2, kind: input, shape index: {}]
  %s3 = inlined_call_operand.vmem [shape: f32[1,32], index: 3, kind: input, shape index: {}]
  %s4 = inlined_call_operand.vmem [shape: bf16[128,32], index: 4, kind: output, shape index: {}]
  %s5 = sld [smem:[#allocation0]]
  $region26: #{discriminator_forward.6} parent=0
    _
  %s7 = ssub.s32 1, %s5
  %s8 = scalar_select 0, %s7, %s5
  // Predicated region
  $region2: #{discriminator_forward.6} parent=0 // pred_check
    _
  $region3: #{discriminator_forward.6} parent=0 // pred_check_branch
    %10 = sbr.rel (0) target = $region5
  $region4: #{discriminator_forward.6} parent=0 // pred_region
    _
  $region5: #{discriminator_forward.6} parent=0 // pred_fallthru
    _
  // Predicated region
  $region6: #{discriminator_forward.6} parent=0 // pred_check
    _
  $region7: #{discriminator_forward.6} parent=0 // pred_check_branch
    %12 = sbr.rel (0) target = $region9
  $region8: #{discriminator_forward.6} parent=0 // pred_region
    _
  $region9: #{discriminator_forward.6} parent=0 // pred_fallthru
    _
  // Predicated region
  $region10: #{discriminator_forward.6} parent=0 // pred_check
    _
  $region11: #{discriminator_forward.6} parent=0 // pred_check_branch
    %14 = sbr.rel (0) target = $region13
  $region12: #{discriminator_forward.6} parent=0 // pred_region
    _
  $region13: #{discriminator_forward.6} parent=0 // pred_fallthru
    _
  // Predicated region
  $region14: #{discriminator_forward.6} parent=0 // pred_check
    _
  $region15: #{discriminator_forward.6} parent=0 // pred_check_branch
    %16 = sbr.rel (0) target = $region17
  $region16: #{discriminator_forward.6} parent=0 // pred_region
    _
  $region17: #{discriminator_forward.6} parent=0 // pred_fallthru
    _
  %v18 = vld [vmem:[%s0] sm:$0xff]
  %v19 = vld [vmem:[%s0 + $0x8] sm:$0xff]
  %v20 = vld [vmem:[%s0 + $0x10] sm:$0xff]
  %v21 = vld [vmem:[%s0 + $0x18] sm:$0xff]
  %v22 = vld [vmem:[%s0 + $0x20] sm:$0xff]
  %v23 = vld [vmem:[%s0 + $0x28] sm:$0xff]
  %v24 = vld [vmem:[%s0 + $0x30] sm:$0xff]
  %v25 = vld [vmem:[%s0 + $0x38] sm:$0xff]
  %v26 = vld [vmem:[%s0 + $0x40] sm:$0xff]
  %v27 = vld [vmem:[%s0 + $0x48] sm:$0xff]
  %v28 = vld [vmem:[%s0 + $0x50] sm:$0xff]
  %v29 = vld [vmem:[%s0 + $0x58] sm:$0xff]
  %v30 = vld [vmem:[%s0 + $0x60] sm:$0xff]
  %v31 = vld [vmem:[%s0 + $0x68] sm:$0xff]
  %v32 = vld [vmem:[%s0 + $0x70] sm:$0xff]
  %v33 = vld [vmem:[%s0 + $0x78] sm:$0xff]
  %v34 = vld [vmem:[%s1] sm:$0xf]
  %v35 = vld [vmem:[%s1 + $0x4] sm:$0xf]
  %v36 = vld [vmem:[%s1 + $0x8] sm:$0xf]
  %v37 = vld [vmem:[%s1 + $0xc] sm:$0xf]
  %v38 = vld [vmem:[%s1 + $0x10] sm:$0xf]
  %v39 = vld [vmem:[%s1 + $0x14] sm:$0xf]
  %v40 = vld [vmem:[%s1 + $0x18] sm:$0xf]
  %v41 = vld [vmem:[%s1 + $0x1c] sm:$0xf]
  %v42 = vld [vmem:[%s1 + $0x20] sm:$0xf]
  %v43 = vld [vmem:[%s1 + $0x24] sm:$0xf]
  %v44 = vld [vmem:[%s1 + $0x28] sm:$0xf]
  %v45 = vld [vmem:[%s1 + $0x2c] sm:$0xf]
  %v46 = vld [vmem:[%s1 + $0x30] sm:$0xf]
  %v47 = vld [vmem:[%s1 + $0x34] sm:$0xf]
  %v48 = vld [vmem:[%s1 + $0x38] sm:$0xf]
  %v49 = vld [vmem:[%s1 + $0x3c] sm:$0xf]
  %v50 = vld [vmem:[%s1 + $0x40] sm:$0xf]
  %v51 = vld [vmem:[%s1 + $0x44] sm:$0xf]
  %v52 = vld [vmem:[%s1 + $0x48] sm:$0xf]
  %v53 = vld [vmem:[%s1 + $0x4c] sm:$0xf]
  %v54 = vld [vmem:[%s1 + $0x50] sm:$0xf]
  %v55 = vld [vmem:[%s1 + $0x54] sm:$0xf]
  %v56 = vld [vmem:[%s1 + $0x58] sm:$0xf]
  %v57 = vld [vmem:[%s1 + $0x5c] sm:$0xf]
  %v58 = vld [vmem:[%s1 + $0x60] sm:$0xf]
  %v59 = vld [vmem:[%s1 + $0x64] sm:$0xf]
  %v60 = vld [vmem:[%s1 + $0x68] sm:$0xf]
  %v61 = vld [vmem:[%s1 + $0x6c] sm:$0xf]
  %v62 = vld [vmem:[%s1 + $0x70] sm:$0xf]
  %v63 = vld [vmem:[%s1 + $0x74] sm:$0xf]
  %v64 = vld [vmem:[%s1 + $0x78] sm:$0xf]
  %v65 = vld [vmem:[%s1 + $0x7c] sm:$0xf]
  %v82 = vunpack.c.l.b16 %v18
  %v83 = vunpack.c.h.b16 %v18
  %v84 = vunpack.c.l.b16 %v19
  %v85 = vunpack.c.h.b16 %v19
  %v86 = vunpack.c.l.b16 %v20
  %v87 = vunpack.c.h.b16 %v20
  %v88 = vunpack.c.l.b16 %v21
  %v89 = vunpack.c.h.b16 %v21
  %v90 = vunpack.c.l.b16 %v22
  %v91 = vunpack.c.h.b16 %v22
  %v92 = vunpack.c.l.b16 %v23
  %v93 = vunpack.c.h.b16 %v23
  %v94 = vunpack.c.l.b16 %v24
  %v95 = vunpack.c.h.b16 %v24
  %v96 = vunpack.c.l.b16 %v25
  %v97 = vunpack.c.h.b16 %v25
  %v98 = vunpack.c.l.b16 %v26
  %v99 = vunpack.c.h.b16 %v26
  %v100 = vunpack.c.l.b16 %v27
  %v101 = vunpack.c.h.b16 %v27
  %v102 = vunpack.c.l.b16 %v28
  %v103 = vunpack.c.h.b16 %v28
  %v104 = vunpack.c.l.b16 %v29
  %v105 = vunpack.c.h.b16 %v29
  %v106 = vunpack.c.l.b16 %v30
  %v107 = vunpack.c.h.b16 %v30
  %v108 = vunpack.c.l.b16 %v31
  %v109 = vunpack.c.h.b16 %v31
  %v110 = vunpack.c.l.b16 %v32
  %v111 = vunpack.c.h.b16 %v32
  %v112 = vunpack.c.l.b16 %v33
  %v113 = vunpack.c.h.b16 %v33
  %v114 = vpack.c.b16 %v84, %v82
  %v115 = vpack.c.b16 %v85, %v83
  %v116 = vpack.c.b16 %v88, %v86
  %v117 = vpack.c.b16 %v89, %v87
  %v118 = vpack.c.b16 %v92, %v90
  %v119 = vpack.c.b16 %v93, %v91
  %v120 = vpack.c.b16 %v96, %v94
  %v121 = vpack.c.b16 %v97, %v95
  %v122 = vpack.c.b16 %v100, %v98
  %v123 = vpack.c.b16 %v101, %v99
  %v124 = vpack.c.b16 %v104, %v102
  %v125 = vpack.c.b16 %v105, %v103
  %v126 = vpack.c.b16 %v108, %v106
  %v127 = vpack.c.b16 %v109, %v107
  %v128 = vpack.c.b16 %v112, %v110
  %v129 = vpack.c.b16 %v113, %v111
  %v178 = vunpack.c.l.b16 %v34
  %v179 = vunpack.c.l.b16 %v35
  %v180 = vunpack.c.l.b16 %v36
  %v181 = vunpack.c.l.b16 %v37
  %v182 = vunpack.c.l.b16 %v38
  %v183 = vunpack.c.l.b16 %v39
  %v184 = vunpack.c.l.b16 %v40
  %v185 = vunpack.c.l.b16 %v41
  %v186 = vunpack.c.l.b16 %v42
  %v187 = vunpack.c.l.b16 %v43
  %v188 = vunpack.c.l.b16 %v44
  %v189 = vunpack.c.l.b16 %v45
  %v190 = vunpack.c.l.b16 %v46
  %v191 = vunpack.c.l.b16 %v47
  %v192 = vunpack.c.l.b16 %v48
  %v193 = vunpack.c.l.b16 %v49
  %v194 = vunpack.c.l.b16 %v50
  %v195 = vunpack.c.l.b16 %v51
  %v196 = vunpack.c.l.b16 %v52
  %v197 = vunpack.c.l.b16 %v53
  %v198 = vunpack.c.l.b16 %v54
  %v199 = vunpack.c.l.b16 %v55
  %v200 = vunpack.c.l.b16 %v56
  %v201 = vunpack.c.l.b16 %v57
  %v202 = vunpack.c.l.b16 %v58
  %v203 = vunpack.c.l.b16 %v59
  %v204 = vunpack.c.l.b16 %v60
  %v205 = vunpack.c.l.b16 %v61
  %v206 = vunpack.c.l.b16 %v62
  %v207 = vunpack.c.l.b16 %v63
  %v208 = vunpack.c.l.b16 %v64
  %v209 = vunpack.c.l.b16 %v65
  %v210 = vpack.c.b16 %v179, %v178
  %v211 = vpack.c.b16 %v181, %v180
  %v212 = vpack.c.b16 %v183, %v182
  %v213 = vpack.c.b16 %v185, %v184
  %v214 = vpack.c.b16 %v187, %v186
  %v215 = vpack.c.b16 %v189, %v188
  %v216 = vpack.c.b16 %v191, %v190
  %v217 = vpack.c.b16 %v193, %v192
  %v218 = vpack.c.b16 %v195, %v194
  %v219 = vpack.c.b16 %v197, %v196
  %v220 = vpack.c.b16 %v199, %v198
  %v221 = vpack.c.b16 %v201, %v200
  %v222 = vpack.c.b16 %v203, %v202
  %v223 = vpack.c.b16 %v205, %v204
  %v224 = vpack.c.b16 %v207, %v206
  %v225 = vpack.c.b16 %v209, %v208
  %242 = vmatprep.subr.bf16.mxu0 0
  %243 = vmatpush1.bf16.msra.mxu0 %v210
  %244 = vmatprep.subr.bf16.mxu0 0
  %245 = vmatpush1.bf16.msra.mxu0 %v211
  %246 = vmatprep.subr.bf16.mxu0 0
  %247 = vmatpush1.bf16.msra.mxu0 %v212
  %248 = vmatprep.subr.bf16.mxu0 0
  %249 = vmatpush1.bf16.msra.mxu0 %v213
  %250 = vmatprep.subr.bf16.mxu0 0
  %251 = vmatpush1.bf16.msra.mxu0 %v214
  %252 = vmatprep.subr.bf16.mxu0 0
  %253 = vmatpush1.bf16.msra.mxu0 %v215
  %254 = vmatprep.subr.bf16.mxu0 0
  %255 = vmatpush1.bf16.msra.mxu0 %v216
  %256 = vmatprep.subr.bf16.mxu0 0
  %257 = vmatpush1.bf16.msra.mxu0 %v217
  %258 = vmatprep.subr.bf16.mxu0 0
  %259 = vmatpush1.bf16.msra.mxu0 %v218
  %260 = vmatprep.subr.bf16.mxu0 0
  %261 = vmatpush1.bf16.msra.mxu0 %v219
  %262 = vmatprep.subr.bf16.mxu0 0
  %263 = vmatpush1.bf16.msra.mxu0 %v220
  %264 = vmatprep.subr.bf16.mxu0 0
  %265 = vmatpush1.bf16.msra.mxu0 %v221
  %266 = vmatprep.subr.bf16.mxu0 0
  %267 = vmatpush1.bf16.msra.mxu0 %v222
  %268 = vmatprep.subr.bf16.mxu0 0
  %269 = vmatpush1.bf16.msra.mxu0 %v223
  %270 = vmatprep.subr.bf16.mxu0 0
  %271 = vmatpush1.bf16.msra.mxu0 %v224
  %272 = vmatprep.subr.bf16.mxu0 0
  %273 = vmatpush1.bf16.msra.mxu0 %v225
  %274 = vmatprep.mubr.bf16.mxu0 %v115
  %275 = vmatmul.mubr.bf16.gmra.mrb[0].mxu0 %v114
  %v276 = vpop.f32.mrb[0].mxu0
  %v277 = vadd.f32 0.0, %v276
  %v278 = vpop.f32.mrb[0].mxu0
  %v279 = vpop.f32.mrb[0].mxu0
  %v280 = vadd.f32 0.0, %v279
  %v281 = vpop.f32.mrb[0].mxu0
  %282 = vmatprep.mubr.bf16.mxu0 %v117
  %283 = vmatmul.mubr.bf16.gmra.mrb[0].mxu0 %v116
  %v284 = vpop.f32.mrb[0].mxu0
  %v285 = vadd.f32 0.0, %v284
  %v286 = vpop.f32.mrb[0].mxu0
  %v287 = vpop.f32.mrb[0].mxu0
  %v288 = vadd.f32 0.0, %v287
  %v289 = vpop.f32.mrb[0].mxu0
  %290 = vmatprep.mubr.bf16.mxu0 %v119
  %291 = vmatmul.mubr.bf16.gmra.mrb[0].mxu0 %v118
  %v292 = vpop.f32.mrb[0].mxu0
  %v293 = vadd.f32 0.0, %v292
  %v294 = vpop.f32.mrb[0].mxu0
  %v295 = vpop.f32.mrb[0].mxu0
  %v296 = vadd.f32 0.0, %v295
  %v297 = vpop.f32.mrb[0].mxu0
  %298 = vmatprep.mubr.bf16.mxu0 %v121
  %299 = vmatmul.mubr.bf16.gmra.mrb[0].mxu0 %v120
  %v300 = vpop.f32.mrb[0].mxu0
  %v301 = vadd.f32 0.0, %v300
  %v302 = vpop.f32.mrb[0].mxu0
  %v303 = vpop.f32.mrb[0].mxu0
  %v304 = vadd.f32 0.0, %v303
  %v305 = vpop.f32.mrb[0].mxu0
  %306 = vmatprep.mubr.bf16.mxu0 %v123
  %307 = vmatmul.mubr.bf16.gmra.mrb[0].mxu0 %v122
  %v308 = vpop.f32.mrb[0].mxu0
  %v309 = vadd.f32 0.0, %v308
  %v310 = vpop.f32.mrb[0].mxu0
  %v311 = vpop.f32.mrb[0].mxu0
  %v312 = vadd.f32 0.0, %v311
  %v313 = vpop.f32.mrb[0].mxu0
  %314 = vmatprep.mubr.bf16.mxu0 %v125
  %315 = vmatmul.mubr.bf16.gmra.mrb[0].mxu0 %v124
  %v316 = vpop.f32.mrb[0].mxu0
  %v317 = vadd.f32 0.0, %v316
  %v318 = vpop.f32.mrb[0].mxu0
  %v319 = vpop.f32.mrb[0].mxu0
  %v320 = vadd.f32 0.0, %v319
  %v321 = vpop.f32.mrb[0].mxu0
  %322 = vmatprep.mubr.bf16.mxu0 %v127
  %323 = vmatmul.mubr.bf16.gmra.mrb[0].mxu0 %v126
  %v324 = vpop.f32.mrb[0].mxu0
  %v325 = vadd.f32 0.0, %v324
  %v326 = vpop.f32.mrb[0].mxu0
  %v327 = vpop.f32.mrb[0].mxu0
  %v328 = vadd.f32 0.0, %v327
  %v329 = vpop.f32.mrb[0].mxu0
  %330 = vmatprep.mubr.bf16.mxu0 %v129
  %331 = vmatmul.mubr.bf16.gmra.mrb[0].mxu0 %v128
  %v332 = vpop.f32.mrb[0].mxu0
  %v333 = vadd.f32 0.0, %v332
  %v334 = vpop.f32.mrb[0].mxu0
  %v335 = vpop.f32.mrb[0].mxu0
  %v336 = vadd.f32 0.0, %v335
  %v337 = vpop.f32.mrb[0].mxu0
  %338 = vdwg.mxu0
  %vm339 = vcmask 261120
  %v340 = vsel %vm339, %v277, 0.0
  %v341 = vsel %vm339, %v280, 0.0
  %v342 = vadd.f32 %v340, %v341
  %v343 = vsel %vm339, %v285, 0.0
  %v344 = vadd.f32 %v342, %v343
  %v345 = vsel %vm339, %v288, 0.0
  %v346 = vadd.f32 %v344, %v345
  %v347 = vsel %vm339, %v293, 0.0
  %v348 = vadd.f32 %v346, %v347
  %v349 = vsel %vm339, %v296, 0.0
  %v350 = vadd.f32 %v348, %v349
  %v351 = vsel %vm339, %v301, 0.0
  %v352 = vadd.f32 %v350, %v351
  %v353 = vsel %vm339, %v304, 0.0
  %v354 = vadd.f32 %v352, %v353
  %v355 = vsel %vm339, %v309, 0.0
  %v356 = vadd.f32 %v354, %v355
  %v357 = vsel %vm339, %v312, 0.0
  %v358 = vadd.f32 %v356, %v357
  %v359 = vsel %vm339, %v317, 0.0
  %v360 = vadd.f32 %v358, %v359
  %v361 = vsel %vm339, %v320, 0.0
  %v362 = vadd.f32 %v360, %v361
  %v363 = vsel %vm339, %v325, 0.0
  %v364 = vadd.f32 %v362, %v363
  %v365 = vsel %vm339, %v328, 0.0
  %v366 = vadd.f32 %v364, %v365
  %v367 = vsel %vm339, %v333, 0.0
  %v368 = vadd.f32 %v366, %v367
  %v369 = vsel %vm339, %v336, 0.0
  %v370 = vadd.f32 %v368, %v369
  %v371 = vrot.slane %v370, 4
  %v372 = vadd.f32 %v370, %v371
  %v373 = vrot.slane %v372, 2
  %v374 = vadd.f32 %v372, %v373
  %v375 = vrot.slane %v374, 1
  %v376 = vadd.f32 %v374, %v375
  %v377 = vrcp.pop 128.0
  %v378 = vmul.f32 %v376, %v377
  %v379 = vsub.f32 %v277, %v378
  %v380 = vsub.f32 %v280, %v378
  %v381 = vsub.f32 %v285, %v378
  %v382 = vsub.f32 %v288, %v378
  %v383 = vsub.f32 %v293, %v378
  %v384 = vsub.f32 %v296, %v378
  %v385 = vsub.f32 %v301, %v378
  %v386 = vsub.f32 %v304, %v378
  %v387 = vsub.f32 %v309, %v378
  %v388 = vsub.f32 %v312, %v378
  %v389 = vsub.f32 %v317, %v378
  %v390 = vsub.f32 %v320, %v378
  %v391 = vsub.f32 %v325, %v378
  %v392 = vsub.f32 %v328, %v378
  %v393 = vsub.f32 %v333, %v378
  %v394 = vsub.f32 %v336, %v378
  %v395 = vmul.f32 %v379, %v379
  %v396 = vmul.f32 %v380, %v380
  %v397 = vmul.f32 %v381, %v381
  %v398 = vmul.f32 %v382, %v382
  %v399 = vmul.f32 %v383, %v383
  %v400 = vmul.f32 %v384, %v384
  %v401 = vmul.f32 %v385, %v385
  %v402 = vmul.f32 %v386, %v386
  %v403 = vmul.f32 %v387, %v387
  %v404 = vmul.f32 %v388, %v388
  %v405 = vmul.f32 %v389, %v389
  %v406 = vmul.f32 %v390, %v390
  %v407 = vmul.f32 %v391, %v391
  %v408 = vmul.f32 %v392, %v392
  %v409 = vmul.f32 %v393, %v393
  %v410 = vmul.f32 %v394, %v394
  %v411 = vsel %vm339, %v395, 0.0
  %v412 = vsel %vm339, %v396, 0.0
  %v413 = vadd.f32 %v411, %v412
  %v414 = vsel %vm339, %v397, 0.0
  %v415 = vadd.f32 %v413, %v414
  %v416 = vsel %vm339, %v398, 0.0
  %v417 = vadd.f32 %v415, %v416
  %v418 = vsel %vm339, %v399, 0.0
  %v419 = vadd.f32 %v417, %v418
  %v420 = vsel %vm339, %v400, 0.0
  %v421 = vadd.f32 %v419, %v420
  %v422 = vsel %vm339, %v401, 0.0
  %v423 = vadd.f32 %v421, %v422
  %v424 = vsel %vm339, %v402, 0.0
  %v425 = vadd.f32 %v423, %v424
  %v426 = vsel %vm339, %v403, 0.0
  %v427 = vadd.f32 %v425, %v426
  %v428 = vsel %vm339, %v404, 0.0
  %v429 = vadd.f32 %v427, %v428
  %v430 = vsel %vm339, %v405, 0.0
  %v431 = vadd.f32 %v429, %v430
  %v432 = vsel %vm339, %v406, 0.0
  %v433 = vadd.f32 %v431, %v432
  %v434 = vsel %vm339, %v407, 0.0
  %v435 = vadd.f32 %v433, %v434
  %v436 = vsel %vm339, %v408, 0.0
  %v437 = vadd.f32 %v435, %v436
  %v438 = vsel %vm339, %v409, 0.0
  %v439 = vadd.f32 %v437, %v438
  %v440 = vsel %vm339, %v410, 0.0
  %v441 = vadd.f32 %v439, %v440
  %v442 = vrot.slane %v441, 4
  %v443 = vadd.f32 %v441, %v442
  %v444 = vrot.slane %v443, 2
  %v445 = vadd.f32 %v443, %v444
  %v446 = vrot.slane %v445, 1
  %v447 = vadd.f32 %v445, %v446
  %v448 = vmul.f32 %v447, %v377
  %v449 = vadd.f32 %v448, 1e-05
  %v450 = vrsqrt.pop %v449
  %v451 = vmul.f32 %v379, %v450
  %v452 = vmul.f32 %v380, %v450
  %v453 = vmul.f32 %v381, %v450
  %v454 = vmul.f32 %v382, %v450
  %v455 = vmul.f32 %v383, %v450
  %v456 = vmul.f32 %v384, %v450
  %v457 = vmul.f32 %v385, %v450
  %v458 = vmul.f32 %v386, %v450
  %v459 = vmul.f32 %v387, %v450
  %v460 = vmul.f32 %v388, %v450
  %v461 = vmul.f32 %v389, %v450
  %v462 = vmul.f32 %v390, %v450
  %v463 = vmul.f32 %v391, %v450
  %v464 = vmul.f32 %v392, %v450
  %v465 = vmul.f32 %v393, %v450
  %v466 = vmul.f32 %v394, %v450
  %v467 = vld [vmem:[%s2] sm:$0x1]
  %v469 = vlaneseq
  %v470 = vshrl.u32 %v469, 7
  %v471 = vsub.s32 0, %v470
  %v472 = vrot.slane %v467, %v471
  %v474 = vmul.f32 %v451, %v472
  %v475 = vmul.f32 %v452, %v472
  %v476 = vmul.f32 %v453, %v472
  %v477 = vmul.f32 %v454, %v472
  %v478 = vmul.f32 %v455, %v472
  %v479 = vmul.f32 %v456, %v472
  %v480 = vmul.f32 %v457, %v472
  %v481 = vmul.f32 %v458, %v472
  %v482 = vmul.f32 %v459, %v472
  %v483 = vmul.f32 %v460, %v472
  %v484 = vmul.f32 %v461, %v472
  %v485 = vmul.f32 %v462, %v472
  %v486 = vmul.f32 %v463, %v472
  %v487 = vmul.f32 %v464, %v472
  %v488 = vmul.f32 %v465, %v472
  %v489 = vmul.f32 %v466, %v472
  %v490 = vld [vmem:[%s3] sm:$0x1]
  %v492 = vlaneseq
  %v493 = vshrl.u32 %v492, 7
  %v494 = vsub.s32 0, %v493
  %v495 = vrot.slane %v490, %v494
  %v497 = vadd.f32 %v474, %v495
  %v498 = vadd.f32 %v475, %v495
  %v499 = vadd.f32 %v476, %v495
  %v500 = vadd.f32 %v477, %v495
  %v501 = vadd.f32 %v478, %v495
  %v502 = vadd.f32 %v479, %v495
  %v503 = vadd.f32 %v480, %v495
  %v504 = vadd.f32 %v481, %v495
  %v505 = vadd.f32 %v482, %v495
  %v506 = vadd.f32 %v483, %v495
  %v507 = vadd.f32 %v484, %v495
  %v508 = vadd.f32 %v485, %v495
  %v509 = vadd.f32 %v486, %v495
  %v510 = vadd.f32 %v487, %v495
  %v511 = vadd.f32 %v488, %v495
  %v512 = vadd.f32 %v489, %v495
  %vm513 = vcmp.ge.f32.partialorder %v497, 0.0
  %vm514 = vcmp.ge.f32.partialorder %v498, 0.0
  %vm515 = vcmp.ge.f32.partialorder %v499, 0.0
  %vm516 = vcmp.ge.f32.partialorder %v500, 0.0
  %vm517 = vcmp.ge.f32.partialorder %v501, 0.0
  %vm518 = vcmp.ge.f32.partialorder %v502, 0.0
  %vm519 = vcmp.ge.f32.partialorder %v503, 0.0
  %vm520 = vcmp.ge.f32.partialorder %v504, 0.0
  %vm521 = vcmp.ge.f32.partialorder %v505, 0.0
  %vm522 = vcmp.ge.f32.partialorder %v506, 0.0
  %vm523 = vcmp.ge.f32.partialorder %v507, 0.0
  %vm524 = vcmp.ge.f32.partialorder %v508, 0.0
  %vm525 = vcmp.ge.f32.partialorder %v509, 0.0
  %vm526 = vcmp.ge.f32.partialorder %v510, 0.0
  %vm527 = vcmp.ge.f32.partialorder %v511, 0.0
  %vm528 = vcmp.ge.f32.partialorder %v512, 0.0
  %v529 = vmul.f32 %v497, 0.2
  %v530 = vmul.f32 %v498, 0.2
  %v531 = vmul.f32 %v499, 0.2
  %v532 = vmul.f32 %v500, 0.2
  %v533 = vmul.f32 %v501, 0.2
  %v534 = vmul.f32 %v502, 0.2
  %v535 = vmul.f32 %v503, 0.2
  %v536 = vmul.f32 %v504, 0.2
  %v537 = vmul.f32 %v505, 0.2
  %v538 = vmul.f32 %v506, 0.2
  %v539 = vmul.f32 %v507, 0.2
  %v540 = vmul.f32 %v508, 0.2
  %v541 = vmul.f32 %v509, 0.2
  %v542 = vmul.f32 %v510, 0.2
  %v543 = vmul.f32 %v511, 0.2
  %v544 = vmul.f32 %v512, 0.2
  %v545 = vsel %vm513, %v497, %v529
  %v546 = vsel %vm514, %v498, %v530
  %v547 = vsel %vm515, %v499, %v531
  %v548 = vsel %vm516, %v500, %v532
  %v549 = vsel %vm517, %v501, %v533
  %v550 = vsel %vm518, %v502, %v534
  %v551 = vsel %vm519, %v503, %v535
  %v552 = vsel %vm520, %v504, %v536
  %v553 = vsel %vm521, %v505, %v537
  %v554 = vsel %vm522, %v506, %v538
  %v555 = vsel %vm523, %v507, %v539
  %v556 = vsel %vm524, %v508, %v540
  %v557 = vsel %vm525, %v509, %v541
  %v558 = vsel %vm526, %v510, %v542
  %v559 = vsel %vm527, %v511, %v543
  %v560 = vsel %vm528, %v512, %v544
  %v561 = vpack.c.bf16 %v546, %v545
  %v562 = vpack.c.bf16 %v548, %v547
  %v563 = vpack.c.bf16 %v550, %v549
  %v564 = vpack.c.bf16 %v552, %v551
  %v565 = vpack.c.bf16 %v554, %v553
  %v566 = vpack.c.bf16 %v556, %v555
  %v567 = vpack.c.bf16 %v558, %v557
  %v568 = vpack.c.bf16 %v560, %v559
  %v577 = vunpack.c.l.b16 %v561
  %v578 = vunpack.c.h.b16 %v561
  %v579 = vunpack.c.l.b16 %v562
  %v580 = vunpack.c.h.b16 %v562
  %v581 = vunpack.c.l.b16 %v563
  %v582 = vunpack.c.h.b16 %v563
  %v583 = vunpack.c.l.b16 %v564
  %v584 = vunpack.c.h.b16 %v564
  %v585 = vunpack.c.l.b16 %v565
  %v586 = vunpack.c.h.b16 %v565
  %v587 = vunpack.c.l.b16 %v566
  %v588 = vunpack.c.h.b16 %v566
  %v589 = vunpack.c.l.b16 %v567
  %v590 = vunpack.c.h.b16 %v567
  %v591 = vunpack.c.l.b16 %v568
  %v592 = vunpack.c.h.b16 %v568
  %v593 = vpack.c.b16 %v577, %v577
  %v594 = vpack.c.b16 %v578, %v578
  %v595 = vpack.c.b16 %v579, %v579
  %v596 = vpack.c.b16 %v580, %v580
  %v597 = vpack.c.b16 %v581, %v581
  %v598 = vpack.c.b16 %v582, %v582
  %v599 = vpack.c.b16 %v583, %v583
  %v600 = vpack.c.b16 %v584, %v584
  %v601 = vpack.c.b16 %v585, %v585
  %v602 = vpack.c.b16 %v586, %v586
  %v603 = vpack.c.b16 %v587, %v587
  %v604 = vpack.c.b16 %v588, %v588
  %v605 = vpack.c.b16 %v589, %v589
  %v606 = vpack.c.b16 %v590, %v590
  %v607 = vpack.c.b16 %v591, %v591
  %v608 = vpack.c.b16 %v592, %v592
  %vm625 = vcmask 257024
  %626 = vst.msk [vmem:[%s4] sm:$0xf] %vm625, %v593
  %627 = vst.msk [vmem:[%s4 + $0x4] sm:$0xf] %vm625, %v594
  %628 = vst.msk [vmem:[%s4 + $0x8] sm:$0xf] %vm625, %v595
  %629 = vst.msk [vmem:[%s4 + $0xc] sm:$0xf] %vm625, %v596
  %630 = vst.msk [vmem:[%s4 + $0x10] sm:$0xf] %vm625, %v597
  %631 = vst.msk [vmem:[%s4 + $0x14] sm:$0xf] %vm625, %v598
  %632 = vst.msk [vmem:[%s4 + $0x18] sm:$0xf] %vm625, %v599
  %633 = vst.msk [vmem:[%s4 + $0x1c] sm:$0xf] %vm625, %v600
  %634 = vst.msk [vmem:[%s4 + $0x20] sm:$0xf] %vm625, %v601
  %635 = vst.msk [vmem:[%s4 + $0x24] sm:$0xf] %vm625, %v602
  %636 = vst.msk [vmem:[%s4 + $0x28] sm:$0xf] %vm625, %v603
  %637 = vst.msk [vmem:[%s4 + $0x2c] sm:$0xf] %vm625, %v604
  %638 = vst.msk [vmem:[%s4 + $0x30] sm:$0xf] %vm625, %v605
  %639 = vst.msk [vmem:[%s4 + $0x34] sm:$0xf] %vm625, %v606
  %640 = vst.msk [vmem:[%s4 + $0x38] sm:$0xf] %vm625, %v607
  %641 = vst.msk [vmem:[%s4 + $0x3c] sm:$0xf] %vm625, %v608
  // Predicated region
  $region18: #{discriminator_forward.6} parent=0 // pred_check
    _
  $region19: #{discriminator_forward.6} parent=0 // pred_check_branch
    %643 = sbr.rel (0) target = $region21
  $region20: #{discriminator_forward.6} parent=0 // pred_region
    _
  $region21: #{discriminator_forward.6} parent=0 // pred_fallthru
    _
  // Predicated region
  $region22: #{discriminator_forward.6} parent=0 // pred_check
    _
  $region23: #{discriminator_forward.6} parent=0 // pred_check_branch
    %645 = sbr.rel (0) target = $region25
  $region24: #{discriminator_forward.6} parent=0 // pred_region
    _
  $region25: #{discriminator_forward.6} parent=0 // pred_fallthru
    _

// kernel: discriminator_forward.7
$region0: #{discriminator_forward.7}
  #allocation0 [shape = 'u32[]', space=smem, size = 0x4, offset = 0x4, fixed_abs, tag = 'smem constant byte address 0x4 - core index']
  #allocation1 [shape = 'u32[144,128]{1,0:T(1,128)}', space=vmem, size = 0x12000, scoped, tag = 'internal scratch']
  %s0 = inlined_call_operand.vmem [shape: bf16[32,512], index: 0, kind: input, shape index: {}]
  %s1 = inlined_call_operand.vmem [shape: bf16[512,64], index: 1, kind: input, shape index: {}]
  %s2 = inlined_call_operand.vmem [shape: f32[1,64], index: 2, kind: input, shape index: {}]
  %s3 = inlined_call_operand.vmem [shape: f32[1,64], index: 3, kind: input, shape index: {}]
  %s4 = inlined_call_operand.vmem [shape: bf16[2,32], index: 4, kind: input, shape index: {}]
  %s5 = inlined_call_operand.vmem [shape: bf16[32,16], index: 5, kind: input, shape index: {}]
  %s6 = inlined_call_operand.vmem [shape: f32[1,16], index: 6, kind: input, shape index: {}]
  %s7 = inlined_call_operand.vmem [shape: f32[1,16], index: 7, kind: input, shape index: {}]
  %s8 = inlined_call_operand.vmem [shape: f32[1,16], index: 8, kind: input, shape index: {}]
  %s9 = inlined_call_operand.vmem [shape: f32[32,64], index: 9, kind: input, shape index: {}]
  %s10 = inlined_call_operand.vmem [shape: f32[1,16], index: 10, kind: input, shape index: {}]
  %s11 = inlined_call_operand.vmem [shape: f32[2,32], index: 11, kind: input, shape index: {}]
  %s12 = inlined_call_operand.hbm [shape: f32[32,64], index: 12, kind: output, shape index: {0}]
  %s13 = inlined_call_operand.vmem [shape: f32[2,1], index: 13, kind: output, shape index: {1}]
  %14 = xla_tuple %s12, %s13
  %s15 = sld [smem:[#allocation0]]
  $region66: #{discriminator_forward.7} parent=0
    _
  %s17 = ssub.s32 1, %s15
  %s18 = scalar_select 0, %s17, %s15
  $region1: #{discriminator_forward.7} parent=0
    #allocation2 [shape = 'u8[16384]{0}', space=vmem, size = 0x4000, scoped, tag = 'output window, operand 0, single buffered']
    #allocation3 [shape = 's32[1]{0}', space=sflag, size = 0x4, scoped, tag = 'scoped memory for discriminator_forward.7']
    %19 = vsyncpa [#allocation3], 0
    // Predicated region
    $region2: #{discriminator_forward.7} parent=1 // pred_check
      _
    $region3: #{discriminator_forward.7} parent=1 // pred_check_branch
      %21 = sbr.rel (0) target = $region5
    $region4: #{discriminator_forward.7} parent=1 // pred_region
      _
    $region5: #{discriminator_forward.7} parent=1 // pred_fallthru
      _
    // Predicated region
    $region6: #{discriminator_forward.7} parent=1 // pred_check
      _
    $region7: #{discriminator_forward.7} parent=1 // pred_check_branch
      %23 = sbr.rel (0) target = $region9
    $region8: #{discriminator_forward.7} parent=1 // pred_region
      _
    $region9: #{discriminator_forward.7} parent=1 // pred_fallthru
      _
    // Predicated region
    $region10: #{discriminator_forward.7} parent=1 // pred_check
      _
    $region11: #{discriminator_forward.7} parent=1 // pred_check_branch
      %25 = sbr.rel (0) target = $region13
    $region12: #{discriminator_forward.7} parent=1 // pred_region
      _
    $region13: #{discriminator_forward.7} parent=1 // pred_fallthru
      _
    // Predicated region
    $region14: #{discriminator_forward.7} parent=1 // pred_check
      _
    $region15: #{discriminator_forward.7} parent=1 // pred_check_branch
      %27 = sbr.rel (0) target = $region17
    $region16: #{discriminator_forward.7} parent=1 // pred_region
      _
    $region17: #{discriminator_forward.7} parent=1 // pred_fallthru
      _
    // Predicated region
    $region18: #{discriminator_forward.7} parent=1 // pred_check
      _
    $region19: #{discriminator_forward.7} parent=1 // pred_check_branch
      %29 = sbr.rel (0) target = $region21
    $region20: #{discriminator_forward.7} parent=1 // pred_region
      _
    $region21: #{discriminator_forward.7} parent=1 // pred_fallthru
      _
    // Predicated region
    $region22: #{discriminator_forward.7} parent=1 // pred_check
      _
    $region23: #{discriminator_forward.7} parent=1 // pred_check_branch
      %31 = sbr.rel (0) target = $region25
    $region24: #{discriminator_forward.7} parent=1 // pred_region
      _
    $region25: #{discriminator_forward.7} parent=1 // pred_fallthru
      _
    // Predicated region
    $region26: #{discriminator_forward.7} parent=1 // pred_check
      _
    $region27: #{discriminator_forward.7} parent=1 // pred_check_branch
      %33 = sbr.rel (0) target = $region29
    $region28: #{discriminator_forward.7} parent=1 // pred_region
      _
    $region29: #{discriminator_forward.7} parent=1 // pred_fallthru
      _
    // Predicated region
    $region30: #{discriminator_forward.7} parent=1 // pred_check
      _
    $region31: #{discriminator_forward.7} parent=1 // pred_check_branch
      %35 = sbr.rel (0) target = $region33
    $region32: #{discriminator_forward.7} parent=1 // pred_region
      _
    $region33: #{discriminator_forward.7} parent=1 // pred_fallthru
      _
    // Predicated region
    $region34: #{discriminator_forward.7} parent=1 // pred_check
      _
    $region35: #{discriminator_forward.7} parent=1 // pred_check_branch
      %37 = sbr.rel (0) target = $region37
    $region36: #{discriminator_forward.7} parent=1 // pred_region
      _
    $region37: #{discriminator_forward.7} parent=1 // pred_fallthru
      _
    // Predicated region
    $region38: #{discriminator_forward.7} parent=1 // pred_check
      _
    $region39: #{discriminator_forward.7} parent=1 // pred_check_branch
      %39 = sbr.rel (0) target = $region41
    $region40: #{discriminator_forward.7} parent=1 // pred_region
      _
    $region41: #{discriminator_forward.7} parent=1 // pred_fallthru
      _
    // Predicated region
    $region42: #{discriminator_forward.7} parent=1 // pred_check
      _
    $region43: #{discriminator_forward.7} parent=1 // pred_check_branch
      %41 = sbr.rel (0) target = $region45
    $region44: #{discriminator_forward.7} parent=1 // pred_region
      _
    $region45: #{discriminator_forward.7} parent=1 // pred_fallthru
      _
    // Predicated region
    $region46: #{discriminator_forward.7} parent=1 // pred_check
      _
    $region47: #{discriminator_forward.7} parent=1 // pred_check_branch
      %43 = sbr.rel (0) target = $region49
    $region48: #{discriminator_forward.7} parent=1 // pred_region
      _
    $region49: #{discriminator_forward.7} parent=1 // pred_fallthru
      _
    %v45 = vld [vmem:[%s0] sm:$0xff]
    %v46 = vld [vmem:[%s0 + $0x8] sm:$0xff]
    %v47 = vld [vmem:[%s0 + $0x10] sm:$0xff]
    %v48 = vld [vmem:[%s0 + $0x18] sm:$0xff]
    %v49 = vld [vmem:[%s0 + $0x20] sm:$0xff]
    %v50 = vld [vmem:[%s0 + $0x28] sm:$0xff]
    %v51 = vld [vmem:[%s0 + $0x30] sm:$0xff]
    %v52 = vld [vmem:[%s0 + $0x38] sm:$0xff]
    %v53 = vld [vmem:[%s1] sm:$0xf]
    %v54 = vld [vmem:[%s1 + $0x4] sm:$0xf]
    %v55 = vld [vmem:[%s1 + $0x8] sm:$0xf]
    %v56 = vld [vmem:[%s1 + $0xc] sm:$0xf]
    %v57 = vld [vmem:[%s1 + $0x10] sm:$0xf]
    %v58 = vld [vmem:[%s1 + $0x14] sm:$0xf]
    %v59 = vld [vmem:[%s1 + $0x18] sm:$0xf]
    %v60 = vld [vmem:[%s1 + $0x1c] sm:$0xf]
    %v61 = vld [vmem:[%s1 + $0x20] sm:$0xf]
    %v62 = vld [vmem:[%s1 + $0x24] sm:$0xf]
    %v63 = vld [vmem:[%s1 + $0x28] sm:$0xf]
    %v64 = vld [vmem:[%s1 + $0x2c] sm:$0xf]
    %v65 = vld [vmem:[%s1 + $0x30] sm:$0xf]
    %v66 = vld [vmem:[%s1 + $0x34] sm:$0xf]
    %v67 = vld [vmem:[%s1 + $0x38] sm:$0xf]
    %v68 = vld [vmem:[%s1 + $0x3c] sm:$0xf]
    %v69 = vld [vmem:[%s1 + $0x40] sm:$0xf]
    %v70 = vld [vmem:[%s1 + $0x44] sm:$0xf]
    %v71 = vld [vmem:[%s1 + $0x48] sm:$0xf]
    %v72 = vld [vmem:[%s1 + $0x4c] sm:$0xf]
    %v73 = vld [vmem:[%s1 + $0x50] sm:$0xf]
    %v74 = vld [vmem:[%s1 + $0x54] sm:$0xf]
    %v75 = vld [vmem:[%s1 + $0x58] sm:$0xf]
    %v76 = vld [vmem:[%s1 + $0x5c] sm:$0xf]
    %v77 = vld [vmem:[%s1 + $0x60] sm:$0xf]
    %v78 = vld [vmem:[%s1 + $0x64] sm:$0xf]
    %v79 = vld [vmem:[%s1 + $0x68] sm:$0xf]
    %v80 = vld [vmem:[%s1 + $0x6c] sm:$0xf]
    %v81 = vld [vmem:[%s1 + $0x70] sm:$0xf]
    %v82 = vld [vmem:[%s1 + $0x74] sm:$0xf]
    %v83 = vld [vmem:[%s1 + $0x78] sm:$0xf]
    %v84 = vld [vmem:[%s1 + $0x7c] sm:$0xf]
    %v85 = vld [vmem:[%s1 + $0x80] sm:$0xf]
    %v86 = vld [vmem:[%s1 + $0x84] sm:$0xf]
    %v87 = vld [vmem:[%s1 + $0x88] sm:$0xf]
    %v88 = vld [vmem:[%s1 + $0x8c] sm:$0xf]
    %v89 = vld [vmem:[%s1 + $0x90] sm:$0xf]
    %v90 = vld [vmem:[%s1 + $0x94] sm:$0xf]
    %v91 = vld [vmem:[%s1 + $0x98] sm:$0xf]
    %v92 = vld [vmem:[%s1 + $0x9c] sm:$0xf]
    %v93 = vld [vmem:[%s1 + $0xa0] sm:$0xf]
    %v94 = vld [vmem:[%s1 + $0xa4] sm:$0xf]
    %v95 = vld [vmem:[%s1 + $0xa8] sm:$0xf]
    %v96 = vld [vmem:[%s1 + $0xac] sm:$0xf]
    %v97 = vld [vmem:[%s1 + $0xb0] sm:$0xf]
    %v98 = vld [vmem:[%s1 + $0xb4] sm:$0xf]
    %v99 = vld [vmem:[%s1 + $0xb8] sm:$0xf]
    %v100 = vld [vmem:[%s1 + $0xbc] sm:$0xf]
    %v101 = vld [vmem:[%s1 + $0xc0] sm:$0xf]
    %v102 = vld [vmem:[%s1 + $0xc4] sm:$0xf]
    %v103 = vld [vmem:[%s1 + $0xc8] sm:$0xf]
    %v104 = vld [vmem:[%s1 + $0xcc] sm:$0xf]
    %v105 = vld [vmem:[%s1 + $0xd0] sm:$0xf]
    %v106 = vld [vmem:[%s1 + $0xd4] sm:$0xf]
    %v107 = vld [vmem:[%s1 + $0xd8] sm:$0xf]
    %v108 = vld [vmem:[%s1 + $0xdc] sm:$0xf]
    %v109 = vld [vmem:[%s1 + $0xe0] sm:$0xf]
    %v110 = vld [vmem:[%s1 + $0xe4] sm:$0xf]
    %v111 = vld [vmem:[%s1 + $0xe8] sm:$0xf]
    %v112 = vld [vmem:[%s1 + $0xec] sm:$0xf]
    %v113 = vld [vmem:[%s1 + $0xf0] sm:$0xf]
    %v114 = vld [vmem:[%s1 + $0xf4] sm:$0xf]
    %v115 = vld [vmem:[%s1 + $0xf8] sm:$0xf]
    %v116 = vld [vmem:[%s1 + $0xfc] sm:$0xf]
    %v125 = vunpack.c.l.b16 %v45
    %v126 = vunpack.c.h.b16 %v45
    %v127 = vunpack.c.l.b16 %v46
    %v128 = vunpack.c.h.b16 %v46
    %v129 = vunpack.c.l.b16 %v47
    %v130 = vunpack.c.h.b16 %v47
    %v131 = vunpack.c.l.b16 %v48
    %v132 = vunpack.c.h.b16 %v48
    %v133 = vunpack.c.l.b16 %v49
    %v134 = vunpack.c.h.b16 %v49
    %v135 = vunpack.c.l.b16 %v50
    %v136 = vunpack.c.h.b16 %v50
    %v137 = vunpack.c.l.b16 %v51
    %v138 = vunpack.c.h.b16 %v51
    %v139 = vunpack.c.l.b16 %v52
    %v140 = vunpack.c.h.b16 %v52
    %v141 = vpack.c.b16 %v129, %v125
    %v142 = vpack.c.b16 %v130, %v126
    %v143 = vpack.c.b16 %v131, %v127
    %v144 = vpack.c.b16 %v132, %v128
    %v145 = vpack.c.b16 %v137, %v133
    %v146 = vpack.c.b16 %v138, %v134
    %v147 = vpack.c.b16 %v139, %v135
    %v148 = vpack.c.b16 %v140, %v136
    %v221 = vunpack.c.l.b16 %v53
    %v222 = vunpack.c.l.b16 %v54
    %v223 = vunpack.c.l.b16 %v55
    %v224 = vunpack.c.l.b16 %v56
    %v225 = vunpack.c.l.b16 %v57
    %v226 = vunpack.c.l.b16 %v58
    %v227 = vunpack.c.l.b16 %v59
    %v228 = vunpack.c.l.b16 %v60
    %v229 = vunpack.c.l.b16 %v61
    %v230 = vunpack.c.l.b16 %v62
    %v231 = vunpack.c.l.b16 %v63
    %v232 = vunpack.c.l.b16 %v64
    %v233 = vunpack.c.l.b16 %v65
    %v234 = vunpack.c.l.b16 %v66
    %v235 = vunpack.c.l.b16 %v67
    %v236 = vunpack.c.l.b16 %v68
    %v237 = vunpack.c.l.b16 %v69
    %v238 = vunpack.c.l.b16 %v70
    %v239 = vunpack.c.l.b16 %v71
    %v240 = vunpack.c.l.b16 %v72
    %v241 = vunpack.c.l.b16 %v73
    %v242 = vunpack.c.l.b16 %v74
    %v243 = vunpack.c.l.b16 %v75
    %v244 = vunpack.c.l.b16 %v76
    %v245 = vunpack.c.l.b16 %v77
    %v246 = vunpack.c.l.b16 %v78
    %v247 = vunpack.c.l.b16 %v79
    %v248 = vunpack.c.l.b16 %v80
    %v249 = vunpack.c.l.b16 %v81
    %v250 = vunpack.c.l.b16 %v82
    %v251 = vunpack.c.l.b16 %v83
    %v252 = vunpack.c.l.b16 %v84
    %v253 = vunpack.c.l.b16 %v85
    %v254 = vunpack.c.l.b16 %v86
    %v255 = vunpack.c.l.b16 %v87
    %v256 = vunpack.c.l.b16 %v88
    %v257 = vunpack.c.l.b16 %v89
    %v258 = vunpack.c.l.b16 %v90
    %v259 = vunpack.c.l.b16 %v91
    %v260 = vunpack.c.l.b16 %v92
    %v261 = vunpack.c.l.b16 %v93
    %v262 = vunpack.c.l.b16 %v94
    %v263 = vunpack.c.l.b16 %v95
    %v264 = vunpack.c.l.b16 %v96
    %v265 = vunpack.c.l.b16 %v97
    %v266 = vunpack.c.l.b16 %v98
    %v267 = vunpack.c.l.b16 %v99
    %v268 = vunpack.c.l.b16 %v100
    %v269 = vunpack.c.l.b16 %v101
    %v270 = vunpack.c.l.b16 %v102
    %v271 = vunpack.c.l.b16 %v103
    %v272 = vunpack.c.l.b16 %v104
    %v273 = vunpack.c.l.b16 %v105
    %v274 = vunpack.c.l.b16 %v106
    %v275 = vunpack.c.l.b16 %v107
    %v276 = vunpack.c.l.b16 %v108
    %v277 = vunpack.c.l.b16 %v109
    %v278 = vunpack.c.l.b16 %v110
    %v279 = vunpack.c.l.b16 %v111
    %v280 = vunpack.c.l.b16 %v112
    %v281 = vunpack.c.l.b16 %v113
    %v282 = vunpack.c.l.b16 %v114
    %v283 = vunpack.c.l.b16 %v115
    %v284 = vunpack.c.l.b16 %v116
    %v285 = vpack.c.b16 %v222, %v221
    %v286 = vpack.c.b16 %v224, %v223
    %v287 = vpack.c.b16 %v226, %v225
    %v288 = vpack.c.b16 %v228, %v227
    %v289 = vpack.c.b16 %v230, %v229
    %v290 = vpack.c.b16 %v232, %v231
    %v291 = vpack.c.b16 %v234, %v233
    %v292 = vpack.c.b16 %v236, %v235
    %v293 = vpack.c.b16 %v238, %v237
    %v294 = vpack.c.b16 %v240, %v239
    %v295 = vpack.c.b16 %v242, %v241
    %v296 = vpack.c.b16 %v244, %v243
    %v297 = vpack.c.b16 %v246, %v245
    %v298 = vpack.c.b16 %v248, %v247
    %v299 = vpack.c.b16 %v250, %v249
    %v300 = vpack.c.b16 %v252, %v251
    %v301 = vpack.c.b16 %v254, %v253
    %v302 = vpack.c.b16 %v256, %v255
    %v303 = vpack.c.b16 %v258, %v257
    %v304 = vpack.c.b16 %v260, %v259
    %v305 = vpack.c.b16 %v262, %v261
    %v306 = vpack.c.b16 %v264, %v263
    %v307 = vpack.c.b16 %v266, %v265
    %v308 = vpack.c.b16 %v268, %v267
    %v309 = vpack.c.b16 %v270, %v269
    %v310 = vpack.c.b16 %v272, %v271
    %v311 = vpack.c.b16 %v274, %v273
    %v312 = vpack.c.b16 %v276, %v275
    %v313 = vpack.c.b16 %v278, %v277
    %v314 = vpack.c.b16 %v280, %v279
    %v315 = vpack.c.b16 %v282, %v281
    %v316 = vpack.c.b16 %v284, %v283
    %349 = vmatprep.subr.bf16.mxu0 0
    %350 = vmatpush1.bf16.msra.mxu0 %v285
    %351 = vmatprep.subr.bf16.mxu0 0
    %352 = vmatpush1.bf16.msra.mxu0 %v286
    %353 = vmatprep.subr.bf16.mxu0 0
    %354 = vmatpush1.bf16.msra.mxu0 %v287
    %355 = vmatprep.subr.bf16.mxu0 0
    %356 = vmatpush1.bf16.msra.mxu0 %v288
    %357 = vmatprep.subr.bf16.mxu0 0
    %358 = vmatpush1.bf16.msra.mxu0 %v289
    %359 = vmatprep.subr.bf16.mxu0 0
    %360 = vmatpush1.bf16.msra.mxu0 %v290
    %361 = vmatprep.subr.bf16.mxu0 0
    %362 = vmatpush1.bf16.msra.mxu0 %v291
    %363 = vmatprep.subr.bf16.mxu0 0
    %364 = vmatpush1.bf16.msra.mxu0 %v292
    %365 = vmatprep.subr.bf16.mxu0 0
    %366 = vmatpush1.bf16.msra.mxu0 %v293
    %367 = vmatprep.subr.bf16.mxu0 0
    %368 = vmatpush1.bf16.msra.mxu0 %v294
    %369 = vmatprep.subr.bf16.mxu0 0
    %370 = vmatpush1.bf16.msra.mxu0 %v295
    %371 = vmatprep.subr.bf16.mxu0 0
    %372 = vmatpush1.bf16.msra.mxu0 %v296
    %373 = vmatprep.subr.bf16.mxu0 0
    %374 = vmatpush1.bf16.msra.mxu0 %v297
    %375 = vmatprep.subr.bf16.mxu0 0
    %376 = vmatpush1.bf16.msra.mxu0 %v298
    %377 = vmatprep.subr.bf16.mxu0 0
    %378 = vmatpush1.bf16.msra.mxu0 %v299
    %379 = vmatprep.subr.bf16.mxu0 0
    %380 = vmatpush1.bf16.msra.mxu0 %v300
    %381 = vmatprep.mubr.bf16.mxu0 %v142
    %382 = vmatmul.mubr.bf16.gmra.mrb[0].mxu0 %v141
    %v383 = vpop.f32.mrb[0].mxu0
    %v384 = vadd.f32 0.0, %v383
    %v385 = vpop.f32.mrb[0].mxu0
    %v386 = vpop.f32.mrb[0].mxu0
    %v387 = vadd.f32 0.0, %v386
    %v388 = vpop.f32.mrb[0].mxu0
    %389 = vmatprep.mubr.bf16.mxu0 %v146
    %390 = vmatmul.mubr.bf16.gmra.mrb[0].mxu0 %v145
    %v391 = vpop.f32.mrb[0].mxu0
    %v392 = vadd.f32 0.0, %v391
    %v393 = vpop.f32.mrb[0].mxu0
    %v394 = vpop.f32.mrb[0].mxu0
    %v395 = vadd.f32 0.0, %v394
    %v396 = vpop.f32.mrb[0].mxu0
    %397 = vdwg.mxu0
    %398 = vmatprep.subr.bf16.mxu0 0
    %399 = vmatpush1.bf16.msra.mxu0 %v301
    %400 = vmatprep.subr.bf16.mxu0 0
    %401 = vmatpush1.bf16.msra.mxu0 %v302
    %402 = vmatprep.subr.bf16.mxu0 0
    %403 = vmatpush1.bf16.msra.mxu0 %v303
    %404 = vmatprep.subr.bf16.mxu0 0
    %405 = vmatpush1.bf16.msra.mxu0 %v304
    %406 = vmatprep.subr.bf16.mxu0 0
    %407 = vmatpush1.bf16.msra.mxu0 %v305
    %408 = vmatprep.subr.bf16.mxu0 0
    %409 = vmatpush1.bf16.msra.mxu0 %v306
    %410 = vmatprep.subr.bf16.mxu0 0
    %411 = vmatpush1.bf16.msra.mxu0 %v307
    %412 = vmatprep.subr.bf16.mxu0 0
    %413 = vmatpush1.bf16.msra.mxu0 %v308
    %414 = vmatprep.subr.bf16.mxu0 0
    %415 = vmatpush1.bf16.msra.mxu0 %v309
    %416 = vmatprep.subr.bf16.mxu0 0
    %417 = vmatpush1.bf16.msra.mxu0 %v310
    %418 = vmatprep.subr.bf16.mxu0 0
    %419 = vmatpush1.bf16.msra.mxu0 %v311
    %420 = vmatprep.subr.bf16.mxu0 0
    %421 = vmatpush1.bf16.msra.mxu0 %v312
    %422 = vmatprep.subr.bf16.mxu0 0
    %423 = vmatpush1.bf16.msra.mxu0 %v313
    %424 = vmatprep.subr.bf16.mxu0 0
    %425 = vmatpush1.bf16.msra.mxu0 %v314
    %426 = vmatprep.subr.bf16.mxu0 0
    %427 = vmatpush1.bf16.msra.mxu0 %v315
    %428 = vmatprep.subr.bf16.mxu0 0
    %429 = vmatpush1.bf16.msra.mxu0 %v316
    %430 = vmatprep.mubr.bf16.mxu0 %v144
    %431 = vmatmul.mubr.bf16.gmra.mrb[0].mxu0 %v143
    %v432 = vpop.f32.mrb[0].mxu0
    %v433 = vadd.f32 %v384, %v432
    %v434 = vpop.f32.mrb[0].mxu0
    %v435 = vpop.f32.mrb[0].mxu0
    %v436 = vadd.f32 %v387, %v435
    %v437 = vpop.f32.mrb[0].mxu0
    %438 = vmatprep.mubr.bf16.mxu0 %v148
    %439 = vmatmul.mubr.bf16.gmra.mrb[0].mxu0 %v147
    %v440 = vpop.f32.mrb[0].mxu0
    %v441 = vadd.f32 %v392, %v440
    %v442 = vpop.f32.mrb[0].mxu0
    %v443 = vpop.f32.mrb[0].mxu0
    %v444 = vadd.f32 %v395, %v443
    %v445 = vpop.f32.mrb[0].mxu0
    %446 = vdwg.mxu0
    %vm447 = vcmask 523264
    %v448 = vsel %vm447, %v433, 0.0
    %v449 = vsel %vm447, %v436, 0.0
    %v450 = vadd.f32 %v448, %v449
    %v451 = vsel %vm447, %v441, 0.0
    %v452 = vadd.f32 %v450, %v451
    %v453 = vsel %vm447, %v444, 0.0
    %v454 = vadd.f32 %v452, %v453
    %v455 = vrot.slane %v454, 4
    %v456 = vadd.f32 %v454, %v455
    %v457 = vrot.slane %v456, 2
    %v458 = vadd.f32 %v456, %v457
    %v459 = vrot.slane %v458, 1
    %v460 = vadd.f32 %v458, %v459
    %v461 = vrcp.pop 32.0
    %v462 = vmul.f32 %v460, %v461
    %v463 = vsub.f32 %v433, %v462
    %v464 = vsub.f32 %v436, %v462
    %v465 = vsub.f32 %v441, %v462
    %v466 = vsub.f32 %v444, %v462
    %v467 = vmul.f32 %v463, %v463
    %v468 = vmul.f32 %v464, %v464
    %v469 = vmul.f32 %v465, %v465
    %v470 = vmul.f32 %v466, %v466
    %v471 = vsel %vm447, %v467, 0.0
    %v472 = vsel %vm447, %v468, 0.0
    %v473 = vadd.f32 %v471, %v472
    %v474 = vsel %vm447, %v469, 0.0
    %v475 = vadd.f32 %v473, %v474
    %v476 = vsel %vm447, %v470, 0.0
    %v477 = vadd.f32 %v475, %v476
    %v478 = vrot.slane %v477, 4
    %v479 = vadd.f32 %v477, %v478
    %v480 = vrot.slane %v479, 2
    %v481 = vadd.f32 %v479, %v480
    %v482 = vrot.slane %v481, 1
    %v483 = vadd.f32 %v481, %v482
    %v484 = vmul.f32 %v483, %v461
    %v485 = vadd.f32 %v484, 1e-05
    %v486 = vrsqrt.pop %v485
    %v487 = vmul.f32 %v463, %v486
    %v488 = vmul.f32 %v464, %v486
    %v489 = vmul.f32 %v465, %v486
    %v490 = vmul.f32 %v466, %v486
    %v491 = vld [vmem:[%s2] sm:$0x1]
    %v493 = vlaneseq
    %v494 = vshrl.u32 %v493, 7
    %v495 = vsub.s32 0, %v494
    %v496 = vrot.slane %v491, %v495
    %v498 = vmul.f32 %v487, %v496
    %v499 = vmul.f32 %v488, %v496
    %v500 = vmul.f32 %v489, %v496
    %v501 = vmul.f32 %v490, %v496
    %v502 = vld [vmem:[%s3] sm:$0x1]
    %v504 = vlaneseq
    %v505 = vshrl.u32 %v504, 7
    %v506 = vsub.s32 0, %v505
    %v507 = vrot.slane %v502, %v506
    %v509 = vadd.f32 %v498, %v507
    %v510 = vadd.f32 %v499, %v507
    %v511 = vadd.f32 %v500, %v507
    %v512 = vadd.f32 %v501, %v507
    %vm513 = vcmp.ge.f32.partialorder %v509, 0.0
    %vm514 = vcmp.ge.f32.partialorder %v510, 0.0
    %vm515 = vcmp.ge.f32.partialorder %v511, 0.0
    %vm516 = vcmp.ge.f32.partialorder %v512, 0.0
    %v517 = vmul.f32 %v509, 0.2
    %v518 = vmul.f32 %v510, 0.2
    %v519 = vmul.f32 %v511, 0.2
    %v520 = vmul.f32 %v512, 0.2
    %v521 = vsel %vm513, %v509, %v517
    %v522 = vsel %vm514, %v510, %v518
    %v523 = vsel %vm515, %v511, %v519
    %v524 = vsel %vm516, %v512, %v520
    %525 = vst.msk [vmem:[#allocation2] sm:$0xff] %vm447, %v521
    %526 = vst.msk [vmem:[#allocation2 + $0x8] sm:$0xff] %vm447, %v522
    %527 = vst.msk [vmem:[#allocation2 + $0x10] sm:$0xff] %vm447, %v523
    %528 = vst.msk [vmem:[#allocation2 + $0x18] sm:$0xff] %vm447, %v524
    %v529 = vld [vmem:[%s4] sm:$0x1]
    %v530 = vld [vmem:[%s5] sm:$0xf]
    %v531 = vld [vmem:[%s5 + $0x4] sm:$0xf]
    %v532 = vld [vmem:[%s5 + $0x8] sm:$0xf]
    %v533 = vld [vmem:[%s5 + $0xc] sm:$0xf]
    %v534 = vld [vmem:[%s6] sm:$0x1]
    %v536 = vlaneseq
    %v537 = vshrl.u32 %v536, 7
    %v538 = vsub.s32 0, %v537
    %v539 = vrot.slane %v534, %v538
    %v545 = vunpack.c.l.b16 %v530
    %v546 = vunpack.c.l.b16 %v531
    %v547 = vunpack.c.l.b16 %v532
    %v548 = vunpack.c.l.b16 %v533
    %v549 = vpack.c.b16 %v546, %v545
    %v550 = vpack.c.b16 %v548, %v547
    %vm553 = vcmask 261120
    %v555 = vsel %vm553, %v529, 0
    %557 = vmatprep.subr.bf16.mxu0 0
    %558 = vmatpush1.bf16.msra.mxu0 %v549
    %559 = vmatprep.subr.bf16.mxu0 0
    %560 = vmatpush1.bf16.msra.mxu0 %v550
    %561 = vmatprep.subr.bf16.mxu0 0
    %562 = vmatpush1.bf16.msra.mxu0 0
    %563 = vmatprep.subr.bf16.mxu0 0
    %564 = vmatpush1.bf16.msra.mxu0 0
    %565 = vmatprep.subr.bf16.mxu0 0
    %566 = vmatpush1.bf16.msra.mxu0 0
    %567 = vmatprep.subr.bf16.mxu0 0
    %568 = vmatpush1.bf16.msra.mxu0 0
    %569 = vmatprep.subr.bf16.mxu0 0
    %570 = vmatpush1.bf16.msra.mxu0 0
    %571 = vmatprep.subr.bf16.mxu0 0
    %572 = vmatpush1.bf16.msra.mxu0 0
    %573 = vmatprep.subr.bf16.mxu0 0
    %574 = vmatpush1.bf16.msra.mxu0 0
    %575 = vmatprep.subr.bf16.mxu0 0
    %576 = vmatpush1.bf16.msra.mxu0 0
    %577 = vmatprep.subr.bf16.mxu0 0
    %578 = vmatpush1.bf16.msra.mxu0 0
    %579 = vmatprep.subr.bf16.mxu0 0
    %580 = vmatpush1.bf16.msra.mxu0 0
    %581 = vmatprep.subr.bf16.mxu0 0
    %582 = vmatpush1.bf16.msra.mxu0 0
    %583 = vmatprep.subr.bf16.mxu0 0
    %584 = vmatpush1.bf16.msra.mxu0 0
    %585 = vmatprep.subr.bf16.mxu0 0
    %586 = vmatpush1.bf16.msra.mxu0 0
    %587 = vmatprep.subr.bf16.mxu0 0
    %588 = vmatpush1.bf16.msra.mxu0 0
    %589 = vmatprep.mubr.bf16.mxu0 0
    %590 = vmatmul.mubr.bf16.gmra.mrb[0].mxu0 %v555
    %v591 = vpop.f32.mrb[0].mxu0
    %v592 = vadd.f32 %v539, %v591
    %v593 = vpop.f32.mrb[0].mxu0
    %v594 = vpop.f32.mrb[0].mxu0
    %v595 = vpop.f32.mrb[0].mxu0
    %596 = vdwg.mxu0
    %vm597 = vcmask 123904
    %v598 = vsel %vm597, %v592, 0.0
    %v599 = vrot.slane %v598, 4
    %v600 = vadd.f32 %v598, %v599
    %v601 = vrot.slane %v600, 2
    %v602 = vadd.f32 %v600, %v601
    %v603 = vrot.slane %v602, 1
    %v604 = vadd.f32 %v602, %v603
    %v605 = vrcp.pop 2.0
    %v606 = vmul.f32 %v604, %v605
    %v607 = vsub.f32 %v592, %v606
    %v608 = vmul.f32 %v607, %v607
    %v609 = vsel %vm597, %v608, 0.0
    %v610 = vrot.slane %v609, 4
    %v611 = vadd.f32 %v609, %v610
    %v612 = vrot.slane %v611, 2
    %v613 = vadd.f32 %v611, %v612
    %v614 = vrot.slane %v613, 1
    %v615 = vadd.f32 %v613, %v614
    %v616 = vmul.f32 %v615, %v605
    %v617 = vadd.f32 %v616, 1e-05
    %v618 = vrsqrt.pop %v617
    %v619 = vmul.f32 %v607, %v618
    %v620 = vld [vmem:[%s7] sm:$0x1]
    %v622 = vlaneseq
    %v623 = vshrl.u32 %v622, 7
    %v624 = vsub.s32 0, %v623
    %v625 = vrot.slane %v620, %v624
    %v627 = vmul.f32 %v619, %v625
    %v628 = vld [vmem:[%s8] sm:$0x1]
    %v630 = vlaneseq
    %v631 = vshrl.u32 %v630, 7
    %v632 = vsub.s32 0, %v631
    %v633 = vrot.slane %v628, %v632
    %v635 = vadd.f32 %v627, %v633
    %vm636 = vcmp.ge.f32.partialorder %v635, 0.0
    %v637 = vmul.f32 %v635, 0.2
    %v638 = vsel %vm636, %v635, %v637
    %v639 = vld [vmem:[%s9] sm:$0xff]
    %v640 = vld [vmem:[%s9 + $0x8] sm:$0xff]
    %v641 = vld [vmem:[%s9 + $0x10] sm:$0xff]
    %v642 = vld [vmem:[%s9 + $0x18] sm:$0xff]
    %v643 = vmul.f32 %v521, %v639
    %v644 = vmul.f32 %v522, %v640
    %v645 = vmul.f32 %v523, %v641
    %v646 = vmul.f32 %v524, %v642
    %v647 = vld [vmem:[%s11] sm:$0x3]
    %v649 = vsel %vm553, %v647, 0
    %651 = vmatprep.subr.mxu0 0.0
    %652 = vmatpush1.msra.mxu0 %v643
    %653 = vmatprep.subr.mxu0 0.0
    %654 = vmatpush1.msra.mxu0 %v644
    %655 = vmatprep.subr.mxu0 0.0
    %656 = vmatpush1.msra.mxu0 %v645
    %657 = vmatprep.subr.mxu0 0.0
    %658 = vmatpush1.msra.mxu0 %v646
    %659 = vmatprep.subr.mxu0 0.0
    %660 = vmatpush1.msra.mxu0 0.0
    %661 = vmatprep.subr.mxu0 0.0
    %662 = vmatpush1.msra.mxu0 0.0
    %663 = vmatprep.subr.mxu0 0.0
    %664 = vmatpush1.msra.mxu0 0.0
    %665 = vmatprep.subr.mxu0 0.0
    %666 = vmatpush1.msra.mxu0 0.0
    %667 = vmatprep.subr.mxu0 0.0
    %668 = vmatpush1.msra.mxu0 0.0
    %669 = vmatprep.subr.mxu0 0.0
    %670 = vmatpush1.msra.mxu0 0.0
    %671 = vmatprep.subr.mxu0 0.0
    %672 = vmatpush1.msra.mxu0 0.0
    %673 = vmatprep.subr.mxu0 0.0
    %674 = vmatpush1.msra.mxu0 0.0
    %675 = vmatprep.subr.mxu0 0.0
    %676 = vmatpush1.msra.mxu0 0.0
    %677 = vmatprep.subr.mxu0 0.0
    %678 = vmatpush1.msra.mxu0 0.0
    %679 = vmatprep.subr.mxu0 0.0
    %680 = vmatpush1.msra.mxu0 0.0
    %681 = vmatprep.subr.mxu0 0.0
    %682 = vmatpush1.msra.mxu0 0.0
    %683 = vmatprep.subr.mxu0 0.0
    %684 = vmatpush1.msra.mxu0 0.0
    %685 = vmatprep.subr.mxu0 0.0
    %686 = vmatpush1.msra.mxu0 0.0
    %687 = vmatprep.subr.mxu0 0.0
    %688 = vmatpush1.msra.mxu0 0.0
    %689 = vmatprep.subr.mxu0 0.0
    %690 = vmatpush1.msra.mxu0 0.0
    %691 = vmatprep.subr.mxu0 0.0
    %692 = vmatpush1.msra.mxu0 0.0
    %693 = vmatprep.subr.mxu0 0.0
    %694 = vmatpush1.msra.mxu0 0.0
    %695 = vmatprep.subr.mxu0 0.0
    %696 = vmatpush1.msra.mxu0 0.0
    %697 = vmatprep.subr.mxu0 0.0
    %698 = vmatpush1.msra.mxu0 0.0
    %699 = vmatprep.subr.mxu0 0.0
    %700 = vmatpush1.msra.mxu0 0.0
    %701 = vmatprep.subr.mxu0 0.0
    %702 = vmatpush1.msra.mxu0 0.0
    %703 = vmatprep.subr.mxu0 0.0
    %704 = vmatpush1.msra.mxu0 0.0
    %705 = vmatprep.subr.mxu0 0.0
    %706 = vmatpush1.msra.mxu0 0.0
    %707 = vmatprep.subr.mxu0 0.0
    %708 = vmatpush1.msra.mxu0 0.0
    %709 = vmatprep.subr.mxu0 0.0
    %710 = vmatpush1.msra.mxu0 0.0
    %711 = vmatprep.subr.mxu0 0.0
    %712 = vmatpush1.msra.mxu0 0.0
    %713 = vmatprep.subr.mxu0 0.0
    %714 = vmatpush1.msra.mxu0 0.0
    %715 = vmatprep.mubr.f32.mxu0 0.0
    %716 = vmatmul.mubr.f32.gmra.mrb[0].mxu0 %v649
    %v717 = vpop.f32.mrb[0].mxu0
    %v718 = vadd.f32 0.0, %v717
    %v719 = vpop.f32.mrb[0].mxu0
    %720 = vdwg.mxu0
    %vm721 = vcmask 517120
    %v722 = vsel %vm721, %v718, 0.0
    %723 = vadd.xlane.f32.xlu0 %v722
    %v724 = vpop.xlane.xlu0 %723
    %v725 = vld [vmem:[%s10] sm:$0x1]
    %v727 = vlaneseq
    %v728 = vshrl.u32 %v727, 7
    %v729 = vsub.s32 0, %v728
    %v730 = vrot.slane %v725, %v729
    %v732 = vmul.f32 %v638, %v730
    %v733 = vsel %vm597, %v732, 0.0
    %734 = vadd.xlane.f32.xlu0 %v733
    %v735 = vpop.xlane.xlu0 %734
    %v736 = vadd.f32 %v724, %v735
    %v737 = vsub.f32 0.0, %v736
    %v738 = vmul.f32 %v737, 1.442695
    %v739 = vpow.pop %v738
    %v740 = vadd.f32 %v739, 1.0
    %v741 = vrcp.pop %v740
    %v742 = vmul.f32 1.0, %v741
    %vm743 = vcmask 1024
    %744 = vst.msk [vmem:[%s13] sm:$0x3] %vm743, %v742
    // Predicated region
    $region50: #{discriminator_forward.7} parent=1 // pred_check
      _
    $region51: #{discriminator_forward.7} parent=1 // pred_check_branch
      %746 = sbr.rel (0) target = $region53
    $region52: #{discriminator_forward.7} parent=1 // pred_region
      %s748 = ssub.s32 512, 512
      %749 = vsyncadd [#allocation3], %s748
      %s750 = sshll.u32 [#allocation2], 4
      %s751 = int_to_ptr.vmem [resolvable:$true] %s750
      %756 = dma.vmem_to_hbm [thread:$0]  %s751, 512, %s12, [#allocation3], 128, 128, 8
    $region53: #{discriminator_forward.7} parent=1 // pred_fallthru
      _
    // Predicated region
    $region54: #{discriminator_forward.7} parent=1 // pred_check
      _
    $region55: #{discriminator_forward.7} parent=1 // pred_check_branch
      %758 = sbr.rel (0) target = $region57
    $region56: #{discriminator_forward.7} parent=1 // pred_region
      _
    $region57: #{discriminator_forward.7} parent=1 // pred_fallthru
      _
    // Predicated region
    $region58: #{discriminator_forward.7} parent=1 // pred_check
      _
    $region59: #{discriminator_forward.7} parent=1 // pred_check_branch
      %760 = sbr.rel (0) target = $region61
    $region60: #{discriminator_forward.7} parent=1 // pred_region
      %761 = dma.done [#allocation3], 512
    $region61: #{discriminator_forward.7} parent=1 // pred_fallthru
      _
    // Predicated region
    $region62: #{discriminator_forward.7} parent=1 // pred_check
      _
    $region63: #{discriminator_forward.7} parent=1 // pred_check_branch
      %763 = sbr.rel (0) target = $region65
    $region64: #{discriminator_forward.7} parent=1 // pred_region
      _
    $region65: #{discriminator_forward.7} parent=1 // pred_fallthru
      _
    %764 = vsyncpa [#allocation3], 1

</llo_original>
